<compile_context>
chip_gen: v7x
topology: tpu7x:2x2x1
jax: 0.10.0
libtpu: 0.0.40
codegen_flags: <defaults>
</compile_context>

<pallas_src>
import functools

import jax
import jax.numpy as jnp
import numpy as np
from jax.experimental import pallas as pl
from jax.experimental.pallas import tpu as pltpu

EPS = 1e-5  # PyTorch BatchNorm2d default eps


def _head_kernel(x_ref, w1_ref, b1_ref, w2_ref, b2_ref, mask_ref, out_ref,
                 *, row_stride, inv_area):
    """One batch sample per grid step.

    x_ref   : [1, Cin, S]   zero-padded input, spatial flattened on lanes
    w*_ref  : [9, Cout, Cin] BN-folded conv weights, tap index k = dy*3 + dx
    b*_ref  : [Cout, 1]      BN-folded per-channel bias
    mask_ref: [1, S]         1.0 at interior (valid output) positions, else 0.0
    out_ref : [1, NL, 1]
    """
    x = x_ref[0].astype(jnp.float32)        # [Cin, S]
    mask = mask_ref[...]                    # [1, S]
    S = x.shape[-1]

    def conv_bn_relu(h, w_ref, b_ref):
        cout = w_ref.shape[1]
        acc = jnp.zeros((cout, S), jnp.float32)
        for k in range(9):                  # static unroll: 9 taps
            dy, dx = k // 3, k % 3
            delta = (dy - 1) * row_stride + (dx - 1)
            if delta == 0:
                hs = h
            else:
                # out[:, p] needs in[:, p + delta]  ->  roll by (-delta) mod S
                hs = pltpu.roll(h, shift=(-delta) % S, axis=1)
            acc = acc + jnp.dot(w_ref[k].astype(jnp.float32), hs,
                                preferred_element_type=jnp.float32)
        # folded BN bias + ReLU
        return jnp.maximum(acc + b_ref[...], 0.0)

    # Conv2d(12->8) + BN + ReLU ; mask re-creates the zero padding for conv2
    h1 = conv_bn_relu(x, w1_ref, b1_ref) * mask       # [CMID, S]
    # Conv2d(8->NL) + BN + ReLU
    h2 = conv_bn_relu(h1, w2_ref, b2_ref)             # [NL, S]

    # AdaptiveAvgPool2d((1,1)) + Flatten: mean over the T*D interior positions
    pooled = jnp.sum(h2 * mask, axis=1, keepdims=True) * inv_area   # [NL, 1]
    out_ref[...] = pooled.reshape(out_ref.shape).astype(out_ref.dtype)


def wav2vec2_head_pallas(features_nchw, w1_hwio, bn1, w2_hwio, bn2):
    """features_nchw: [B, 12, T, D] == torch.stack(features, dim=1).

    w*_hwio: [3, 3, Cin, Cout] conv weights, bn*: [4, C] rows = (gamma, beta,
    running_mean, running_var).
    """
    B, C, T, D = features_nchw.shape
    CMID = w1_hwio.shape[-1]
    NL = w2_hwio.shape[-1]

    S_valid = (T + 2) * (D + 2)
    S = ((S_valid + 127) // 128) * 128      # lane-pad flattened spatial to x128

    # ---- glue: fold eval-mode BN into conv weights; matmul-friendly layout ----
    def fold(w_hwio, bn):
        g, b, m, v = bn[0], bn[1], bn[2], bn[3]
        s = g / jnp.sqrt(v + EPS)                        # [Cout]
        w = (w_hwio * s).astype(jnp.float32)             # scale per Cout
        # [3,3,Cin,Cout] -> [9, Cout, Cin]   (k = dy*3 + dx)
        wk = jnp.transpose(w, (0, 1, 3, 2)).reshape(9, w.shape[3], w.shape[2])
        bias = (b - m * s).astype(jnp.float32).reshape(-1, 1)   # [Cout, 1]
        return wk, bias

    w1k, b1 = fold(w1_hwio, bn1)            # [9, CMID, C], [CMID, 1]
    w2k, b2 = fold(w2_hwio, bn2)            # [9, NL, CMID], [NL, 1]

    # ---- glue: zero-pad spatial, flatten spatial onto the lane axis ----
    x = features_nchw.astype(jnp.float32)                       # [B, C, T, D]
    x = jnp.pad(x, ((0, 0), (0, 0), (1, 1), (1, 1)))            # [B, C, T+2, D+2]
    x = x.reshape(B, C, S_valid)
    x = jnp.pad(x, ((0, 0), (0, 0), (0, S - S_valid)))          # [B, C, S]

    # interior mask over the flattened padded grid
    idx = jnp.arange(S)
    tpad = idx // (D + 2)
    dpad = idx % (D + 2)
    mask = ((idx < S_valid) & (tpad >= 1) & (tpad <= T)
            & (dpad >= 1) & (dpad <= D)).astype(jnp.float32).reshape(1, S)

    kernel = functools.partial(_head_kernel, row_stride=D + 2,
                               inv_area=1.0 / float(T * D))

    out = pl.pallas_call(
        kernel,
        out_shape=jax.ShapeDtypeStruct((B, NL, 1), jnp.float32),
        grid_spec=pltpu.PrefetchScalarGridSpec(
            num_scalar_prefetch=0,
            grid=(B,),
            in_specs=[
                pl.BlockSpec((1, C, S), lambda b: (b, 0, 0)),
                pl.BlockSpec((9, CMID, C), lambda b: (0, 0, 0)),
                pl.BlockSpec((CMID, 1), lambda b: (0, 0)),
                pl.BlockSpec((9, NL, CMID), lambda b: (0, 0, 0)),
                pl.BlockSpec((NL, 1), lambda b: (0, 0)),
                pl.BlockSpec((1, S), lambda b: (0, 0)),
            ],
            out_specs=pl.BlockSpec((1, NL, 1), lambda b: (b, 0, 0)),
        ),
        compiler_params=pltpu.CompilerParams(
            dimension_semantics=("parallel",)),
    )(x, w1k, b1, w2k, b2, mask)

    return out.reshape(B, NL)


def _ref_head(features_nchw, w1, bn1, w2, bn2):
    """Pure-JAX reference of the Wav2Vec2Head forward (eval-mode BN)."""
    x = jnp.transpose(features_nchw, (0, 2, 3, 1)).astype(jnp.float32)

    def conv(x, w):
        return jax.lax.conv_general_dilated(
            x, w, window_strides=(1, 1), padding=((1, 1), (1, 1)),
            dimension_numbers=("NHWC", "HWIO", "NHWC"))

    def bn_relu(x, bn):
        g, b, m, v = bn[0], bn[1], bn[2], bn[3]
        s = g / jnp.sqrt(v + EPS)
        return jnp.maximum(x * s + (b - m * s), 0.0)

    h = bn_relu(conv(x, w1), bn1)
    h = bn_relu(conv(h, w2), bn2)
    return jnp.mean(h, axis=(1, 2))  # AdaptiveAvgPool2d((1,1)) + Flatten


if __name__ == "__main__":
    B, CIN, T, D = 2, 12, 16, 32      # B, stacked layers (IN_CHANNELS=12), frames, feat dim
    CMID, NL = 8, 4                   # hidden channels, n_labels

    key = jax.random.PRNGKey(0)
    ks = jax.random.split(key, 11)

    # stand-in for torch.stack(self.wav2vec2.extract_features(z[:, 0, :])[0], dim=1)
    features = jax.random.normal(ks[0], (B, CIN, T, D), jnp.float32)

    # deterministic synthetic parameters (shapes follow Wav2Vec2Head.__init__)
    w1 = jax.random.normal(ks[1], (3, 3, CIN, CMID), jnp.float32) * 0.1   # HWIO
    w2 = jax.random.normal(ks[2], (3, 3, CMID, NL), jnp.float32) * 0.1    # HWIO

    def bn_params(kg, kb, km, kv, c):
        g = jax.random.uniform(kg, (c,), minval=0.5, maxval=1.5)
        b = jax.random.normal(kb, (c,)) * 0.1
        m = jax.random.normal(km, (c,)) * 0.1
        v = jax.random.uniform(kv, (c,), minval=0.5, maxval=1.5)
        return jnp.stack([g, b, m, v], axis=0).astype(jnp.float32)   # [4, C]

    bn1 = bn_params(ks[3], ks[4], ks[5], ks[6], CMID)
    bn2 = bn_params(ks[7], ks[8], ks[9], ks[10], NL)

    out = jax.block_until_ready(wav2vec2_head_pallas(features, w1, bn1, w2, bn2))
    ref = jax.block_until_ready(_ref_head(features, w1, bn1, w2, bn2))

    assert out.shape == (B, NL)
    np.testing.assert_allclose(np.asarray(out), np.asarray(ref), rtol=2e-3, atol=2e-3)
    print("KERNEL_OK")
</pallas_src>

<mosaic_0001>
module attributes {stable_mosaic.version = 11 : i64} {
  func.func @_head_kernel(%arg0: i32, %arg1: memref<1x12x640xf32, #tpu.memory_space<vmem>>, %arg2: memref<9x8x12xf32, #tpu.memory_space<vmem>>, %arg3: memref<8x1xf32, #tpu.memory_space<vmem>>, %arg4: memref<9x4x8xf32, #tpu.memory_space<vmem>>, %arg5: memref<4x1xf32, #tpu.memory_space<vmem>>, %arg6: memref<1x640xf32, #tpu.memory_space<vmem>>, %arg7: memref<1x4x1xf32, #tpu.memory_space<vmem>>) attributes {dimension_semantics = [#tpu.dimension_semantics<parallel>], iteration_bounds = array<i64: 2>, scalar_prefetch = 0 : i64, scratch_operands = 0 : i64, tpu.core_type = #tpu.core_type<tc>, window_params = [{transform_indices = @transform_0, window_bounds = array<i64: 1, 12, 640>}, {pipeline_mode = #tpu.pipeline_mode<synchronous>, transform_indices = @transform_1, window_bounds = array<i64: 9, 8, 12>}, {pipeline_mode = #tpu.pipeline_mode<synchronous>, transform_indices = @transform_2, window_bounds = array<i64: 8, 1>}, {pipeline_mode = #tpu.pipeline_mode<synchronous>, transform_indices = @transform_3, window_bounds = array<i64: 9, 4, 8>}, {pipeline_mode = #tpu.pipeline_mode<synchronous>, transform_indices = @transform_4, window_bounds = array<i64: 4, 1>}, {pipeline_mode = #tpu.pipeline_mode<synchronous>, transform_indices = @transform_5, window_bounds = array<i64: 1, 640>}, {transform_indices = @transform_6, window_bounds = array<i64: 1, 4, 1>}]} {
    %c0 = arith.constant 0 : index
    %c0_0 = arith.constant 0 : index
    %c0_1 = arith.constant 0 : index
    %0 = vector.load %arg1[%c0, %c0_0, %c0_1] : memref<1x12x640xf32, #tpu.memory_space<vmem>>, vector<1x12x640xf32>
    %1 = vector.shape_cast %0 : vector<1x12x640xf32> to vector<12x640xf32>
    %c0_2 = arith.constant 0 : index
    %c0_3 = arith.constant 0 : index
    %2 = vector.load %arg6[%c0_2, %c0_3] : memref<1x640xf32, #tpu.memory_space<vmem>>, vector<1x640xf32>
    %cst = arith.constant 0.000000e+00 : f32
    %3 = vector.broadcast %cst : f32 to vector<8x640xf32>
    %c35_i32 = arith.constant 35 : i32
    %4 = tpu.dynamic_rotate %1 by %c35_i32 dim 1 : vector<12x640xf32>, i32 -> vector<12x640xf32>
    %c0_4 = arith.constant 0 : index
    %c0_5 = arith.constant 0 : index
    %c0_6 = arith.constant 0 : index
    %5 = vector.load %arg2[%c0_4, %c0_5, %c0_6] : memref<9x8x12xf32, #tpu.memory_space<vmem>>, vector<1x8x12xf32>
    %6 = vector.shape_cast %5 : vector<1x8x12xf32> to vector<8x12xf32>
    %cst_7 = arith.constant dense<0.000000e+00> : vector<8x640xf32>
    %7 = tpu.matmul %6, %4, %cst_7 {dimension_numbers = #tpu.dot_dimension_numbers<[1], [0], [0], [1], [0, 0, 1, 1], [], []>} : vector<8x12xf32>, vector<12x640xf32>, vector<8x640xf32> -> vector<8x640xf32>
    %8 = arith.addf %3, %7 : vector<8x640xf32>
    %c34_i32 = arith.constant 34 : i32
    %9 = tpu.dynamic_rotate %1 by %c34_i32 dim 1 : vector<12x640xf32>, i32 -> vector<12x640xf32>
    %c1 = arith.constant 1 : index
    %c0_8 = arith.constant 0 : index
    %c0_9 = arith.constant 0 : index
    %10 = vector.load %arg2[%c1, %c0_8, %c0_9] : memref<9x8x12xf32, #tpu.memory_space<vmem>>, vector<1x8x12xf32>
    %11 = vector.shape_cast %10 : vector<1x8x12xf32> to vector<8x12xf32>
    %cst_10 = arith.constant dense<0.000000e+00> : vector<8x640xf32>
    %12 = tpu.matmul %11, %9, %cst_10 {dimension_numbers = #tpu.dot_dimension_numbers<[1], [0], [0], [1], [0, 0, 1, 1], [], []>} : vector<8x12xf32>, vector<12x640xf32>, vector<8x640xf32> -> vector<8x640xf32>
    %13 = arith.addf %8, %12 : vector<8x640xf32>
    %c33_i32 = arith.constant 33 : i32
    %14 = tpu.dynamic_rotate %1 by %c33_i32 dim 1 : vector<12x640xf32>, i32 -> vector<12x640xf32>
    %c2 = arith.constant 2 : index
    %c0_11 = arith.constant 0 : index
    %c0_12 = arith.constant 0 : index
    %15 = vector.load %arg2[%c2, %c0_11, %c0_12] : memref<9x8x12xf32, #tpu.memory_space<vmem>>, vector<1x8x12xf32>
    %16 = vector.shape_cast %15 : vector<1x8x12xf32> to vector<8x12xf32>
    %cst_13 = arith.constant dense<0.000000e+00> : vector<8x640xf32>
    %17 = tpu.matmul %16, %14, %cst_13 {dimension_numbers = #tpu.dot_dimension_numbers<[1], [0], [0], [1], [0, 0, 1, 1], [], []>} : vector<8x12xf32>, vector<12x640xf32>, vector<8x640xf32> -> vector<8x640xf32>
    %18 = arith.addf %13, %17 : vector<8x640xf32>
    %c1_i32 = arith.constant 1 : i32
    %19 = tpu.dynamic_rotate %1 by %c1_i32 dim 1 : vector<12x640xf32>, i32 -> vector<12x640xf32>
    %c3 = arith.constant 3 : index
    %c0_14 = arith.constant 0 : index
    %c0_15 = arith.constant 0 : index
    %20 = vector.load %arg2[%c3, %c0_14, %c0_15] : memref<9x8x12xf32, #tpu.memory_space<vmem>>, vector<1x8x12xf32>
    %21 = vector.shape_cast %20 : vector<1x8x12xf32> to vector<8x12xf32>
    %cst_16 = arith.constant dense<0.000000e+00> : vector<8x640xf32>
    %22 = tpu.matmul %21, %19, %cst_16 {dimension_numbers = #tpu.dot_dimension_numbers<[1], [0], [0], [1], [0, 0, 1, 1], [], []>} : vector<8x12xf32>, vector<12x640xf32>, vector<8x640xf32> -> vector<8x640xf32>
    %23 = arith.addf %18, %22 : vector<8x640xf32>
    %c4 = arith.constant 4 : index
    %c0_17 = arith.constant 0 : index
    %c0_18 = arith.constant 0 : index
    %24 = vector.load %arg2[%c4, %c0_17, %c0_18] : memref<9x8x12xf32, #tpu.memory_space<vmem>>, vector<1x8x12xf32>
    %25 = vector.shape_cast %24 : vector<1x8x12xf32> to vector<8x12xf32>
    %cst_19 = arith.constant dense<0.000000e+00> : vector<8x640xf32>
    %26 = tpu.matmul %25, %1, %cst_19 {dimension_numbers = #tpu.dot_dimension_numbers<[1], [0], [0], [1], [0, 0, 1, 1], [], []>} : vector<8x12xf32>, vector<12x640xf32>, vector<8x640xf32> -> vector<8x640xf32>
    %27 = arith.addf %23, %26 : vector<8x640xf32>
    %c639_i32 = arith.constant 639 : i32
    %28 = tpu.dynamic_rotate %1 by %c639_i32 dim 1 : vector<12x640xf32>, i32 -> vector<12x640xf32>
    %c5 = arith.constant 5 : index
    %c0_20 = arith.constant 0 : index
    %c0_21 = arith.constant 0 : index
    %29 = vector.load %arg2[%c5, %c0_20, %c0_21] : memref<9x8x12xf32, #tpu.memory_space<vmem>>, vector<1x8x12xf32>
    %30 = vector.shape_cast %29 : vector<1x8x12xf32> to vector<8x12xf32>
    %cst_22 = arith.constant dense<0.000000e+00> : vector<8x640xf32>
    %31 = tpu.matmul %30, %28, %cst_22 {dimension_numbers = #tpu.dot_dimension_numbers<[1], [0], [0], [1], [0, 0, 1, 1], [], []>} : vector<8x12xf32>, vector<12x640xf32>, vector<8x640xf32> -> vector<8x640xf32>
    %32 = arith.addf %27, %31 : vector<8x640xf32>
    %c607_i32 = arith.constant 607 : i32
    %33 = tpu.dynamic_rotate %1 by %c607_i32 dim 1 : vector<12x640xf32>, i32 -> vector<12x640xf32>
    %c6 = arith.constant 6 : index
    %c0_23 = arith.constant 0 : index
    %c0_24 = arith.constant 0 : index
    %34 = vector.load %arg2[%c6, %c0_23, %c0_24] : memref<9x8x12xf32, #tpu.memory_space<vmem>>, vector<1x8x12xf32>
    %35 = vector.shape_cast %34 : vector<1x8x12xf32> to vector<8x12xf32>
    %cst_25 = arith.constant dense<0.000000e+00> : vector<8x640xf32>
    %36 = tpu.matmul %35, %33, %cst_25 {dimension_numbers = #tpu.dot_dimension_numbers<[1], [0], [0], [1], [0, 0, 1, 1], [], []>} : vector<8x12xf32>, vector<12x640xf32>, vector<8x640xf32> -> vector<8x640xf32>
    %37 = arith.addf %32, %36 : vector<8x640xf32>
    %c606_i32 = arith.constant 606 : i32
    %38 = tpu.dynamic_rotate %1 by %c606_i32 dim 1 : vector<12x640xf32>, i32 -> vector<12x640xf32>
    %c7 = arith.constant 7 : index
    %c0_26 = arith.constant 0 : index
    %c0_27 = arith.constant 0 : index
    %39 = vector.load %arg2[%c7, %c0_26, %c0_27] : memref<9x8x12xf32, #tpu.memory_space<vmem>>, vector<1x8x12xf32>
    %40 = vector.shape_cast %39 : vector<1x8x12xf32> to vector<8x12xf32>
    %cst_28 = arith.constant dense<0.000000e+00> : vector<8x640xf32>
    %41 = tpu.matmul %40, %38, %cst_28 {dimension_numbers = #tpu.dot_dimension_numbers<[1], [0], [0], [1], [0, 0, 1, 1], [], []>} : vector<8x12xf32>, vector<12x640xf32>, vector<8x640xf32> -> vector<8x640xf32>
    %42 = arith.addf %37, %41 : vector<8x640xf32>
    %c605_i32 = arith.constant 605 : i32
    %43 = tpu.dynamic_rotate %1 by %c605_i32 dim 1 : vector<12x640xf32>, i32 -> vector<12x640xf32>
    %c8 = arith.constant 8 : index
    %c0_29 = arith.constant 0 : index
    %c0_30 = arith.constant 0 : index
    %44 = vector.load %arg2[%c8, %c0_29, %c0_30] : memref<9x8x12xf32, #tpu.memory_space<vmem>>, vector<1x8x12xf32>
    %45 = vector.shape_cast %44 : vector<1x8x12xf32> to vector<8x12xf32>
    %cst_31 = arith.constant dense<0.000000e+00> : vector<8x640xf32>
    %46 = tpu.matmul %45, %43, %cst_31 {dimension_numbers = #tpu.dot_dimension_numbers<[1], [0], [0], [1], [0, 0, 1, 1], [], []>} : vector<8x12xf32>, vector<12x640xf32>, vector<8x640xf32> -> vector<8x640xf32>
    %47 = arith.addf %42, %46 : vector<8x640xf32>
    %c0_32 = arith.constant 0 : index
    %c0_33 = arith.constant 0 : index
    %48 = vector.load %arg3[%c0_32, %c0_33] : memref<8x1xf32, #tpu.memory_space<vmem>>, vector<8x1xf32>
    %49 = vector.broadcast %48 : vector<8x1xf32> to vector<8x640xf32>
    %50 = arith.addf %47, %49 : vector<8x640xf32>
    %cst_34 = arith.constant 0.000000e+00 : f32
    %51 = vector.broadcast %cst_34 : f32 to vector<8x640xf32>
    %52 = arith.maximumf %50, %51 : vector<8x640xf32>
    %53 = vector.broadcast %2 : vector<1x640xf32> to vector<8x640xf32>
    %54 = arith.mulf %52, %53 : vector<8x640xf32>
    %cst_35 = arith.constant 0.000000e+00 : f32
    %55 = vector.broadcast %cst_35 : f32 to vector<4x640xf32>
    %c35_i32_36 = arith.constant 35 : i32
    %56 = tpu.dynamic_rotate %54 by %c35_i32_36 dim 1 : vector<8x640xf32>, i32 -> vector<8x640xf32>
    %c0_37 = arith.constant 0 : index
    %c0_38 = arith.constant 0 : index
    %c0_39 = arith.constant 0 : index
    %57 = vector.load %arg4[%c0_37, %c0_38, %c0_39] : memref<9x4x8xf32, #tpu.memory_space<vmem>>, vector<1x4x8xf32>
    %58 = vector.shape_cast %57 : vector<1x4x8xf32> to vector<4x8xf32>
    %cst_40 = arith.constant dense<0.000000e+00> : vector<4x640xf32>
    %59 = tpu.matmul %58, %56, %cst_40 {dimension_numbers = #tpu.dot_dimension_numbers<[1], [0], [0], [1], [0, 0, 1, 1], [], []>} : vector<4x8xf32>, vector<8x640xf32>, vector<4x640xf32> -> vector<4x640xf32>
    %60 = arith.addf %55, %59 : vector<4x640xf32>
    %c34_i32_41 = arith.constant 34 : i32
    %61 = tpu.dynamic_rotate %54 by %c34_i32_41 dim 1 : vector<8x640xf32>, i32 -> vector<8x640xf32>
    %c1_42 = arith.constant 1 : index
    %c0_43 = arith.constant 0 : index
    %c0_44 = arith.constant 0 : index
    %62 = vector.load %arg4[%c1_42, %c0_43, %c0_44] : memref<9x4x8xf32, #tpu.memory_space<vmem>>, vector<1x4x8xf32>
    %63 = vector.shape_cast %62 : vector<1x4x8xf32> to vector<4x8xf32>
    %cst_45 = arith.constant dense<0.000000e+00> : vector<4x640xf32>
    %64 = tpu.matmul %63, %61, %cst_45 {dimension_numbers = #tpu.dot_dimension_numbers<[1], [0], [0], [1], [0, 0, 1, 1], [], []>} : vector<4x8xf32>, vector<8x640xf32>, vector<4x640xf32> -> vector<4x640xf32>
    %65 = arith.addf %60, %64 : vector<4x640xf32>
    %c33_i32_46 = arith.constant 33 : i32
    %66 = tpu.dynamic_rotate %54 by %c33_i32_46 dim 1 : vector<8x640xf32>, i32 -> vector<8x640xf32>
    %c2_47 = arith.constant 2 : index
    %c0_48 = arith.constant 0 : index
    %c0_49 = arith.constant 0 : index
    %67 = vector.load %arg4[%c2_47, %c0_48, %c0_49] : memref<9x4x8xf32, #tpu.memory_space<vmem>>, vector<1x4x8xf32>
    %68 = vector.shape_cast %67 : vector<1x4x8xf32> to vector<4x8xf32>
    %cst_50 = arith.constant dense<0.000000e+00> : vector<4x640xf32>
    %69 = tpu.matmul %68, %66, %cst_50 {dimension_numbers = #tpu.dot_dimension_numbers<[1], [0], [0], [1], [0, 0, 1, 1], [], []>} : vector<4x8xf32>, vector<8x640xf32>, vector<4x640xf32> -> vector<4x640xf32>
    %70 = arith.addf %65, %69 : vector<4x640xf32>
    %c1_i32_51 = arith.constant 1 : i32
    %71 = tpu.dynamic_rotate %54 by %c1_i32_51 dim 1 : vector<8x640xf32>, i32 -> vector<8x640xf32>
    %c3_52 = arith.constant 3 : index
    %c0_53 = arith.constant 0 : index
    %c0_54 = arith.constant 0 : index
    %72 = vector.load %arg4[%c3_52, %c0_53, %c0_54] : memref<9x4x8xf32, #tpu.memory_space<vmem>>, vector<1x4x8xf32>
    %73 = vector.shape_cast %72 : vector<1x4x8xf32> to vector<4x8xf32>
    %cst_55 = arith.constant dense<0.000000e+00> : vector<4x640xf32>
    %74 = tpu.matmul %73, %71, %cst_55 {dimension_numbers = #tpu.dot_dimension_numbers<[1], [0], [0], [1], [0, 0, 1, 1], [], []>} : vector<4x8xf32>, vector<8x640xf32>, vector<4x640xf32> -> vector<4x640xf32>
    %75 = arith.addf %70, %74 : vector<4x640xf32>
    %c4_56 = arith.constant 4 : index
    %c0_57 = arith.constant 0 : index
    %c0_58 = arith.constant 0 : index
    %76 = vector.load %arg4[%c4_56, %c0_57, %c0_58] : memref<9x4x8xf32, #tpu.memory_space<vmem>>, vector<1x4x8xf32>
    %77 = vector.shape_cast %76 : vector<1x4x8xf32> to vector<4x8xf32>
    %cst_59 = arith.constant dense<0.000000e+00> : vector<4x640xf32>
    %78 = tpu.matmul %77, %54, %cst_59 {dimension_numbers = #tpu.dot_dimension_numbers<[1], [0], [0], [1], [0, 0, 1, 1], [], []>} : vector<4x8xf32>, vector<8x640xf32>, vector<4x640xf32> -> vector<4x640xf32>
    %79 = arith.addf %75, %78 : vector<4x640xf32>
    %c639_i32_60 = arith.constant 639 : i32
    %80 = tpu.dynamic_rotate %54 by %c639_i32_60 dim 1 : vector<8x640xf32>, i32 -> vector<8x640xf32>
    %c5_61 = arith.constant 5 : index
    %c0_62 = arith.constant 0 : index
    %c0_63 = arith.constant 0 : index
    %81 = vector.load %arg4[%c5_61, %c0_62, %c0_63] : memref<9x4x8xf32, #tpu.memory_space<vmem>>, vector<1x4x8xf32>
    %82 = vector.shape_cast %81 : vector<1x4x8xf32> to vector<4x8xf32>
    %cst_64 = arith.constant dense<0.000000e+00> : vector<4x640xf32>
    %83 = tpu.matmul %82, %80, %cst_64 {dimension_numbers = #tpu.dot_dimension_numbers<[1], [0], [0], [1], [0, 0, 1, 1], [], []>} : vector<4x8xf32>, vector<8x640xf32>, vector<4x640xf32> -> vector<4x640xf32>
    %84 = arith.addf %79, %83 : vector<4x640xf32>
    %c607_i32_65 = arith.constant 607 : i32
    %85 = tpu.dynamic_rotate %54 by %c607_i32_65 dim 1 : vector<8x640xf32>, i32 -> vector<8x640xf32>
    %c6_66 = arith.constant 6 : index
    %c0_67 = arith.constant 0 : index
    %c0_68 = arith.constant 0 : index
    %86 = vector.load %arg4[%c6_66, %c0_67, %c0_68] : memref<9x4x8xf32, #tpu.memory_space<vmem>>, vector<1x4x8xf32>
    %87 = vector.shape_cast %86 : vector<1x4x8xf32> to vector<4x8xf32>
    %cst_69 = arith.constant dense<0.000000e+00> : vector<4x640xf32>
    %88 = tpu.matmul %87, %85, %cst_69 {dimension_numbers = #tpu.dot_dimension_numbers<[1], [0], [0], [1], [0, 0, 1, 1], [], []>} : vector<4x8xf32>, vector<8x640xf32>, vector<4x640xf32> -> vector<4x640xf32>
    %89 = arith.addf %84, %88 : vector<4x640xf32>
    %c606_i32_70 = arith.constant 606 : i32
    %90 = tpu.dynamic_rotate %54 by %c606_i32_70 dim 1 : vector<8x640xf32>, i32 -> vector<8x640xf32>
    %c7_71 = arith.constant 7 : index
    %c0_72 = arith.constant 0 : index
    %c0_73 = arith.constant 0 : index
    %91 = vector.load %arg4[%c7_71, %c0_72, %c0_73] : memref<9x4x8xf32, #tpu.memory_space<vmem>>, vector<1x4x8xf32>
    %92 = vector.shape_cast %91 : vector<1x4x8xf32> to vector<4x8xf32>
    %cst_74 = arith.constant dense<0.000000e+00> : vector<4x640xf32>
    %93 = tpu.matmul %92, %90, %cst_74 {dimension_numbers = #tpu.dot_dimension_numbers<[1], [0], [0], [1], [0, 0, 1, 1], [], []>} : vector<4x8xf32>, vector<8x640xf32>, vector<4x640xf32> -> vector<4x640xf32>
    %94 = arith.addf %89, %93 : vector<4x640xf32>
    %c605_i32_75 = arith.constant 605 : i32
    %95 = tpu.dynamic_rotate %54 by %c605_i32_75 dim 1 : vector<8x640xf32>, i32 -> vector<8x640xf32>
    %c8_76 = arith.constant 8 : index
    %c0_77 = arith.constant 0 : index
    %c0_78 = arith.constant 0 : index
    %96 = vector.load %arg4[%c8_76, %c0_77, %c0_78] : memref<9x4x8xf32, #tpu.memory_space<vmem>>, vector<1x4x8xf32>
    %97 = vector.shape_cast %96 : vector<1x4x8xf32> to vector<4x8xf32>
    %cst_79 = arith.constant dense<0.000000e+00> : vector<4x640xf32>
    %98 = tpu.matmul %97, %95, %cst_79 {dimension_numbers = #tpu.dot_dimension_numbers<[1], [0], [0], [1], [0, 0, 1, 1], [], []>} : vector<4x8xf32>, vector<8x640xf32>, vector<4x640xf32> -> vector<4x640xf32>
    %99 = arith.addf %94, %98 : vector<4x640xf32>
    %c0_80 = arith.constant 0 : index
    %c0_81 = arith.constant 0 : index
    %100 = vector.load %arg5[%c0_80, %c0_81] : memref<4x1xf32, #tpu.memory_space<vmem>>, vector<4x1xf32>
    %101 = vector.broadcast %100 : vector<4x1xf32> to vector<4x640xf32>
    %102 = arith.addf %99, %101 : vector<4x640xf32>
    %cst_82 = arith.constant 0.000000e+00 : f32
    %103 = vector.broadcast %cst_82 : f32 to vector<4x640xf32>
    %104 = arith.maximumf %102, %103 : vector<4x640xf32>
    %105 = vector.broadcast %2 : vector<1x640xf32> to vector<4x640xf32>
    %106 = arith.mulf %104, %105 : vector<4x640xf32>
    %cst_83 = arith.constant dense<0.000000e+00> : vector<4xf32>
    %107 = vector.multi_reduction <add>, %106, %cst_83 [1] : vector<4x640xf32> to vector<4xf32>
    %108 = vector.shape_cast %107 : vector<4xf32> to vector<4x1xf32>
    %cst_84 = arith.constant 0.001953125 : f32
    %109 = vector.broadcast %cst_84 : f32 to vector<4x1xf32>
    %110 = arith.mulf %108, %109 : vector<4x1xf32>
    %111 = vector.shape_cast %110 : vector<4x1xf32> to vector<1x4x1xf32>
    %c0_85 = arith.constant 0 : index
    %c0_86 = arith.constant 0 : index
    %c0_87 = arith.constant 0 : index
    %112 = vector.load %arg7[%c0_85, %c0_86, %c0_87] : memref<1x4x1xf32, #tpu.memory_space<vmem>>, vector<1x4x1xf32>
    tpu.vector_store %arg7[%c0_85, %c0_86, %c0_87], %111 {strides = array<i32>} : memref<1x4x1xf32, #tpu.memory_space<vmem>>, vector<1x4x1xf32>,
    return
  }
  func.func @transform_0(%arg0: i32) -> (i32, i32, i32) {
    %c0_i32 = arith.constant 0 : i32
    %c0_i32_0 = arith.constant 0 : i32
    %c0_i32_1 = arith.constant 0 : i32
    return %arg0, %c0_i32, %c0_i32_0 : i32, i32, i32
  }
  func.func @transform_1(%arg0: i32) -> (i32, i32, i32) {
    %c0_i32 = arith.constant 0 : i32
    %c0_i32_0 = arith.constant 0 : i32
    %c0_i32_1 = arith.constant 0 : i32
    %c0_i32_2 = arith.constant 0 : i32
    return %c0_i32, %c0_i32_0, %c0_i32_1 : i32, i32, i32
  }
  func.func @transform_2(%arg0: i32) -> (i32, i32) {
    %c0_i32 = arith.constant 0 : i32
    %c0_i32_0 = arith.constant 0 : i32
    %c0_i32_1 = arith.constant 0 : i32
    return %c0_i32, %c0_i32_0 : i32, i32
  }
  func.func @transform_3(%arg0: i32) -> (i32, i32, i32) {
    %c0_i32 = arith.constant 0 : i32
    %c0_i32_0 = arith.constant 0 : i32
    %c0_i32_1 = arith.constant 0 : i32
    %c0_i32_2 = arith.constant 0 : i32
    return %c0_i32, %c0_i32_0, %c0_i32_1 : i32, i32, i32
  }
  func.func @transform_4(%arg0: i32) -> (i32, i32) {
    %c0_i32 = arith.constant 0 : i32
    %c0_i32_0 = arith.constant 0 : i32
    %c0_i32_1 = arith.constant 0 : i32
    return %c0_i32, %c0_i32_0 : i32, i32
  }
  func.func @transform_5(%arg0: i32) -> (i32, i32) {
    %c0_i32 = arith.constant 0 : i32
    %c0_i32_0 = arith.constant 0 : i32
    %c0_i32_1 = arith.constant 0 : i32
    return %c0_i32, %c0_i32_0 : i32, i32
  }
  func.func @transform_6(%arg0: i32) -> (i32, i32, i32) {
    %c0_i32 = arith.constant 0 : i32
    %c0_i32_0 = arith.constant 0 : i32
    %c0_i32_1 = arith.constant 0 : i32
    return %arg0, %c0_i32, %c0_i32_0 : i32, i32, i32
  }
}

</mosaic_0001>

<llo_original>
// kernel: tpu_custom_call.1
$region0: #{tpu_custom_call.1}
  #allocation0 [shape = 'u32[]', space=smem, size = 0x4, offset = 0x4, fixed_abs, tag = 'smem constant byte address 0x4 - core index']
  #allocation1 [shape = 'u32[144,128]{1,0:T(1,128)}', space=vmem, size = 0x12000, scoped, tag = 'internal scratch']
  %s0 = inlined_call_operand.vmem [shape: f32[2,12,640], index: 0, kind: input, shape index: {}]
  %s1 = inlined_call_operand.vmem [shape: f32[9,8,12], index: 1, kind: input, shape index: {}]
  %s2 = inlined_call_operand.vmem [shape: f32[8,1], index: 2, kind: input, shape index: {}]
  %s3 = inlined_call_operand.vmem [shape: f32[9,4,8], index: 3, kind: input, shape index: {}]
  %s4 = inlined_call_operand.vmem [shape: f32[4,1], index: 4, kind: input, shape index: {}]
  %s5 = inlined_call_operand.vmem [shape: f32[1,640], index: 5, kind: input, shape index: {}]
  %s6 = inlined_call_operand.vmem [shape: f32[2,4,1], index: 6, kind: output, shape index: {}]
  %s7 = sld [smem:[#allocation0]]
  $region57: #{tpu_custom_call.1} parent=0
    _
  %s9 = ssub.s32 1, %s7
  %s10 = scalar_select 0, %s9, %s7
  loop: start=0, step=1, limit=4
  $region2: #{tpu_custom_call.1} parent=0 // loop_pre_header
    _
  $region3: #{tpu_custom_call.1} parent=0 // loop_header
    %s12 = sphi 0, %s16
    %p13 = scmp.ge.s32.totalorder %s12, 4
    %s22 = sphi 0, %s24
    %s25 = sphi 0, %s22
    %s26 = sphi 0, %s25
    %s42 = sphi 0, %s26
    %s46 = sphi 0, %s46
    %s48 = sphi 0, %s46
    %s49 = sphi 0, %s48
    %s63 = sphi 0, %s49
    %s67 = sphi 0, %s67
    %s69 = sphi 0, %s67
    %s70 = sphi 0, %s69
    %s84 = sphi 0, %s70
    %s88 = sphi 0, %s88
    %s90 = sphi 0, %s88
    %s91 = sphi 0, %s90
    %s105 = sphi 0, %s91
    %s109 = sphi 0, %s109
    %s111 = sphi 0, %s109
    %s112 = sphi 0, %s111
    %s126 = sphi 0, %s112
    %s130 = sphi 0, %s130
    %s132 = sphi 0, %s130
    %s133 = sphi 0, %s132
    %s147 = sphi 0, %s133
    %s153 = sphi 0, %s155
    %s156 = sphi 0, %s153
    %s157 = sphi 0, %s156
    %s173 = sphi 0, %s157
  $region4: #{tpu_custom_call.1} parent=0 // loop_header_branch
    %15 = sbr.rel (%p13) target = $region8
  $region5: #{tpu_custom_call.1} parent=0 // loop_body
    %s17 = ssub.s32 %s12, 1
    %s18 = ssub.s32 %s12, 2
    %s19 = sadd.s32 %s12, 1
    %s20 = ssub.s32 %s12, %s19
    %p21 = scmp.eq.s32.totalorder %s20, 0
    %s23 = sadd.s32 %s22, 1
    %s24 = scalar_select %p21, %s22, %s23
    %p27 = pneg %p21
    %p28 = scmp.eq.s32.totalorder %s12, 1
    %p29 = por %p27, %p28
    %p30 = scmp.ne.s32.totalorder %s22, %s25
    %p31 = scmp.eq.s32.totalorder %s12, 0
    %p32 = por %p30, %p31
    %p33 = scmp.ne.s32.totalorder %s22, %s25
    %p34 = scmp.eq.s32.totalorder %s17, 1
    %p35 = por %p33, %p34
    %p36 = scmp.ne.s32.totalorder %s25, %s26
    %p37 = scmp.eq.s32.totalorder %s17, 0
    %p38 = por %p36, %p37
    %p39 = scmp.ne.s32.totalorder %s25, %s26
    %p40 = scmp.eq.s32.totalorder %s18, 1
    %p41 = por %p39, %p40
    %p43 = scmp.ne.s32.totalorder %s26, %s42
    %p44 = scmp.eq.s32.totalorder %s18, 0
    %p45 = por %p43, %p44
    %s47 = sadd.s32 %s46, 1
    %p50 = scmp.eq.s32.totalorder %s12, 1
    %p51 = scmp.ne.s32.totalorder %s46, %s48
    %p52 = scmp.eq.s32.totalorder %s12, 0
    %p53 = por %p51, %p52
    %p54 = scmp.ne.s32.totalorder %s46, %s48
    %p55 = scmp.eq.s32.totalorder %s17, 1
    %p56 = por %p54, %p55
    %p57 = scmp.ne.s32.totalorder %s48, %s49
    %p58 = scmp.eq.s32.totalorder %s17, 0
    %p59 = por %p57, %p58
    %p60 = scmp.ne.s32.totalorder %s48, %s49
    %p61 = scmp.eq.s32.totalorder %s18, 1
    %p62 = por %p60, %p61
    %p64 = scmp.ne.s32.totalorder %s49, %s63
    %p65 = scmp.eq.s32.totalorder %s18, 0
    %p66 = por %p64, %p65
    %s68 = sadd.s32 %s67, 1
    %p71 = scmp.eq.s32.totalorder %s12, 1
    %p72 = scmp.ne.s32.totalorder %s67, %s69
    %p73 = scmp.eq.s32.totalorder %s12, 0
    %p74 = por %p72, %p73
    %p75 = scmp.ne.s32.totalorder %s67, %s69
    %p76 = scmp.eq.s32.totalorder %s17, 1
    %p77 = por %p75, %p76
    %p78 = scmp.ne.s32.totalorder %s69, %s70
    %p79 = scmp.eq.s32.totalorder %s17, 0
    %p80 = por %p78, %p79
    %p81 = scmp.ne.s32.totalorder %s69, %s70
    %p82 = scmp.eq.s32.totalorder %s18, 1
    %p83 = por %p81, %p82
    %p85 = scmp.ne.s32.totalorder %s70, %s84
    %p86 = scmp.eq.s32.totalorder %s18, 0
    %p87 = por %p85, %p86
    %s89 = sadd.s32 %s88, 1
    %p92 = scmp.eq.s32.totalorder %s12, 1
    %p93 = scmp.ne.s32.totalorder %s88, %s90
    %p94 = scmp.eq.s32.totalorder %s12, 0
    %p95 = por %p93, %p94
    %p96 = scmp.ne.s32.totalorder %s88, %s90
    %p97 = scmp.eq.s32.totalorder %s17, 1
    %p98 = por %p96, %p97
    %p99 = scmp.ne.s32.totalorder %s90, %s91
    %p100 = scmp.eq.s32.totalorder %s17, 0
    %p101 = por %p99, %p100
    %p102 = scmp.ne.s32.totalorder %s90, %s91
    %p103 = scmp.eq.s32.totalorder %s18, 1
    %p104 = por %p102, %p103
    %p106 = scmp.ne.s32.totalorder %s91, %s105
    %p107 = scmp.eq.s32.totalorder %s18, 0
    %p108 = por %p106, %p107
    %s110 = sadd.s32 %s109, 1
    %p113 = scmp.eq.s32.totalorder %s12, 1
    %p114 = scmp.ne.s32.totalorder %s109, %s111
    %p115 = scmp.eq.s32.totalorder %s12, 0
    %p116 = por %p114, %p115
    %p117 = scmp.ne.s32.totalorder %s109, %s111
    %p118 = scmp.eq.s32.totalorder %s17, 1
    %p119 = por %p117, %p118
    %p120 = scmp.ne.s32.totalorder %s111, %s112
    %p121 = scmp.eq.s32.totalorder %s17, 0
    %p122 = por %p120, %p121
    %p123 = scmp.ne.s32.totalorder %s111, %s112
    %p124 = scmp.eq.s32.totalorder %s18, 1
    %p125 = por %p123, %p124
    %p127 = scmp.ne.s32.totalorder %s112, %s126
    %p128 = scmp.eq.s32.totalorder %s18, 0
    %p129 = por %p127, %p128
    %s131 = sadd.s32 %s130, 1
    %p134 = scmp.eq.s32.totalorder %s12, 1
    %p135 = scmp.ne.s32.totalorder %s130, %s132
    %p136 = scmp.eq.s32.totalorder %s12, 0
    %p137 = por %p135, %p136
    %p138 = scmp.ne.s32.totalorder %s130, %s132
    %p139 = scmp.eq.s32.totalorder %s17, 1
    %p140 = por %p138, %p139
    %p141 = scmp.ne.s32.totalorder %s132, %s133
    %p142 = scmp.eq.s32.totalorder %s17, 0
    %p143 = por %p141, %p142
    %p144 = scmp.ne.s32.totalorder %s132, %s133
    %p145 = scmp.eq.s32.totalorder %s18, 1
    %p146 = por %p144, %p145
    %p148 = scmp.ne.s32.totalorder %s133, %s147
    %p149 = scmp.eq.s32.totalorder %s18, 0
    %p150 = por %p148, %p149
    %s151 = ssub.s32 %s12, %s19
    %p152 = scmp.eq.s32.totalorder %s151, 0
    %s154 = sadd.s32 %s153, 1
    %s155 = scalar_select %p152, %s153, %s154
    %p158 = pneg %p152
    %p159 = scmp.eq.s32.totalorder %s12, 1
    %p160 = por %p158, %p159
    %p161 = scmp.ne.s32.totalorder %s153, %s156
    %p162 = scmp.eq.s32.totalorder %s12, 0
    %p163 = por %p161, %p162
    %p164 = scmp.ne.s32.totalorder %s153, %s156
    %p165 = scmp.eq.s32.totalorder %s17, 1
    %p166 = por %p164, %p165
    %p167 = scmp.ne.s32.totalorder %s156, %s157
    %p168 = scmp.eq.s32.totalorder %s17, 0
    %p169 = por %p167, %p168
    %p170 = scmp.ne.s32.totalorder %s156, %s157
    %p171 = scmp.eq.s32.totalorder %s18, 1
    %p172 = por %p170, %p171
    %p174 = scmp.ne.s32.totalorder %s157, %s173
    %p175 = scmp.eq.s32.totalorder %s18, 0
    %p176 = por %p174, %p175
    %p177 = scmp.le.s32.totalorder 1, %s12
    %p178 = scmp.lt.s32.totalorder %s12, 3
    %p179 = pnand %p177, %p178
    %p180 = pneg %p179
    // Predicated region
    $region9: #{tpu_custom_call.1} parent=5 // pred_check
      _
    $region10: #{tpu_custom_call.1} parent=5 // pred_check_branch
      %182 = sbr.rel (%p179) target = $region12
    $region11: #{tpu_custom_call.1} parent=5 // pred_region
      %s183 = ssub.s32 %s12, 1
      // Predicated region
      $region13: #{tpu_custom_call.1} parent=11 // pred_check
        %p184 = pneg %p59
      $region14: #{tpu_custom_call.1} parent=11 // pred_check_branch
        %186 = sbr.rel (%p184) target = $region16
      $region15: #{tpu_custom_call.1} parent=11 // pred_region
        _
      $region16: #{tpu_custom_call.1} parent=11 // pred_fallthru
        _
      // Predicated region
      $region17: #{tpu_custom_call.1} parent=11 // pred_check
        %p187 = pneg %p80
      $region18: #{tpu_custom_call.1} parent=11 // pred_check_branch
        %189 = sbr.rel (%p187) target = $region20
      $region19: #{tpu_custom_call.1} parent=11 // pred_region
        _
      $region20: #{tpu_custom_call.1} parent=11 // pred_fallthru
        _
      // Predicated region
      $region21: #{tpu_custom_call.1} parent=11 // pred_check
        %p190 = pneg %p101
      $region22: #{tpu_custom_call.1} parent=11 // pred_check_branch
        %192 = sbr.rel (%p190) target = $region24
      $region23: #{tpu_custom_call.1} parent=11 // pred_region
        _
      $region24: #{tpu_custom_call.1} parent=11 // pred_fallthru
        _
      // Predicated region
      $region25: #{tpu_custom_call.1} parent=11 // pred_check
        %p193 = pneg %p122
      $region26: #{tpu_custom_call.1} parent=11 // pred_check_branch
        %195 = sbr.rel (%p193) target = $region28
      $region27: #{tpu_custom_call.1} parent=11 // pred_region
        _
      $region28: #{tpu_custom_call.1} parent=11 // pred_fallthru
        _
      // Predicated region
      $region29: #{tpu_custom_call.1} parent=11 // pred_check
        %p196 = pneg %p143
      $region30: #{tpu_custom_call.1} parent=11 // pred_check_branch
        %198 = sbr.rel (%p196) target = $region32
      $region31: #{tpu_custom_call.1} parent=11 // pred_region
        _
      $region32: #{tpu_custom_call.1} parent=11 // pred_fallthru
        _
    $region12: #{tpu_custom_call.1} parent=5 // pred_fallthru
      _
    %p199 = scmp.lt.s32.totalorder %s12, 2
    // Predicated region
    $region33: #{tpu_custom_call.1} parent=5 // pred_check
      %p200 = pneg %p199
    $region34: #{tpu_custom_call.1} parent=5 // pred_check_branch
      %202 = sbr.rel (%p200) target = $region36
    $region35: #{tpu_custom_call.1} parent=5 // pred_region
      // Predicated region
      $region37: #{tpu_custom_call.1} parent=35 // pred_check
        %p203 = pneg %p32
      $region38: #{tpu_custom_call.1} parent=35 // pred_check_branch
        %205 = sbr.rel (%p203) target = $region40
      $region39: #{tpu_custom_call.1} parent=35 // pred_region
        %p206 = scmp.lt.s32.totalorder %s12, 1
        %s207 = scalar_select %p206, %s12, 1
        %s208 = smul.addr %s207, 10
        %s209 = smul.addr %s208, 8
        %s210 = scalar_lea.vmem %s0, %s209
      $region40: #{tpu_custom_call.1} parent=35 // pred_fallthru
        _
    $region36: #{tpu_custom_call.1} parent=5 // pred_fallthru
      _
    %p211 = scmp.le.s32.totalorder 1, %s12
    %p212 = scmp.lt.s32.totalorder %s12, 3
    %p213 = pnand %p211, %p212
    %p214 = pneg %p213
    // Predicated region
    $region41: #{tpu_custom_call.1} parent=5 // pred_check
      _
    $region42: #{tpu_custom_call.1} parent=5 // pred_check_branch
      %216 = sbr.rel (%p213) target = $region44
    $region43: #{tpu_custom_call.1} parent=5 // pred_region
      %s217 = ssub.s32 %s12, 1
      %p218 = scmp.lt.s32.totalorder %s17, 1
      %s219 = scalar_select %p218, %s17, 1
      %s220 = smul.addr %s219, 10
      %s221 = smul.addr %s220, 8
      %s222 = scalar_lea.vmem %s0, %s221
      %p223 = pneg %p38
      %p224 = pneg %p35
      %p225 = pneg %p59
      %p226 = pneg %p56
      %p227 = pneg %p80
      %p228 = pneg %p77
      %p229 = pneg %p101
      %p230 = pneg %p98
      %p231 = pneg %p122
      %p232 = pneg %p119
      %p233 = pneg %p143
      %p234 = pneg %p140
      %p235 = pneg %p169
      %p236 = pneg %p166
      %p237 = scmp.lt.s32.totalorder %s17, 1
      %s238 = scalar_select %p237, %s17, 1
      %s239 = smul.addr %s238, 4
      %s240 = scalar_lea.vmem %s6, %s239
      %p241 = scmp.lt.s32.totalorder %s17, 1
      %s242 = scalar_select %p241, %s17, 1
      %s243 = smul.addr %s242, 10
      %s244 = smul.addr %s243, 8
      %s245 = scalar_lea.vmem %s0, %s244
      %p246 = scmp.lt.s32.totalorder %s17, 1
      %s247 = scalar_select %p246, %s17, 1
      %s248 = smul.addr %s247, 4
      %s249 = scalar_lea.vmem %s6, %s248
      %v250 = vld [vmem:[%s245] sm:$0xff]
      %v251 = vld [vmem:[%s245 + $0x8] sm:$0xff]
      %v252 = vld [vmem:[%s245 + $0x10] sm:$0xff]
      %v253 = vld [vmem:[%s245 + $0x18] sm:$0xff]
      %v254 = vld [vmem:[%s245 + $0x20] sm:$0xff]
      %v255 = vld [vmem:[%s245 + $0x28] sm:$0xf]
      %v256 = vld [vmem:[%s245 + $0x30] sm:$0xf]
      %v257 = vld [vmem:[%s245 + $0x38] sm:$0xf]
      %v258 = vld [vmem:[%s245 + $0x40] sm:$0xf]
      %v259 = vld [vmem:[%s245 + $0x48] sm:$0xf]
      %v260 = vld [vmem:[%s5] sm:$0x1f]
      %261 = vrot.lane.b32.xlu0 %v250, 35
      %v262 = vpop.permute.xlu0 %261
      %263 = vrot.lane.b32.xlu0 %v255, 35
      %v264 = vpop.permute.xlu0 %263
      %265 = vrot.lane.b32.xlu0 %v251, 35
      %v266 = vpop.permute.xlu0 %265
      %267 = vrot.lane.b32.xlu0 %v256, 35
      %v268 = vpop.permute.xlu0 %267
      %269 = vrot.lane.b32.xlu0 %v252, 35
      %v270 = vpop.permute.xlu0 %269
      %271 = vrot.lane.b32.xlu0 %v257, 35
      %v272 = vpop.permute.xlu0 %271
      %273 = vrot.lane.b32.xlu0 %v253, 35
      %v274 = vpop.permute.xlu0 %273
      %275 = vrot.lane.b32.xlu0 %v258, 35
      %v276 = vpop.permute.xlu0 %275
      %277 = vrot.lane.b32.xlu0 %v254, 35
      %v278 = vpop.permute.xlu0 %277
      %279 = vrot.lane.b32.xlu0 %v259, 35
      %v280 = vpop.permute.xlu0 %279
      %v281 = vlaneseq
      %v282 = vand.u32 %v281, 127
      %vm283 = vcmp.lt.s32.totalorder %v282, 35
      %v284 = vsel %vm283, %v274, %v278
      %v285 = vsel %vm283, %v276, %v280
      %v286 = vsel %vm283, %v270, %v274
      %v287 = vsel %vm283, %v272, %v276
      %v288 = vsel %vm283, %v266, %v270
      %v289 = vsel %vm283, %v268, %v272
      %v290 = vsel %vm283, %v262, %v266
      %v291 = vsel %vm283, %v264, %v268
      %v292 = vsel %vm283, %v278, %v262
      %v293 = vsel %vm283, %v280, %v264
      %v294 = vld [vmem:[%s1] sm:$0xff]
      %295 = vrot.lane.b32.xlu0 %v250, 34
      %v296 = vpop.permute.xlu0 %295
      %297 = vrot.lane.b32.xlu0 %v255, 34
      %v298 = vpop.permute.xlu0 %297
      %299 = vrot.lane.b32.xlu0 %v251, 34
      %v300 = vpop.permute.xlu0 %299
      %301 = vrot.lane.b32.xlu0 %v256, 34
      %v302 = vpop.permute.xlu0 %301
      %303 = vrot.lane.b32.xlu0 %v252, 34
      %v304 = vpop.permute.xlu0 %303
      %305 = vrot.lane.b32.xlu0 %v257, 34
      %v306 = vpop.permute.xlu0 %305
      %307 = vrot.lane.b32.xlu0 %v253, 34
      %v308 = vpop.permute.xlu0 %307
      %309 = vrot.lane.b32.xlu0 %v258, 34
      %v310 = vpop.permute.xlu0 %309
      %311 = vrot.lane.b32.xlu0 %v254, 34
      %v312 = vpop.permute.xlu0 %311
      %313 = vrot.lane.b32.xlu0 %v259, 34
      %v314 = vpop.permute.xlu0 %313
      %vm315 = vcmp.lt.s32.totalorder %v282, 34
      %v316 = vsel %vm315, %v308, %v312
      %v317 = vsel %vm315, %v310, %v314
      %v318 = vsel %vm315, %v304, %v308
      %v319 = vsel %vm315, %v306, %v310
      %v320 = vsel %vm315, %v300, %v304
      %v321 = vsel %vm315, %v302, %v306
      %v322 = vsel %vm315, %v296, %v300
      %v323 = vsel %vm315, %v298, %v302
      %v324 = vsel %vm315, %v312, %v296
      %v325 = vsel %vm315, %v314, %v298
      %s326 = scalar_lea.vmem %s1, 8
      %v327 = vld [vmem:[%s326] sm:$0xff]
      %vm328 = vcmask 97280
      %v330 = vsel %vm328, %v327, 0
      %vm332 = vcmask 1043456
      %v334 = vsel %vm332, %v325, 0
      %v337 = vsel %vm332, %v323, 0
      %v340 = vsel %vm332, %v321, 0
      %v343 = vsel %vm332, %v319, 0
      %v346 = vsel %vm332, %v317, 0
      %348 = vmatprep.subr.mxu0 %v322
      %349 = vmatpush1.msra.mxu0 %v324
      %350 = vmatprep.subr.mxu0 %v337
      %351 = vmatpush1.msra.mxu0 %v334
      %352 = vmatprep.subr.mxu0 0.0
      %353 = vmatpush1.msra.mxu0 0.0
      %354 = vmatprep.subr.mxu0 0.0
      %355 = vmatpush1.msra.mxu0 0.0
      %356 = vmatprep.subr.mxu0 0.0
      %357 = vmatpush1.msra.mxu0 0.0
      %358 = vmatprep.subr.mxu0 0.0
      %359 = vmatpush1.msra.mxu0 0.0
      %360 = vmatprep.subr.mxu0 0.0
      %361 = vmatpush1.msra.mxu0 0.0
      %362 = vmatprep.subr.mxu0 0.0
      %363 = vmatpush1.msra.mxu0 0.0
      %364 = vmatprep.subr.mxu0 0.0
      %365 = vmatpush1.msra.mxu0 0.0
      %366 = vmatprep.subr.mxu0 0.0
      %367 = vmatpush1.msra.mxu0 0.0
      %368 = vmatprep.subr.mxu0 0.0
      %369 = vmatpush1.msra.mxu0 0.0
      %370 = vmatprep.subr.mxu0 0.0
      %371 = vmatpush1.msra.mxu0 0.0
      %372 = vmatprep.subr.mxu0 0.0
      %373 = vmatpush1.msra.mxu0 0.0
      %374 = vmatprep.subr.mxu0 0.0
      %375 = vmatpush1.msra.mxu0 0.0
      %376 = vmatprep.subr.mxu0 0.0
      %377 = vmatpush1.msra.mxu0 0.0
      %378 = vmatprep.subr.mxu0 0.0
      %379 = vmatpush1.msra.mxu0 0.0
      %380 = vmatprep.subr.mxu0 0.0
      %381 = vmatpush1.msra.mxu0 0.0
      %382 = vmatprep.subr.mxu0 0.0
      %383 = vmatpush1.msra.mxu0 0.0
      %384 = vmatprep.subr.mxu0 0.0
      %385 = vmatpush1.msra.mxu0 0.0
      %386 = vmatprep.subr.mxu0 0.0
      %387 = vmatpush1.msra.mxu0 0.0
      %388 = vmatprep.subr.mxu0 0.0
      %389 = vmatpush1.msra.mxu0 0.0
      %390 = vmatprep.subr.mxu0 0.0
      %391 = vmatpush1.msra.mxu0 0.0
      %392 = vmatprep.subr.mxu0 0.0
      %393 = vmatpush1.msra.mxu0 0.0
      %394 = vmatprep.subr.mxu0 0.0
      %395 = vmatpush1.msra.mxu0 0.0
      %396 = vmatprep.subr.mxu0 0.0
      %397 = vmatpush1.msra.mxu0 0.0
      %398 = vmatprep.subr.mxu0 0.0
      %399 = vmatpush1.msra.mxu0 0.0
      %400 = vmatprep.subr.mxu0 0.0
      %401 = vmatpush1.msra.mxu0 0.0
      %402 = vmatprep.subr.mxu0 0.0
      %403 = vmatpush1.msra.mxu0 0.0
      %404 = vmatprep.subr.mxu0 0.0
      %405 = vmatpush1.msra.mxu0 0.0
      %406 = vmatprep.subr.mxu0 0.0
      %407 = vmatpush1.msra.mxu0 0.0
      %408 = vmatprep.subr.mxu0 0.0
      %409 = vmatpush1.msra.mxu0 0.0
      %410 = vmatprep.subr.mxu0 0.0
      %411 = vmatpush1.msra.mxu0 0.0
      %412 = vmatprep.mubr.f32.mxu0 0.0
      %413 = vmatmul.mubr.f32.gmra.mrb[0].mxu0 %v330
      %v414 = vpop.f32.mrb[0].mxu0
      %v415 = vadd.f32 0.0, %v414
      %v416 = vpop.f32.mrb[0].mxu0
      %v417 = vadd.f32 0.0, %v416
      %418 = vdwg.mxu0
      %419 = vmatprep.subr.mxu0 %v318
      %420 = vmatpush1.msra.mxu0 %v320
      %421 = vmatprep.subr.mxu0 %v343
      %422 = vmatpush1.msra.mxu0 %v340
      %423 = vmatprep.subr.mxu0 0.0
      %424 = vmatpush1.msra.mxu0 0.0
      %425 = vmatprep.subr.mxu0 0.0
      %426 = vmatpush1.msra.mxu0 0.0
      %427 = vmatprep.subr.mxu0 0.0
      %428 = vmatpush1.msra.mxu0 0.0
      %429 = vmatprep.subr.mxu0 0.0
      %430 = vmatpush1.msra.mxu0 0.0
      %431 = vmatprep.subr.mxu0 0.0
      %432 = vmatpush1.msra.mxu0 0.0
      %433 = vmatprep.subr.mxu0 0.0
      %434 = vmatpush1.msra.mxu0 0.0
      %435 = vmatprep.subr.mxu0 0.0
      %436 = vmatpush1.msra.mxu0 0.0
      %437 = vmatprep.subr.mxu0 0.0
      %438 = vmatpush1.msra.mxu0 0.0
      %439 = vmatprep.subr.mxu0 0.0
      %440 = vmatpush1.msra.mxu0 0.0
      %441 = vmatprep.subr.mxu0 0.0
      %442 = vmatpush1.msra.mxu0 0.0
      %443 = vmatprep.subr.mxu0 0.0
      %444 = vmatpush1.msra.mxu0 0.0
      %445 = vmatprep.subr.mxu0 0.0
      %446 = vmatpush1.msra.mxu0 0.0
      %447 = vmatprep.subr.mxu0 0.0
      %448 = vmatpush1.msra.mxu0 0.0
      %449 = vmatprep.subr.mxu0 0.0
      %450 = vmatpush1.msra.mxu0 0.0
      %451 = vmatprep.subr.mxu0 0.0
      %452 = vmatpush1.msra.mxu0 0.0
      %453 = vmatprep.subr.mxu0 0.0
      %454 = vmatpush1.msra.mxu0 0.0
      %455 = vmatprep.subr.mxu0 0.0
      %456 = vmatpush1.msra.mxu0 0.0
      %457 = vmatprep.subr.mxu0 0.0
      %458 = vmatpush1.msra.mxu0 0.0
      %459 = vmatprep.subr.mxu0 0.0
      %460 = vmatpush1.msra.mxu0 0.0
      %461 = vmatprep.subr.mxu0 0.0
      %462 = vmatpush1.msra.mxu0 0.0
      %463 = vmatprep.subr.mxu0 0.0
      %464 = vmatpush1.msra.mxu0 0.0
      %465 = vmatprep.subr.mxu0 0.0
      %466 = vmatpush1.msra.mxu0 0.0
      %467 = vmatprep.subr.mxu0 0.0
      %468 = vmatpush1.msra.mxu0 0.0
      %469 = vmatprep.subr.mxu0 0.0
      %470 = vmatpush1.msra.mxu0 0.0
      %471 = vmatprep.subr.mxu0 0.0
      %472 = vmatpush1.msra.mxu0 0.0
      %473 = vmatprep.subr.mxu0 0.0
      %474 = vmatpush1.msra.mxu0 0.0
      %475 = vmatprep.subr.mxu0 0.0
      %476 = vmatpush1.msra.mxu0 0.0
      %477 = vmatprep.subr.mxu0 0.0
      %478 = vmatpush1.msra.mxu0 0.0
      %479 = vmatprep.subr.mxu0 0.0
      %480 = vmatpush1.msra.mxu0 0.0
      %481 = vmatprep.subr.mxu0 0.0
      %482 = vmatpush1.msra.mxu0 0.0
      %483 = vmatprep.mubr.f32.mxu0 0.0
      %484 = vmatmul.mubr.f32.gmra.mrb[0].mxu0 %v330
      %v485 = vpop.f32.mrb[0].mxu0
      %v486 = vadd.f32 0.0, %v485
      %v487 = vpop.f32.mrb[0].mxu0
      %v488 = vadd.f32 0.0, %v487
      %489 = vdwg.mxu0
      %490 = vmatprep.subr.mxu0 0.0
      %491 = vmatpush1.msra.mxu0 %v316
      %492 = vmatprep.subr.mxu0 0.0
      %493 = vmatpush1.msra.mxu0 %v346
      %494 = vmatprep.subr.mxu0 0.0
      %495 = vmatpush1.msra.mxu0 0.0
      %496 = vmatprep.subr.mxu0 0.0
      %497 = vmatpush1.msra.mxu0 0.0
      %498 = vmatprep.subr.mxu0 0.0
      %499 = vmatpush1.msra.mxu0 0.0
      %500 = vmatprep.subr.mxu0 0.0
      %501 = vmatpush1.msra.mxu0 0.0
      %502 = vmatprep.subr.mxu0 0.0
      %503 = vmatpush1.msra.mxu0 0.0
      %504 = vmatprep.subr.mxu0 0.0
      %505 = vmatpush1.msra.mxu0 0.0
      %506 = vmatprep.subr.mxu0 0.0
      %507 = vmatpush1.msra.mxu0 0.0
      %508 = vmatprep.subr.mxu0 0.0
      %509 = vmatpush1.msra.mxu0 0.0
      %510 = vmatprep.subr.mxu0 0.0
      %511 = vmatpush1.msra.mxu0 0.0
      %512 = vmatprep.subr.mxu0 0.0
      %513 = vmatpush1.msra.mxu0 0.0
      %514 = vmatprep.subr.mxu0 0.0
      %515 = vmatpush1.msra.mxu0 0.0
      %516 = vmatprep.subr.mxu0 0.0
      %517 = vmatpush1.msra.mxu0 0.0
      %518 = vmatprep.subr.mxu0 0.0
      %519 = vmatpush1.msra.mxu0 0.0
      %520 = vmatprep.subr.mxu0 0.0
      %521 = vmatpush1.msra.mxu0 0.0
      %522 = vmatprep.subr.mxu0 0.0
      %523 = vmatpush1.msra.mxu0 0.0
      %524 = vmatprep.subr.mxu0 0.0
      %525 = vmatpush1.msra.mxu0 0.0
      %526 = vmatprep.subr.mxu0 0.0
      %527 = vmatpush1.msra.mxu0 0.0
      %528 = vmatprep.subr.mxu0 0.0
      %529 = vmatpush1.msra.mxu0 0.0
      %530 = vmatprep.subr.mxu0 0.0
      %531 = vmatpush1.msra.mxu0 0.0
      %532 = vmatprep.subr.mxu0 0.0
      %533 = vmatpush1.msra.mxu0 0.0
      %534 = vmatprep.subr.mxu0 0.0
      %535 = vmatpush1.msra.mxu0 0.0
      %536 = vmatprep.subr.mxu0 0.0
      %537 = vmatpush1.msra.mxu0 0.0
      %538 = vmatprep.subr.mxu0 0.0
      %539 = vmatpush1.msra.mxu0 0.0
      %540 = vmatprep.subr.mxu0 0.0
      %541 = vmatpush1.msra.mxu0 0.0
      %542 = vmatprep.subr.mxu0 0.0
      %543 = vmatpush1.msra.mxu0 0.0
      %544 = vmatprep.subr.mxu0 0.0
      %545 = vmatpush1.msra.mxu0 0.0
      %546 = vmatprep.subr.mxu0 0.0
      %547 = vmatpush1.msra.mxu0 0.0
      %548 = vmatprep.subr.mxu0 0.0
      %549 = vmatpush1.msra.mxu0 0.0
      %550 = vmatprep.subr.mxu0 0.0
      %551 = vmatpush1.msra.mxu0 0.0
      %552 = vmatprep.subr.mxu0 0.0
      %553 = vmatpush1.msra.mxu0 0.0
      %554 = vmatprep.mubr.f32.mxu0 0.0
      %555 = vmatmul.mubr.f32.gmra.mrb[0].mxu0 %v330
      %v556 = vpop.f32.mrb[0].mxu0
      %v557 = vadd.f32 0.0, %v556
      %v558 = vpop.f32.mrb[0].mxu0
      %559 = vdwg.mxu0
      %v561 = vsel %vm328, %v294, 0
      %v564 = vsel %vm332, %v293, 0
      %v567 = vsel %vm332, %v291, 0
      %v570 = vsel %vm332, %v289, 0
      %v573 = vsel %vm332, %v287, 0
      %v576 = vsel %vm332, %v285, 0
      %578 = vmatprep.subr.mxu0 %v290
      %579 = vmatpush1.msra.mxu0 %v292
      %580 = vmatprep.subr.mxu0 %v567
      %581 = vmatpush1.msra.mxu0 %v564
      %582 = vmatprep.subr.mxu0 0.0
      %583 = vmatpush1.msra.mxu0 0.0
      %584 = vmatprep.subr.mxu0 0.0
      %585 = vmatpush1.msra.mxu0 0.0
      %586 = vmatprep.subr.mxu0 0.0
      %587 = vmatpush1.msra.mxu0 0.0
      %588 = vmatprep.subr.mxu0 0.0
      %589 = vmatpush1.msra.mxu0 0.0
      %590 = vmatprep.subr.mxu0 0.0
      %591 = vmatpush1.msra.mxu0 0.0
      %592 = vmatprep.subr.mxu0 0.0
      %593 = vmatpush1.msra.mxu0 0.0
      %594 = vmatprep.subr.mxu0 0.0
      %595 = vmatpush1.msra.mxu0 0.0
      %596 = vmatprep.subr.mxu0 0.0
      %597 = vmatpush1.msra.mxu0 0.0
      %598 = vmatprep.subr.mxu0 0.0
      %599 = vmatpush1.msra.mxu0 0.0
      %600 = vmatprep.subr.mxu0 0.0
      %601 = vmatpush1.msra.mxu0 0.0
      %602 = vmatprep.subr.mxu0 0.0
      %603 = vmatpush1.msra.mxu0 0.0
      %604 = vmatprep.subr.mxu0 0.0
      %605 = vmatpush1.msra.mxu0 0.0
      %606 = vmatprep.subr.mxu0 0.0
      %607 = vmatpush1.msra.mxu0 0.0
      %608 = vmatprep.subr.mxu0 0.0
      %609 = vmatpush1.msra.mxu0 0.0
      %610 = vmatprep.subr.mxu0 0.0
      %611 = vmatpush1.msra.mxu0 0.0
      %612 = vmatprep.subr.mxu0 0.0
      %613 = vmatpush1.msra.mxu0 0.0
      %614 = vmatprep.subr.mxu0 0.0
      %615 = vmatpush1.msra.mxu0 0.0
      %616 = vmatprep.subr.mxu0 0.0
      %617 = vmatpush1.msra.mxu0 0.0
      %618 = vmatprep.subr.mxu0 0.0
      %619 = vmatpush1.msra.mxu0 0.0
      %620 = vmatprep.subr.mxu0 0.0
      %621 = vmatpush1.msra.mxu0 0.0
      %622 = vmatprep.subr.mxu0 0.0
      %623 = vmatpush1.msra.mxu0 0.0
      %624 = vmatprep.subr.mxu0 0.0
      %625 = vmatpush1.msra.mxu0 0.0
      %626 = vmatprep.subr.mxu0 0.0
      %627 = vmatpush1.msra.mxu0 0.0
      %628 = vmatprep.subr.mxu0 0.0
      %629 = vmatpush1.msra.mxu0 0.0
      %630 = vmatprep.subr.mxu0 0.0
      %631 = vmatpush1.msra.mxu0 0.0
      %632 = vmatprep.subr.mxu0 0.0
      %633 = vmatpush1.msra.mxu0 0.0
      %634 = vmatprep.subr.mxu0 0.0
      %635 = vmatpush1.msra.mxu0 0.0
      %636 = vmatprep.subr.mxu0 0.0
      %637 = vmatpush1.msra.mxu0 0.0
      %638 = vmatprep.subr.mxu0 0.0
      %639 = vmatpush1.msra.mxu0 0.0
      %640 = vmatprep.subr.mxu0 0.0
      %641 = vmatpush1.msra.mxu0 0.0
      %642 = vmatprep.mubr.f32.mxu0 0.0
      %643 = vmatmul.mubr.f32.gmra.mrb[0].mxu0 %v561
      %v644 = vpop.f32.mrb[0].mxu0
      %v645 = vadd.f32 %v415, %v644
      %v646 = vpop.f32.mrb[0].mxu0
      %v647 = vadd.f32 %v417, %v646
      %648 = vdwg.mxu0
      %649 = vmatprep.subr.mxu0 %v286
      %650 = vmatpush1.msra.mxu0 %v288
      %651 = vmatprep.subr.mxu0 %v573
      %652 = vmatpush1.msra.mxu0 %v570
      %653 = vmatprep.subr.mxu0 0.0
      %654 = vmatpush1.msra.mxu0 0.0
      %655 = vmatprep.subr.mxu0 0.0
      %656 = vmatpush1.msra.mxu0 0.0
      %657 = vmatprep.subr.mxu0 0.0
      %658 = vmatpush1.msra.mxu0 0.0
      %659 = vmatprep.subr.mxu0 0.0
      %660 = vmatpush1.msra.mxu0 0.0
      %661 = vmatprep.subr.mxu0 0.0
      %662 = vmatpush1.msra.mxu0 0.0
      %663 = vmatprep.subr.mxu0 0.0
      %664 = vmatpush1.msra.mxu0 0.0
      %665 = vmatprep.subr.mxu0 0.0
      %666 = vmatpush1.msra.mxu0 0.0
      %667 = vmatprep.subr.mxu0 0.0
      %668 = vmatpush1.msra.mxu0 0.0
      %669 = vmatprep.subr.mxu0 0.0
      %670 = vmatpush1.msra.mxu0 0.0
      %671 = vmatprep.subr.mxu0 0.0
      %672 = vmatpush1.msra.mxu0 0.0
      %673 = vmatprep.subr.mxu0 0.0
      %674 = vmatpush1.msra.mxu0 0.0
      %675 = vmatprep.subr.mxu0 0.0
      %676 = vmatpush1.msra.mxu0 0.0
      %677 = vmatprep.subr.mxu0 0.0
      %678 = vmatpush1.msra.mxu0 0.0
      %679 = vmatprep.subr.mxu0 0.0
      %680 = vmatpush1.msra.mxu0 0.0
      %681 = vmatprep.subr.mxu0 0.0
      %682 = vmatpush1.msra.mxu0 0.0
      %683 = vmatprep.subr.mxu0 0.0
      %684 = vmatpush1.msra.mxu0 0.0
      %685 = vmatprep.subr.mxu0 0.0
      %686 = vmatpush1.msra.mxu0 0.0
      %687 = vmatprep.subr.mxu0 0.0
      %688 = vmatpush1.msra.mxu0 0.0
      %689 = vmatprep.subr.mxu0 0.0
      %690 = vmatpush1.msra.mxu0 0.0
      %691 = vmatprep.subr.mxu0 0.0
      %692 = vmatpush1.msra.mxu0 0.0
      %693 = vmatprep.subr.mxu0 0.0
      %694 = vmatpush1.msra.mxu0 0.0
      %695 = vmatprep.subr.mxu0 0.0
      %696 = vmatpush1.msra.mxu0 0.0
      %697 = vmatprep.subr.mxu0 0.0
      %698 = vmatpush1.msra.mxu0 0.0
      %699 = vmatprep.subr.mxu0 0.0
      %700 = vmatpush1.msra.mxu0 0.0
      %701 = vmatprep.subr.mxu0 0.0
      %702 = vmatpush1.msra.mxu0 0.0
      %703 = vmatprep.subr.mxu0 0.0
      %704 = vmatpush1.msra.mxu0 0.0
      %705 = vmatprep.subr.mxu0 0.0
      %706 = vmatpush1.msra.mxu0 0.0
      %707 = vmatprep.subr.mxu0 0.0
      %708 = vmatpush1.msra.mxu0 0.0
      %709 = vmatprep.subr.mxu0 0.0
      %710 = vmatpush1.msra.mxu0 0.0
      %711 = vmatprep.subr.mxu0 0.0
      %712 = vmatpush1.msra.mxu0 0.0
      %713 = vmatprep.mubr.f32.mxu0 0.0
      %714 = vmatmul.mubr.f32.gmra.mrb[0].mxu0 %v561
      %v715 = vpop.f32.mrb[0].mxu0
      %v716 = vadd.f32 %v486, %v715
      %v717 = vpop.f32.mrb[0].mxu0
      %v718 = vadd.f32 %v488, %v717
      %719 = vdwg.mxu0
      %720 = vmatprep.subr.mxu0 0.0
      %721 = vmatpush1.msra.mxu0 %v284
      %722 = vmatprep.subr.mxu0 0.0
      %723 = vmatpush1.msra.mxu0 %v576
      %724 = vmatprep.subr.mxu0 0.0
      %725 = vmatpush1.msra.mxu0 0.0
      %726 = vmatprep.subr.mxu0 0.0
      %727 = vmatpush1.msra.mxu0 0.0
      %728 = vmatprep.subr.mxu0 0.0
      %729 = vmatpush1.msra.mxu0 0.0
      %730 = vmatprep.subr.mxu0 0.0
      %731 = vmatpush1.msra.mxu0 0.0
      %732 = vmatprep.subr.mxu0 0.0
      %733 = vmatpush1.msra.mxu0 0.0
      %734 = vmatprep.subr.mxu0 0.0
      %735 = vmatpush1.msra.mxu0 0.0
      %736 = vmatprep.subr.mxu0 0.0
      %737 = vmatpush1.msra.mxu0 0.0
      %738 = vmatprep.subr.mxu0 0.0
      %739 = vmatpush1.msra.mxu0 0.0
      %740 = vmatprep.subr.mxu0 0.0
      %741 = vmatpush1.msra.mxu0 0.0
      %742 = vmatprep.subr.mxu0 0.0
      %743 = vmatpush1.msra.mxu0 0.0
      %744 = vmatprep.subr.mxu0 0.0
      %745 = vmatpush1.msra.mxu0 0.0
      %746 = vmatprep.subr.mxu0 0.0
      %747 = vmatpush1.msra.mxu0 0.0
      %748 = vmatprep.subr.mxu0 0.0
      %749 = vmatpush1.msra.mxu0 0.0
      %750 = vmatprep.subr.mxu0 0.0
      %751 = vmatpush1.msra.mxu0 0.0
      %752 = vmatprep.subr.mxu0 0.0
      %753 = vmatpush1.msra.mxu0 0.0
      %754 = vmatprep.subr.mxu0 0.0
      %755 = vmatpush1.msra.mxu0 0.0
      %756 = vmatprep.subr.mxu0 0.0
      %757 = vmatpush1.msra.mxu0 0.0
      %758 = vmatprep.subr.mxu0 0.0
      %759 = vmatpush1.msra.mxu0 0.0
      %760 = vmatprep.subr.mxu0 0.0
      %761 = vmatpush1.msra.mxu0 0.0
      %762 = vmatprep.subr.mxu0 0.0
      %763 = vmatpush1.msra.mxu0 0.0
      %764 = vmatprep.subr.mxu0 0.0
      %765 = vmatpush1.msra.mxu0 0.0
      %766 = vmatprep.subr.mxu0 0.0
      %767 = vmatpush1.msra.mxu0 0.0
      %768 = vmatprep.subr.mxu0 0.0
      %769 = vmatpush1.msra.mxu0 0.0
      %770 = vmatprep.subr.mxu0 0.0
      %771 = vmatpush1.msra.mxu0 0.0
      %772 = vmatprep.subr.mxu0 0.0
      %773 = vmatpush1.msra.mxu0 0.0
      %774 = vmatprep.subr.mxu0 0.0
      %775 = vmatpush1.msra.mxu0 0.0
      %776 = vmatprep.subr.mxu0 0.0
      %777 = vmatpush1.msra.mxu0 0.0
      %778 = vmatprep.subr.mxu0 0.0
      %779 = vmatpush1.msra.mxu0 0.0
      %780 = vmatprep.subr.mxu0 0.0
      %781 = vmatpush1.msra.mxu0 0.0
      %782 = vmatprep.subr.mxu0 0.0
      %783 = vmatpush1.msra.mxu0 0.0
      %784 = vmatprep.mubr.f32.mxu0 0.0
      %785 = vmatmul.mubr.f32.gmra.mrb[0].mxu0 %v561
      %v786 = vpop.f32.mrb[0].mxu0
      %v787 = vadd.f32 %v557, %v786
      %v788 = vpop.f32.mrb[0].mxu0
      %789 = vdwg.mxu0
      %790 = vrot.lane.b32.xlu0 %v250, 33
      %v791 = vpop.permute.xlu0 %790
      %792 = vrot.lane.b32.xlu0 %v255, 33
      %v793 = vpop.permute.xlu0 %792
      %794 = vrot.lane.b32.xlu0 %v251, 33
      %v795 = vpop.permute.xlu0 %794
      %796 = vrot.lane.b32.xlu0 %v256, 33
      %v797 = vpop.permute.xlu0 %796
      %798 = vrot.lane.b32.xlu0 %v252, 33
      %v799 = vpop.permute.xlu0 %798
      %800 = vrot.lane.b32.xlu0 %v257, 33
      %v801 = vpop.permute.xlu0 %800
      %802 = vrot.lane.b32.xlu0 %v253, 33
      %v803 = vpop.permute.xlu0 %802
      %804 = vrot.lane.b32.xlu0 %v258, 33
      %v805 = vpop.permute.xlu0 %804
      %806 = vrot.lane.b32.xlu0 %v254, 33
      %v807 = vpop.permute.xlu0 %806
      %808 = vrot.lane.b32.xlu0 %v259, 33
      %v809 = vpop.permute.xlu0 %808
      %vm810 = vcmp.lt.s32.totalorder %v282, 33
      %v811 = vsel %vm810, %v803, %v807
      %v812 = vsel %vm810, %v805, %v809
      %v813 = vsel %vm810, %v799, %v803
      %v814 = vsel %vm810, %v801, %v805
      %v815 = vsel %vm810, %v795, %v799
      %v816 = vsel %vm810, %v797, %v801
      %v817 = vsel %vm810, %v791, %v795
      %v818 = vsel %vm810, %v793, %v797
      %v819 = vsel %vm810, %v807, %v791
      %v820 = vsel %vm810, %v809, %v793
      %s821 = scalar_lea.vmem %s1, 16
      %v822 = vld [vmem:[%s821] sm:$0xff]
      %v824 = vsel %vm328, %v822, 0
      %v827 = vsel %vm332, %v820, 0
      %v830 = vsel %vm332, %v818, 0
      %v833 = vsel %vm332, %v816, 0
      %v836 = vsel %vm332, %v814, 0
      %v839 = vsel %vm332, %v812, 0
      %841 = vmatprep.subr.mxu0 %v817
      %842 = vmatpush1.msra.mxu0 %v819
      %843 = vmatprep.subr.mxu0 %v830
      %844 = vmatpush1.msra.mxu0 %v827
      %845 = vmatprep.subr.mxu0 0.0
      %846 = vmatpush1.msra.mxu0 0.0
      %847 = vmatprep.subr.mxu0 0.0
      %848 = vmatpush1.msra.mxu0 0.0
      %849 = vmatprep.subr.mxu0 0.0
      %850 = vmatpush1.msra.mxu0 0.0
      %851 = vmatprep.subr.mxu0 0.0
      %852 = vmatpush1.msra.mxu0 0.0
      %853 = vmatprep.subr.mxu0 0.0
      %854 = vmatpush1.msra.mxu0 0.0
      %855 = vmatprep.subr.mxu0 0.0
      %856 = vmatpush1.msra.mxu0 0.0
      %857 = vmatprep.subr.mxu0 0.0
      %858 = vmatpush1.msra.mxu0 0.0
      %859 = vmatprep.subr.mxu0 0.0
      %860 = vmatpush1.msra.mxu0 0.0
      %861 = vmatprep.subr.mxu0 0.0
      %862 = vmatpush1.msra.mxu0 0.0
      %863 = vmatprep.subr.mxu0 0.0
      %864 = vmatpush1.msra.mxu0 0.0
      %865 = vmatprep.subr.mxu0 0.0
      %866 = vmatpush1.msra.mxu0 0.0
      %867 = vmatprep.subr.mxu0 0.0
      %868 = vmatpush1.msra.mxu0 0.0
      %869 = vmatprep.subr.mxu0 0.0
      %870 = vmatpush1.msra.mxu0 0.0
      %871 = vmatprep.subr.mxu0 0.0
      %872 = vmatpush1.msra.mxu0 0.0
      %873 = vmatprep.subr.mxu0 0.0
      %874 = vmatpush1.msra.mxu0 0.0
      %875 = vmatprep.subr.mxu0 0.0
      %876 = vmatpush1.msra.mxu0 0.0
      %877 = vmatprep.subr.mxu0 0.0
      %878 = vmatpush1.msra.mxu0 0.0
      %879 = vmatprep.subr.mxu0 0.0
      %880 = vmatpush1.msra.mxu0 0.0
      %881 = vmatprep.subr.mxu0 0.0
      %882 = vmatpush1.msra.mxu0 0.0
      %883 = vmatprep.subr.mxu0 0.0
      %884 = vmatpush1.msra.mxu0 0.0
      %885 = vmatprep.subr.mxu0 0.0
      %886 = vmatpush1.msra.mxu0 0.0
      %887 = vmatprep.subr.mxu0 0.0
      %888 = vmatpush1.msra.mxu0 0.0
      %889 = vmatprep.subr.mxu0 0.0
      %890 = vmatpush1.msra.mxu0 0.0
      %891 = vmatprep.subr.mxu0 0.0
      %892 = vmatpush1.msra.mxu0 0.0
      %893 = vmatprep.subr.mxu0 0.0
      %894 = vmatpush1.msra.mxu0 0.0
      %895 = vmatprep.subr.mxu0 0.0
      %896 = vmatpush1.msra.mxu0 0.0
      %897 = vmatprep.subr.mxu0 0.0
      %898 = vmatpush1.msra.mxu0 0.0
      %899 = vmatprep.subr.mxu0 0.0
      %900 = vmatpush1.msra.mxu0 0.0
      %901 = vmatprep.subr.mxu0 0.0
      %902 = vmatpush1.msra.mxu0 0.0
      %903 = vmatprep.subr.mxu0 0.0
      %904 = vmatpush1.msra.mxu0 0.0
      %905 = vmatprep.mubr.f32.mxu0 0.0
      %906 = vmatmul.mubr.f32.gmra.mrb[0].mxu0 %v824
      %v907 = vpop.f32.mrb[0].mxu0
      %v908 = vadd.f32 0.0, %v907
      %v909 = vpop.f32.mrb[0].mxu0
      %v910 = vadd.f32 0.0, %v909
      %911 = vdwg.mxu0
      %912 = vmatprep.subr.mxu0 %v813
      %913 = vmatpush1.msra.mxu0 %v815
      %914 = vmatprep.subr.mxu0 %v836
      %915 = vmatpush1.msra.mxu0 %v833
      %916 = vmatprep.subr.mxu0 0.0
      %917 = vmatpush1.msra.mxu0 0.0
      %918 = vmatprep.subr.mxu0 0.0
      %919 = vmatpush1.msra.mxu0 0.0
      %920 = vmatprep.subr.mxu0 0.0
      %921 = vmatpush1.msra.mxu0 0.0
      %922 = vmatprep.subr.mxu0 0.0
      %923 = vmatpush1.msra.mxu0 0.0
      %924 = vmatprep.subr.mxu0 0.0
      %925 = vmatpush1.msra.mxu0 0.0
      %926 = vmatprep.subr.mxu0 0.0
      %927 = vmatpush1.msra.mxu0 0.0
      %928 = vmatprep.subr.mxu0 0.0
      %929 = vmatpush1.msra.mxu0 0.0
      %930 = vmatprep.subr.mxu0 0.0
      %931 = vmatpush1.msra.mxu0 0.0
      %932 = vmatprep.subr.mxu0 0.0
      %933 = vmatpush1.msra.mxu0 0.0
      %934 = vmatprep.subr.mxu0 0.0
      %935 = vmatpush1.msra.mxu0 0.0
      %936 = vmatprep.subr.mxu0 0.0
      %937 = vmatpush1.msra.mxu0 0.0
      %938 = vmatprep.subr.mxu0 0.0
      %939 = vmatpush1.msra.mxu0 0.0
      %940 = vmatprep.subr.mxu0 0.0
      %941 = vmatpush1.msra.mxu0 0.0
      %942 = vmatprep.subr.mxu0 0.0
      %943 = vmatpush1.msra.mxu0 0.0
      %944 = vmatprep.subr.mxu0 0.0
      %945 = vmatpush1.msra.mxu0 0.0
      %946 = vmatprep.subr.mxu0 0.0
      %947 = vmatpush1.msra.mxu0 0.0
      %948 = vmatprep.subr.mxu0 0.0
      %949 = vmatpush1.msra.mxu0 0.0
      %950 = vmatprep.subr.mxu0 0.0
      %951 = vmatpush1.msra.mxu0 0.0
      %952 = vmatprep.subr.mxu0 0.0
      %953 = vmatpush1.msra.mxu0 0.0
      %954 = vmatprep.subr.mxu0 0.0
      %955 = vmatpush1.msra.mxu0 0.0
      %956 = vmatprep.subr.mxu0 0.0
      %957 = vmatpush1.msra.mxu0 0.0
      %958 = vmatprep.subr.mxu0 0.0
      %959 = vmatpush1.msra.mxu0 0.0
      %960 = vmatprep.subr.mxu0 0.0
      %961 = vmatpush1.msra.mxu0 0.0
      %962 = vmatprep.subr.mxu0 0.0
      %963 = vmatpush1.msra.mxu0 0.0
      %964 = vmatprep.subr.mxu0 0.0
      %965 = vmatpush1.msra.mxu0 0.0
      %966 = vmatprep.subr.mxu0 0.0
      %967 = vmatpush1.msra.mxu0 0.0
      %968 = vmatprep.subr.mxu0 0.0
      %969 = vmatpush1.msra.mxu0 0.0
      %970 = vmatprep.subr.mxu0 0.0
      %971 = vmatpush1.msra.mxu0 0.0
      %972 = vmatprep.subr.mxu0 0.0
      %973 = vmatpush1.msra.mxu0 0.0
      %974 = vmatprep.subr.mxu0 0.0
      %975 = vmatpush1.msra.mxu0 0.0
      %976 = vmatprep.mubr.f32.mxu0 0.0
      %977 = vmatmul.mubr.f32.gmra.mrb[0].mxu0 %v824
      %v978 = vpop.f32.mrb[0].mxu0
      %v979 = vadd.f32 0.0, %v978
      %v980 = vpop.f32.mrb[0].mxu0
      %v981 = vadd.f32 0.0, %v980
      %982 = vdwg.mxu0
      %983 = vmatprep.subr.mxu0 0.0
      %984 = vmatpush1.msra.mxu0 %v811
      %985 = vmatprep.subr.mxu0 0.0
      %986 = vmatpush1.msra.mxu0 %v839
      %987 = vmatprep.subr.mxu0 0.0
      %988 = vmatpush1.msra.mxu0 0.0
      %989 = vmatprep.subr.mxu0 0.0
      %990 = vmatpush1.msra.mxu0 0.0
      %991 = vmatprep.subr.mxu0 0.0
      %992 = vmatpush1.msra.mxu0 0.0
      %993 = vmatprep.subr.mxu0 0.0
      %994 = vmatpush1.msra.mxu0 0.0
      %995 = vmatprep.subr.mxu0 0.0
      %996 = vmatpush1.msra.mxu0 0.0
      %997 = vmatprep.subr.mxu0 0.0
      %998 = vmatpush1.msra.mxu0 0.0
      %999 = vmatprep.subr.mxu0 0.0
      %1000 = vmatpush1.msra.mxu0 0.0
      %1001 = vmatprep.subr.mxu0 0.0
      %1002 = vmatpush1.msra.mxu0 0.0
      %1003 = vmatprep.subr.mxu0 0.0
      %1004 = vmatpush1.msra.mxu0 0.0
      %1005 = vmatprep.subr.mxu0 0.0
      %1006 = vmatpush1.msra.mxu0 0.0
      %1007 = vmatprep.subr.mxu0 0.0
      %1008 = vmatpush1.msra.mxu0 0.0
      %1009 = vmatprep.subr.mxu0 0.0
      %1010 = vmatpush1.msra.mxu0 0.0
      %1011 = vmatprep.subr.mxu0 0.0
      %1012 = vmatpush1.msra.mxu0 0.0
      %1013 = vmatprep.subr.mxu0 0.0
      %1014 = vmatpush1.msra.mxu0 0.0
      %1015 = vmatprep.subr.mxu0 0.0
      %1016 = vmatpush1.msra.mxu0 0.0
      %1017 = vmatprep.subr.mxu0 0.0
      %1018 = vmatpush1.msra.mxu0 0.0
      %1019 = vmatprep.subr.mxu0 0.0
      %1020 = vmatpush1.msra.mxu0 0.0
      %1021 = vmatprep.subr.mxu0 0.0
      %1022 = vmatpush1.msra.mxu0 0.0
      %1023 = vmatprep.subr.mxu0 0.0
      %1024 = vmatpush1.msra.mxu0 0.0
      %1025 = vmatprep.subr.mxu0 0.0
      %1026 = vmatpush1.msra.mxu0 0.0
      %1027 = vmatprep.subr.mxu0 0.0
      %1028 = vmatpush1.msra.mxu0 0.0
      %1029 = vmatprep.subr.mxu0 0.0
      %1030 = vmatpush1.msra.mxu0 0.0
      %1031 = vmatprep.subr.mxu0 0.0
      %1032 = vmatpush1.msra.mxu0 0.0
      %1033 = vmatprep.subr.mxu0 0.0
      %1034 = vmatpush1.msra.mxu0 0.0
      %1035 = vmatprep.subr.mxu0 0.0
      %1036 = vmatpush1.msra.mxu0 0.0
      %1037 = vmatprep.subr.mxu0 0.0
      %1038 = vmatpush1.msra.mxu0 0.0
      %1039 = vmatprep.subr.mxu0 0.0
      %1040 = vmatpush1.msra.mxu0 0.0
      %1041 = vmatprep.subr.mxu0 0.0
      %1042 = vmatpush1.msra.mxu0 0.0
      %1043 = vmatprep.subr.mxu0 0.0
      %1044 = vmatpush1.msra.mxu0 0.0
      %1045 = vmatprep.subr.mxu0 0.0
      %1046 = vmatpush1.msra.mxu0 0.0
      %1047 = vmatprep.mubr.f32.mxu0 0.0
      %1048 = vmatmul.mubr.f32.gmra.mrb[0].mxu0 %v824
      %v1049 = vpop.f32.mrb[0].mxu0
      %v1050 = vadd.f32 0.0, %v1049
      %v1051 = vpop.f32.mrb[0].mxu0
      %1052 = vdwg.mxu0
      %v1053 = vadd.f32 %v645, %v908
      %v1054 = vadd.f32 %v647, %v910
      %v1055 = vadd.f32 %v716, %v979
      %v1056 = vadd.f32 %v718, %v981
      %v1057 = vadd.f32 %v787, %v1050
      %1058 = vrot.lane.b32.xlu0 %v250, 1
      %v1059 = vpop.permute.xlu0 %1058
      %1060 = vrot.lane.b32.xlu0 %v255, 1
      %v1061 = vpop.permute.xlu0 %1060
      %1062 = vrot.lane.b32.xlu0 %v251, 1
      %v1063 = vpop.permute.xlu0 %1062
      %1064 = vrot.lane.b32.xlu0 %v256, 1
      %v1065 = vpop.permute.xlu0 %1064
      %1066 = vrot.lane.b32.xlu0 %v252, 1
      %v1067 = vpop.permute.xlu0 %1066
      %1068 = vrot.lane.b32.xlu0 %v257, 1
      %v1069 = vpop.permute.xlu0 %1068
      %1070 = vrot.lane.b32.xlu0 %v253, 1
      %v1071 = vpop.permute.xlu0 %1070
      %1072 = vrot.lane.b32.xlu0 %v258, 1
      %v1073 = vpop.permute.xlu0 %1072
      %1074 = vrot.lane.b32.xlu0 %v254, 1
      %v1075 = vpop.permute.xlu0 %1074
      %1076 = vrot.lane.b32.xlu0 %v259, 1
      %v1077 = vpop.permute.xlu0 %1076
      %vm1078 = vcmp.lt.s32.totalorder %v282, 1
      %v1079 = vsel %vm1078, %v1071, %v1075
      %v1080 = vsel %vm1078, %v1073, %v1077
      %v1081 = vsel %vm1078, %v1067, %v1071
      %v1082 = vsel %vm1078, %v1069, %v1073
      %v1083 = vsel %vm1078, %v1063, %v1067
      %v1084 = vsel %vm1078, %v1065, %v1069
      %v1085 = vsel %vm1078, %v1059, %v1063
      %v1086 = vsel %vm1078, %v1061, %v1065
      %v1087 = vsel %vm1078, %v1075, %v1059
      %v1088 = vsel %vm1078, %v1077, %v1061
      %s1089 = scalar_lea.vmem %s1, 24
      %v1090 = vld [vmem:[%s1089] sm:$0xff]
      %v1092 = vsel %vm328, %v1090, 0
      %v1095 = vsel %vm332, %v1088, 0
      %v1098 = vsel %vm332, %v1086, 0
      %v1101 = vsel %vm332, %v1084, 0
      %v1104 = vsel %vm332, %v1082, 0
      %v1107 = vsel %vm332, %v1080, 0
      %1109 = vmatprep.subr.mxu0 %v1085
      %1110 = vmatpush1.msra.mxu0 %v1087
      %1111 = vmatprep.subr.mxu0 %v1098
      %1112 = vmatpush1.msra.mxu0 %v1095
      %1113 = vmatprep.subr.mxu0 0.0
      %1114 = vmatpush1.msra.mxu0 0.0
      %1115 = vmatprep.subr.mxu0 0.0
      %1116 = vmatpush1.msra.mxu0 0.0
      %1117 = vmatprep.subr.mxu0 0.0
      %1118 = vmatpush1.msra.mxu0 0.0
      %1119 = vmatprep.subr.mxu0 0.0
      %1120 = vmatpush1.msra.mxu0 0.0
      %1121 = vmatprep.subr.mxu0 0.0
      %1122 = vmatpush1.msra.mxu0 0.0
      %1123 = vmatprep.subr.mxu0 0.0
      %1124 = vmatpush1.msra.mxu0 0.0
      %1125 = vmatprep.subr.mxu0 0.0
      %1126 = vmatpush1.msra.mxu0 0.0
      %1127 = vmatprep.subr.mxu0 0.0
      %1128 = vmatpush1.msra.mxu0 0.0
      %1129 = vmatprep.subr.mxu0 0.0
      %1130 = vmatpush1.msra.mxu0 0.0
      %1131 = vmatprep.subr.mxu0 0.0
      %1132 = vmatpush1.msra.mxu0 0.0
      %1133 = vmatprep.subr.mxu0 0.0
      %1134 = vmatpush1.msra.mxu0 0.0
      %1135 = vmatprep.subr.mxu0 0.0
      %1136 = vmatpush1.msra.mxu0 0.0
      %1137 = vmatprep.subr.mxu0 0.0
      %1138 = vmatpush1.msra.mxu0 0.0
      %1139 = vmatprep.subr.mxu0 0.0
      %1140 = vmatpush1.msra.mxu0 0.0
      %1141 = vmatprep.subr.mxu0 0.0
      %1142 = vmatpush1.msra.mxu0 0.0
      %1143 = vmatprep.subr.mxu0 0.0
      %1144 = vmatpush1.msra.mxu0 0.0
      %1145 = vmatprep.subr.mxu0 0.0
      %1146 = vmatpush1.msra.mxu0 0.0
      %1147 = vmatprep.subr.mxu0 0.0
      %1148 = vmatpush1.msra.mxu0 0.0
      %1149 = vmatprep.subr.mxu0 0.0
      %1150 = vmatpush1.msra.mxu0 0.0
      %1151 = vmatprep.subr.mxu0 0.0
      %1152 = vmatpush1.msra.mxu0 0.0
      %1153 = vmatprep.subr.mxu0 0.0
      %1154 = vmatpush1.msra.mxu0 0.0
      %1155 = vmatprep.subr.mxu0 0.0
      %1156 = vmatpush1.msra.mxu0 0.0
      %1157 = vmatprep.subr.mxu0 0.0
      %1158 = vmatpush1.msra.mxu0 0.0
      %1159 = vmatprep.subr.mxu0 0.0
      %1160 = vmatpush1.msra.mxu0 0.0
      %1161 = vmatprep.subr.mxu0 0.0
      %1162 = vmatpush1.msra.mxu0 0.0
      %1163 = vmatprep.subr.mxu0 0.0
      %1164 = vmatpush1.msra.mxu0 0.0
      %1165 = vmatprep.subr.mxu0 0.0
      %1166 = vmatpush1.msra.mxu0 0.0
      %1167 = vmatprep.subr.mxu0 0.0
      %1168 = vmatpush1.msra.mxu0 0.0
      %1169 = vmatprep.subr.mxu0 0.0
      %1170 = vmatpush1.msra.mxu0 0.0
      %1171 = vmatprep.subr.mxu0 0.0
      %1172 = vmatpush1.msra.mxu0 0.0
      %1173 = vmatprep.mubr.f32.mxu0 0.0
      %1174 = vmatmul.mubr.f32.gmra.mrb[0].mxu0 %v1092
      %v1175 = vpop.f32.mrb[0].mxu0
      %v1176 = vadd.f32 0.0, %v1175
      %v1177 = vpop.f32.mrb[0].mxu0
      %v1178 = vadd.f32 0.0, %v1177
      %1179 = vdwg.mxu0
      %1180 = vmatprep.subr.mxu0 %v1081
      %1181 = vmatpush1.msra.mxu0 %v1083
      %1182 = vmatprep.subr.mxu0 %v1104
      %1183 = vmatpush1.msra.mxu0 %v1101
      %1184 = vmatprep.subr.mxu0 0.0
      %1185 = vmatpush1.msra.mxu0 0.0
      %1186 = vmatprep.subr.mxu0 0.0
      %1187 = vmatpush1.msra.mxu0 0.0
      %1188 = vmatprep.subr.mxu0 0.0
      %1189 = vmatpush1.msra.mxu0 0.0
      %1190 = vmatprep.subr.mxu0 0.0
      %1191 = vmatpush1.msra.mxu0 0.0
      %1192 = vmatprep.subr.mxu0 0.0
      %1193 = vmatpush1.msra.mxu0 0.0
      %1194 = vmatprep.subr.mxu0 0.0
      %1195 = vmatpush1.msra.mxu0 0.0
      %1196 = vmatprep.subr.mxu0 0.0
      %1197 = vmatpush1.msra.mxu0 0.0
      %1198 = vmatprep.subr.mxu0 0.0
      %1199 = vmatpush1.msra.mxu0 0.0
      %1200 = vmatprep.subr.mxu0 0.0
      %1201 = vmatpush1.msra.mxu0 0.0
      %1202 = vmatprep.subr.mxu0 0.0
      %1203 = vmatpush1.msra.mxu0 0.0
      %1204 = vmatprep.subr.mxu0 0.0
      %1205 = vmatpush1.msra.mxu0 0.0
      %1206 = vmatprep.subr.mxu0 0.0
      %1207 = vmatpush1.msra.mxu0 0.0
      %1208 = vmatprep.subr.mxu0 0.0
      %1209 = vmatpush1.msra.mxu0 0.0
      %1210 = vmatprep.subr.mxu0 0.0
      %1211 = vmatpush1.msra.mxu0 0.0
      %1212 = vmatprep.subr.mxu0 0.0
      %1213 = vmatpush1.msra.mxu0 0.0
      %1214 = vmatprep.subr.mxu0 0.0
      %1215 = vmatpush1.msra.mxu0 0.0
      %1216 = vmatprep.subr.mxu0 0.0
      %1217 = vmatpush1.msra.mxu0 0.0
      %1218 = vmatprep.subr.mxu0 0.0
      %1219 = vmatpush1.msra.mxu0 0.0
      %1220 = vmatprep.subr.mxu0 0.0
      %1221 = vmatpush1.msra.mxu0 0.0
      %1222 = vmatprep.subr.mxu0 0.0
      %1223 = vmatpush1.msra.mxu0 0.0
      %1224 = vmatprep.subr.mxu0 0.0
      %1225 = vmatpush1.msra.mxu0 0.0
      %1226 = vmatprep.subr.mxu0 0.0
      %1227 = vmatpush1.msra.mxu0 0.0
      %1228 = vmatprep.subr.mxu0 0.0
      %1229 = vmatpush1.msra.mxu0 0.0
      %1230 = vmatprep.subr.mxu0 0.0
      %1231 = vmatpush1.msra.mxu0 0.0
      %1232 = vmatprep.subr.mxu0 0.0
      %1233 = vmatpush1.msra.mxu0 0.0
      %1234 = vmatprep.subr.mxu0 0.0
      %1235 = vmatpush1.msra.mxu0 0.0
      %1236 = vmatprep.subr.mxu0 0.0
      %1237 = vmatpush1.msra.mxu0 0.0
      %1238 = vmatprep.subr.mxu0 0.0
      %1239 = vmatpush1.msra.mxu0 0.0
      %1240 = vmatprep.subr.mxu0 0.0
      %1241 = vmatpush1.msra.mxu0 0.0
      %1242 = vmatprep.subr.mxu0 0.0
      %1243 = vmatpush1.msra.mxu0 0.0
      %1244 = vmatprep.mubr.f32.mxu0 0.0
      %1245 = vmatmul.mubr.f32.gmra.mrb[0].mxu0 %v1092
      %v1246 = vpop.f32.mrb[0].mxu0
      %v1247 = vadd.f32 0.0, %v1246
      %v1248 = vpop.f32.mrb[0].mxu0
      %v1249 = vadd.f32 0.0, %v1248
      %1250 = vdwg.mxu0
      %1251 = vmatprep.subr.mxu0 0.0
      %1252 = vmatpush1.msra.mxu0 %v1079
      %1253 = vmatprep.subr.mxu0 0.0
      %1254 = vmatpush1.msra.mxu0 %v1107
      %1255 = vmatprep.subr.mxu0 0.0
      %1256 = vmatpush1.msra.mxu0 0.0
      %1257 = vmatprep.subr.mxu0 0.0
      %1258 = vmatpush1.msra.mxu0 0.0
      %1259 = vmatprep.subr.mxu0 0.0
      %1260 = vmatpush1.msra.mxu0 0.0
      %1261 = vmatprep.subr.mxu0 0.0
      %1262 = vmatpush1.msra.mxu0 0.0
      %1263 = vmatprep.subr.mxu0 0.0
      %1264 = vmatpush1.msra.mxu0 0.0
      %1265 = vmatprep.subr.mxu0 0.0
      %1266 = vmatpush1.msra.mxu0 0.0
      %1267 = vmatprep.subr.mxu0 0.0
      %1268 = vmatpush1.msra.mxu0 0.0
      %1269 = vmatprep.subr.mxu0 0.0
      %1270 = vmatpush1.msra.mxu0 0.0
      %1271 = vmatprep.subr.mxu0 0.0
      %1272 = vmatpush1.msra.mxu0 0.0
      %1273 = vmatprep.subr.mxu0 0.0
      %1274 = vmatpush1.msra.mxu0 0.0
      %1275 = vmatprep.subr.mxu0 0.0
      %1276 = vmatpush1.msra.mxu0 0.0
      %1277 = vmatprep.subr.mxu0 0.0
      %1278 = vmatpush1.msra.mxu0 0.0
      %1279 = vmatprep.subr.mxu0 0.0
      %1280 = vmatpush1.msra.mxu0 0.0
      %1281 = vmatprep.subr.mxu0 0.0
      %1282 = vmatpush1.msra.mxu0 0.0
      %1283 = vmatprep.subr.mxu0 0.0
      %1284 = vmatpush1.msra.mxu0 0.0
      %1285 = vmatprep.subr.mxu0 0.0
      %1286 = vmatpush1.msra.mxu0 0.0
      %1287 = vmatprep.subr.mxu0 0.0
      %1288 = vmatpush1.msra.mxu0 0.0
      %1289 = vmatprep.subr.mxu0 0.0
      %1290 = vmatpush1.msra.mxu0 0.0
      %1291 = vmatprep.subr.mxu0 0.0
      %1292 = vmatpush1.msra.mxu0 0.0
      %1293 = vmatprep.subr.mxu0 0.0
      %1294 = vmatpush1.msra.mxu0 0.0
      %1295 = vmatprep.subr.mxu0 0.0
      %1296 = vmatpush1.msra.mxu0 0.0
      %1297 = vmatprep.subr.mxu0 0.0
      %1298 = vmatpush1.msra.mxu0 0.0
      %1299 = vmatprep.subr.mxu0 0.0
      %1300 = vmatpush1.msra.mxu0 0.0
      %1301 = vmatprep.subr.mxu0 0.0
      %1302 = vmatpush1.msra.mxu0 0.0
      %1303 = vmatprep.subr.mxu0 0.0
      %1304 = vmatpush1.msra.mxu0 0.0
      %1305 = vmatprep.subr.mxu0 0.0
      %1306 = vmatpush1.msra.mxu0 0.0
      %1307 = vmatprep.subr.mxu0 0.0
      %1308 = vmatpush1.msra.mxu0 0.0
      %1309 = vmatprep.subr.mxu0 0.0
      %1310 = vmatpush1.msra.mxu0 0.0
      %1311 = vmatprep.subr.mxu0 0.0
      %1312 = vmatpush1.msra.mxu0 0.0
      %1313 = vmatprep.subr.mxu0 0.0
      %1314 = vmatpush1.msra.mxu0 0.0
      %1315 = vmatprep.mubr.f32.mxu0 0.0
      %1316 = vmatmul.mubr.f32.gmra.mrb[0].mxu0 %v1092
      %v1317 = vpop.f32.mrb[0].mxu0
      %v1318 = vadd.f32 0.0, %v1317
      %v1319 = vpop.f32.mrb[0].mxu0
      %1320 = vdwg.mxu0
      %v1321 = vadd.f32 %v1053, %v1176
      %v1322 = vadd.f32 %v1054, %v1178
      %v1323 = vadd.f32 %v1055, %v1247
      %v1324 = vadd.f32 %v1056, %v1249
      %v1325 = vadd.f32 %v1057, %v1318
      %s1326 = scalar_lea.vmem %s1, 32
      %v1327 = vld [vmem:[%s1326] sm:$0xff]
      %v1329 = vsel %vm328, %v1327, 0
      %v1332 = vsel %vm332, %v255, 0
      %v1335 = vsel %vm332, %v256, 0
      %v1338 = vsel %vm332, %v257, 0
      %v1341 = vsel %vm332, %v258, 0
      %v1344 = vsel %vm332, %v259, 0
      %1346 = vmatprep.subr.mxu0 %v251
      %1347 = vmatpush1.msra.mxu0 %v250
      %1348 = vmatprep.subr.mxu0 %v1335
      %1349 = vmatpush1.msra.mxu0 %v1332
      %1350 = vmatprep.subr.mxu0 0.0
      %1351 = vmatpush1.msra.mxu0 0.0
      %1352 = vmatprep.subr.mxu0 0.0
      %1353 = vmatpush1.msra.mxu0 0.0
      %1354 = vmatprep.subr.mxu0 0.0
      %1355 = vmatpush1.msra.mxu0 0.0
      %1356 = vmatprep.subr.mxu0 0.0
      %1357 = vmatpush1.msra.mxu0 0.0
      %1358 = vmatprep.subr.mxu0 0.0
      %1359 = vmatpush1.msra.mxu0 0.0
      %1360 = vmatprep.subr.mxu0 0.0
      %1361 = vmatpush1.msra.mxu0 0.0
      %1362 = vmatprep.subr.mxu0 0.0
      %1363 = vmatpush1.msra.mxu0 0.0
      %1364 = vmatprep.subr.mxu0 0.0
      %1365 = vmatpush1.msra.mxu0 0.0
      %1366 = vmatprep.subr.mxu0 0.0
      %1367 = vmatpush1.msra.mxu0 0.0
      %1368 = vmatprep.subr.mxu0 0.0
      %1369 = vmatpush1.msra.mxu0 0.0
      %1370 = vmatprep.subr.mxu0 0.0
      %1371 = vmatpush1.msra.mxu0 0.0
      %1372 = vmatprep.subr.mxu0 0.0
      %1373 = vmatpush1.msra.mxu0 0.0
      %1374 = vmatprep.subr.mxu0 0.0
      %1375 = vmatpush1.msra.mxu0 0.0
      %1376 = vmatprep.subr.mxu0 0.0
      %1377 = vmatpush1.msra.mxu0 0.0
      %1378 = vmatprep.subr.mxu0 0.0
      %1379 = vmatpush1.msra.mxu0 0.0
      %1380 = vmatprep.subr.mxu0 0.0
      %1381 = vmatpush1.msra.mxu0 0.0
      %1382 = vmatprep.subr.mxu0 0.0
      %1383 = vmatpush1.msra.mxu0 0.0
      %1384 = vmatprep.subr.mxu0 0.0
      %1385 = vmatpush1.msra.mxu0 0.0
      %1386 = vmatprep.subr.mxu0 0.0
      %1387 = vmatpush1.msra.mxu0 0.0
      %1388 = vmatprep.subr.mxu0 0.0
      %1389 = vmatpush1.msra.mxu0 0.0
      %1390 = vmatprep.subr.mxu0 0.0
      %1391 = vmatpush1.msra.mxu0 0.0
      %1392 = vmatprep.subr.mxu0 0.0
      %1393 = vmatpush1.msra.mxu0 0.0
      %1394 = vmatprep.subr.mxu0 0.0
      %1395 = vmatpush1.msra.mxu0 0.0
      %1396 = vmatprep.subr.mxu0 0.0
      %1397 = vmatpush1.msra.mxu0 0.0
      %1398 = vmatprep.subr.mxu0 0.0
      %1399 = vmatpush1.msra.mxu0 0.0
      %1400 = vmatprep.subr.mxu0 0.0
      %1401 = vmatpush1.msra.mxu0 0.0
      %1402 = vmatprep.subr.mxu0 0.0
      %1403 = vmatpush1.msra.mxu0 0.0
      %1404 = vmatprep.subr.mxu0 0.0
      %1405 = vmatpush1.msra.mxu0 0.0
      %1406 = vmatprep.subr.mxu0 0.0
      %1407 = vmatpush1.msra.mxu0 0.0
      %1408 = vmatprep.subr.mxu0 0.0
      %1409 = vmatpush1.msra.mxu0 0.0
      %1410 = vmatprep.mubr.f32.mxu0 0.0
      %1411 = vmatmul.mubr.f32.gmra.mrb[0].mxu0 %v1329
      %v1412 = vpop.f32.mrb[0].mxu0
      %v1413 = vadd.f32 0.0, %v1412
      %v1414 = vpop.f32.mrb[0].mxu0
      %v1415 = vadd.f32 0.0, %v1414
      %1416 = vdwg.mxu0
      %1417 = vmatprep.subr.mxu0 %v253
      %1418 = vmatpush1.msra.mxu0 %v252
      %1419 = vmatprep.subr.mxu0 %v1341
      %1420 = vmatpush1.msra.mxu0 %v1338
      %1421 = vmatprep.subr.mxu0 0.0
      %1422 = vmatpush1.msra.mxu0 0.0
      %1423 = vmatprep.subr.mxu0 0.0
      %1424 = vmatpush1.msra.mxu0 0.0
      %1425 = vmatprep.subr.mxu0 0.0
      %1426 = vmatpush1.msra.mxu0 0.0
      %1427 = vmatprep.subr.mxu0 0.0
      %1428 = vmatpush1.msra.mxu0 0.0
      %1429 = vmatprep.subr.mxu0 0.0
      %1430 = vmatpush1.msra.mxu0 0.0
      %1431 = vmatprep.subr.mxu0 0.0
      %1432 = vmatpush1.msra.mxu0 0.0
      %1433 = vmatprep.subr.mxu0 0.0
      %1434 = vmatpush1.msra.mxu0 0.0
      %1435 = vmatprep.subr.mxu0 0.0
      %1436 = vmatpush1.msra.mxu0 0.0
      %1437 = vmatprep.subr.mxu0 0.0
      %1438 = vmatpush1.msra.mxu0 0.0
      %1439 = vmatprep.subr.mxu0 0.0
      %1440 = vmatpush1.msra.mxu0 0.0
      %1441 = vmatprep.subr.mxu0 0.0
      %1442 = vmatpush1.msra.mxu0 0.0
      %1443 = vmatprep.subr.mxu0 0.0
      %1444 = vmatpush1.msra.mxu0 0.0
      %1445 = vmatprep.subr.mxu0 0.0
      %1446 = vmatpush1.msra.mxu0 0.0
      %1447 = vmatprep.subr.mxu0 0.0
      %1448 = vmatpush1.msra.mxu0 0.0
      %1449 = vmatprep.subr.mxu0 0.0
      %1450 = vmatpush1.msra.mxu0 0.0
      %1451 = vmatprep.subr.mxu0 0.0
      %1452 = vmatpush1.msra.mxu0 0.0
      %1453 = vmatprep.subr.mxu0 0.0
      %1454 = vmatpush1.msra.mxu0 0.0
      %1455 = vmatprep.subr.mxu0 0.0
      %1456 = vmatpush1.msra.mxu0 0.0
      %1457 = vmatprep.subr.mxu0 0.0
      %1458 = vmatpush1.msra.mxu0 0.0
      %1459 = vmatprep.subr.mxu0 0.0
      %1460 = vmatpush1.msra.mxu0 0.0
      %1461 = vmatprep.subr.mxu0 0.0
      %1462 = vmatpush1.msra.mxu0 0.0
      %1463 = vmatprep.subr.mxu0 0.0
      %1464 = vmatpush1.msra.mxu0 0.0
      %1465 = vmatprep.subr.mxu0 0.0
      %1466 = vmatpush1.msra.mxu0 0.0
      %1467 = vmatprep.subr.mxu0 0.0
      %1468 = vmatpush1.msra.mxu0 0.0
      %1469 = vmatprep.subr.mxu0 0.0
      %1470 = vmatpush1.msra.mxu0 0.0
      %1471 = vmatprep.subr.mxu0 0.0
      %1472 = vmatpush1.msra.mxu0 0.0
      %1473 = vmatprep.subr.mxu0 0.0
      %1474 = vmatpush1.msra.mxu0 0.0
      %1475 = vmatprep.subr.mxu0 0.0
      %1476 = vmatpush1.msra.mxu0 0.0
      %1477 = vmatprep.subr.mxu0 0.0
      %1478 = vmatpush1.msra.mxu0 0.0
      %1479 = vmatprep.subr.mxu0 0.0
      %1480 = vmatpush1.msra.mxu0 0.0
      %1481 = vmatprep.mubr.f32.mxu0 0.0
      %1482 = vmatmul.mubr.f32.gmra.mrb[0].mxu0 %v1329
      %v1483 = vpop.f32.mrb[0].mxu0
      %v1484 = vadd.f32 0.0, %v1483
      %v1485 = vpop.f32.mrb[0].mxu0
      %v1486 = vadd.f32 0.0, %v1485
      %1487 = vdwg.mxu0
      %1488 = vmatprep.subr.mxu0 0.0
      %1489 = vmatpush1.msra.mxu0 %v254
      %1490 = vmatprep.subr.mxu0 0.0
      %1491 = vmatpush1.msra.mxu0 %v1344
      %1492 = vmatprep.subr.mxu0 0.0
      %1493 = vmatpush1.msra.mxu0 0.0
      %1494 = vmatprep.subr.mxu0 0.0
      %1495 = vmatpush1.msra.mxu0 0.0
      %1496 = vmatprep.subr.mxu0 0.0
      %1497 = vmatpush1.msra.mxu0 0.0
      %1498 = vmatprep.subr.mxu0 0.0
      %1499 = vmatpush1.msra.mxu0 0.0
      %1500 = vmatprep.subr.mxu0 0.0
      %1501 = vmatpush1.msra.mxu0 0.0
      %1502 = vmatprep.subr.mxu0 0.0
      %1503 = vmatpush1.msra.mxu0 0.0
      %1504 = vmatprep.subr.mxu0 0.0
      %1505 = vmatpush1.msra.mxu0 0.0
      %1506 = vmatprep.subr.mxu0 0.0
      %1507 = vmatpush1.msra.mxu0 0.0
      %1508 = vmatprep.subr.mxu0 0.0
      %1509 = vmatpush1.msra.mxu0 0.0
      %1510 = vmatprep.subr.mxu0 0.0
      %1511 = vmatpush1.msra.mxu0 0.0
      %1512 = vmatprep.subr.mxu0 0.0
      %1513 = vmatpush1.msra.mxu0 0.0
      %1514 = vmatprep.subr.mxu0 0.0
      %1515 = vmatpush1.msra.mxu0 0.0
      %1516 = vmatprep.subr.mxu0 0.0
      %1517 = vmatpush1.msra.mxu0 0.0
      %1518 = vmatprep.subr.mxu0 0.0
      %1519 = vmatpush1.msra.mxu0 0.0
      %1520 = vmatprep.subr.mxu0 0.0
      %1521 = vmatpush1.msra.mxu0 0.0
      %1522 = vmatprep.subr.mxu0 0.0
      %1523 = vmatpush1.msra.mxu0 0.0
      %1524 = vmatprep.subr.mxu0 0.0
      %1525 = vmatpush1.msra.mxu0 0.0
      %1526 = vmatprep.subr.mxu0 0.0
      %1527 = vmatpush1.msra.mxu0 0.0
      %1528 = vmatprep.subr.mxu0 0.0
      %1529 = vmatpush1.msra.mxu0 0.0
      %1530 = vmatprep.subr.mxu0 0.0
      %1531 = vmatpush1.msra.mxu0 0.0
      %1532 = vmatprep.subr.mxu0 0.0
      %1533 = vmatpush1.msra.mxu0 0.0
      %1534 = vmatprep.subr.mxu0 0.0
      %1535 = vmatpush1.msra.mxu0 0.0
      %1536 = vmatprep.subr.mxu0 0.0
      %1537 = vmatpush1.msra.mxu0 0.0
      %1538 = vmatprep.subr.mxu0 0.0
      %1539 = vmatpush1.msra.mxu0 0.0
      %1540 = vmatprep.subr.mxu0 0.0
      %1541 = vmatpush1.msra.mxu0 0.0
      %1542 = vmatprep.subr.mxu0 0.0
      %1543 = vmatpush1.msra.mxu0 0.0
      %1544 = vmatprep.subr.mxu0 0.0
      %1545 = vmatpush1.msra.mxu0 0.0
      %1546 = vmatprep.subr.mxu0 0.0
      %1547 = vmatpush1.msra.mxu0 0.0
      %1548 = vmatprep.subr.mxu0 0.0
      %1549 = vmatpush1.msra.mxu0 0.0
      %1550 = vmatprep.subr.mxu0 0.0
      %1551 = vmatpush1.msra.mxu0 0.0
      %1552 = vmatprep.mubr.f32.mxu0 0.0
      %1553 = vmatmul.mubr.f32.gmra.mrb[0].mxu0 %v1329
      %v1554 = vpop.f32.mrb[0].mxu0
      %v1555 = vadd.f32 0.0, %v1554
      %v1556 = vpop.f32.mrb[0].mxu0
      %1557 = vdwg.mxu0
      %v1558 = vadd.f32 %v1321, %v1413
      %v1559 = vadd.f32 %v1322, %v1415
      %v1560 = vadd.f32 %v1323, %v1484
      %v1561 = vadd.f32 %v1324, %v1486
      %v1562 = vadd.f32 %v1325, %v1555
      %1563 = vrot.lane.b32.xlu0 %v250, 127
      %v1564 = vpop.permute.xlu0 %1563
      %1565 = vrot.lane.b32.xlu0 %v255, 127
      %v1566 = vpop.permute.xlu0 %1565
      %1567 = vrot.lane.b32.xlu0 %v251, 127
      %v1568 = vpop.permute.xlu0 %1567
      %1569 = vrot.lane.b32.xlu0 %v256, 127
      %v1570 = vpop.permute.xlu0 %1569
      %1571 = vrot.lane.b32.xlu0 %v252, 127
      %v1572 = vpop.permute.xlu0 %1571
      %1573 = vrot.lane.b32.xlu0 %v257, 127
      %v1574 = vpop.permute.xlu0 %1573
      %1575 = vrot.lane.b32.xlu0 %v253, 127
      %v1576 = vpop.permute.xlu0 %1575
      %1577 = vrot.lane.b32.xlu0 %v258, 127
      %v1578 = vpop.permute.xlu0 %1577
      %1579 = vrot.lane.b32.xlu0 %v254, 127
      %v1580 = vpop.permute.xlu0 %1579
      %1581 = vrot.lane.b32.xlu0 %v259, 127
      %v1582 = vpop.permute.xlu0 %1581
      %vm1583 = vcmp.lt.s32.totalorder %v282, 127
      %v1584 = vsel %vm1583, %v1576, %v1580
      %v1585 = vsel %vm1583, %v1578, %v1582
      %v1586 = vsel %vm1583, %v1572, %v1576
      %v1587 = vsel %vm1583, %v1574, %v1578
      %v1588 = vsel %vm1583, %v1568, %v1572
      %v1589 = vsel %vm1583, %v1570, %v1574
      %v1590 = vsel %vm1583, %v1564, %v1568
      %v1591 = vsel %vm1583, %v1566, %v1570
      %v1592 = vsel %vm1583, %v1580, %v1564
      %v1593 = vsel %vm1583, %v1582, %v1566
      %s1594 = scalar_lea.vmem %s1, 40
      %v1595 = vld [vmem:[%s1594] sm:$0xff]
      %v1597 = vsel %vm328, %v1595, 0
      %v1600 = vsel %vm332, %v1591, 0
      %v1603 = vsel %vm332, %v1589, 0
      %v1606 = vsel %vm332, %v1587, 0
      %v1609 = vsel %vm332, %v1585, 0
      %v1612 = vsel %vm332, %v1593, 0
      %1614 = vmatprep.subr.mxu0 %v1588
      %1615 = vmatpush1.msra.mxu0 %v1590
      %1616 = vmatprep.subr.mxu0 %v1603
      %1617 = vmatpush1.msra.mxu0 %v1600
      %1618 = vmatprep.subr.mxu0 0.0
      %1619 = vmatpush1.msra.mxu0 0.0
      %1620 = vmatprep.subr.mxu0 0.0
      %1621 = vmatpush1.msra.mxu0 0.0
      %1622 = vmatprep.subr.mxu0 0.0
      %1623 = vmatpush1.msra.mxu0 0.0
      %1624 = vmatprep.subr.mxu0 0.0
      %1625 = vmatpush1.msra.mxu0 0.0
      %1626 = vmatprep.subr.mxu0 0.0
      %1627 = vmatpush1.msra.mxu0 0.0
      %1628 = vmatprep.subr.mxu0 0.0
      %1629 = vmatpush1.msra.mxu0 0.0
      %1630 = vmatprep.subr.mxu0 0.0
      %1631 = vmatpush1.msra.mxu0 0.0
      %1632 = vmatprep.subr.mxu0 0.0
      %1633 = vmatpush1.msra.mxu0 0.0
      %1634 = vmatprep.subr.mxu0 0.0
      %1635 = vmatpush1.msra.mxu0 0.0
      %1636 = vmatprep.subr.mxu0 0.0
      %1637 = vmatpush1.msra.mxu0 0.0
      %1638 = vmatprep.subr.mxu0 0.0
      %1639 = vmatpush1.msra.mxu0 0.0
      %1640 = vmatprep.subr.mxu0 0.0
      %1641 = vmatpush1.msra.mxu0 0.0
      %1642 = vmatprep.subr.mxu0 0.0
      %1643 = vmatpush1.msra.mxu0 0.0
      %1644 = vmatprep.subr.mxu0 0.0
      %1645 = vmatpush1.msra.mxu0 0.0
      %1646 = vmatprep.subr.mxu0 0.0
      %1647 = vmatpush1.msra.mxu0 0.0
      %1648 = vmatprep.subr.mxu0 0.0
      %1649 = vmatpush1.msra.mxu0 0.0
      %1650 = vmatprep.subr.mxu0 0.0
      %1651 = vmatpush1.msra.mxu0 0.0
      %1652 = vmatprep.subr.mxu0 0.0
      %1653 = vmatpush1.msra.mxu0 0.0
      %1654 = vmatprep.subr.mxu0 0.0
      %1655 = vmatpush1.msra.mxu0 0.0
      %1656 = vmatprep.subr.mxu0 0.0
      %1657 = vmatpush1.msra.mxu0 0.0
      %1658 = vmatprep.subr.mxu0 0.0
      %1659 = vmatpush1.msra.mxu0 0.0
      %1660 = vmatprep.subr.mxu0 0.0
      %1661 = vmatpush1.msra.mxu0 0.0
      %1662 = vmatprep.subr.mxu0 0.0
      %1663 = vmatpush1.msra.mxu0 0.0
      %1664 = vmatprep.subr.mxu0 0.0
      %1665 = vmatpush1.msra.mxu0 0.0
      %1666 = vmatprep.subr.mxu0 0.0
      %1667 = vmatpush1.msra.mxu0 0.0
      %1668 = vmatprep.subr.mxu0 0.0
      %1669 = vmatpush1.msra.mxu0 0.0
      %1670 = vmatprep.subr.mxu0 0.0
      %1671 = vmatpush1.msra.mxu0 0.0
      %1672 = vmatprep.subr.mxu0 0.0
      %1673 = vmatpush1.msra.mxu0 0.0
      %1674 = vmatprep.subr.mxu0 0.0
      %1675 = vmatpush1.msra.mxu0 0.0
      %1676 = vmatprep.subr.mxu0 0.0
      %1677 = vmatpush1.msra.mxu0 0.0
      %1678 = vmatprep.mubr.f32.mxu0 0.0
      %1679 = vmatmul.mubr.f32.gmra.mrb[0].mxu0 %v1597
      %v1680 = vpop.f32.mrb[0].mxu0
      %v1681 = vadd.f32 0.0, %v1680
      %v1682 = vpop.f32.mrb[0].mxu0
      %v1683 = vadd.f32 0.0, %v1682
      %1684 = vdwg.mxu0
      %1685 = vmatprep.subr.mxu0 %v1584
      %1686 = vmatpush1.msra.mxu0 %v1586
      %1687 = vmatprep.subr.mxu0 %v1609
      %1688 = vmatpush1.msra.mxu0 %v1606
      %1689 = vmatprep.subr.mxu0 0.0
      %1690 = vmatpush1.msra.mxu0 0.0
      %1691 = vmatprep.subr.mxu0 0.0
      %1692 = vmatpush1.msra.mxu0 0.0
      %1693 = vmatprep.subr.mxu0 0.0
      %1694 = vmatpush1.msra.mxu0 0.0
      %1695 = vmatprep.subr.mxu0 0.0
      %1696 = vmatpush1.msra.mxu0 0.0
      %1697 = vmatprep.subr.mxu0 0.0
      %1698 = vmatpush1.msra.mxu0 0.0
      %1699 = vmatprep.subr.mxu0 0.0
      %1700 = vmatpush1.msra.mxu0 0.0
      %1701 = vmatprep.subr.mxu0 0.0
      %1702 = vmatpush1.msra.mxu0 0.0
      %1703 = vmatprep.subr.mxu0 0.0
      %1704 = vmatpush1.msra.mxu0 0.0
      %1705 = vmatprep.subr.mxu0 0.0
      %1706 = vmatpush1.msra.mxu0 0.0
      %1707 = vmatprep.subr.mxu0 0.0
      %1708 = vmatpush1.msra.mxu0 0.0
      %1709 = vmatprep.subr.mxu0 0.0
      %1710 = vmatpush1.msra.mxu0 0.0
      %1711 = vmatprep.subr.mxu0 0.0
      %1712 = vmatpush1.msra.mxu0 0.0
      %1713 = vmatprep.subr.mxu0 0.0
      %1714 = vmatpush1.msra.mxu0 0.0
      %1715 = vmatprep.subr.mxu0 0.0
      %1716 = vmatpush1.msra.mxu0 0.0
      %1717 = vmatprep.subr.mxu0 0.0
      %1718 = vmatpush1.msra.mxu0 0.0
      %1719 = vmatprep.subr.mxu0 0.0
      %1720 = vmatpush1.msra.mxu0 0.0
      %1721 = vmatprep.subr.mxu0 0.0
      %1722 = vmatpush1.msra.mxu0 0.0
      %1723 = vmatprep.subr.mxu0 0.0
      %1724 = vmatpush1.msra.mxu0 0.0
      %1725 = vmatprep.subr.mxu0 0.0
      %1726 = vmatpush1.msra.mxu0 0.0
      %1727 = vmatprep.subr.mxu0 0.0
      %1728 = vmatpush1.msra.mxu0 0.0
      %1729 = vmatprep.subr.mxu0 0.0
      %1730 = vmatpush1.msra.mxu0 0.0
      %1731 = vmatprep.subr.mxu0 0.0
      %1732 = vmatpush1.msra.mxu0 0.0
      %1733 = vmatprep.subr.mxu0 0.0
      %1734 = vmatpush1.msra.mxu0 0.0
      %1735 = vmatprep.subr.mxu0 0.0
      %1736 = vmatpush1.msra.mxu0 0.0
      %1737 = vmatprep.subr.mxu0 0.0
      %1738 = vmatpush1.msra.mxu0 0.0
      %1739 = vmatprep.subr.mxu0 0.0
      %1740 = vmatpush1.msra.mxu0 0.0
      %1741 = vmatprep.subr.mxu0 0.0
      %1742 = vmatpush1.msra.mxu0 0.0
      %1743 = vmatprep.subr.mxu0 0.0
      %1744 = vmatpush1.msra.mxu0 0.0
      %1745 = vmatprep.subr.mxu0 0.0
      %1746 = vmatpush1.msra.mxu0 0.0
      %1747 = vmatprep.subr.mxu0 0.0
      %1748 = vmatpush1.msra.mxu0 0.0
      %1749 = vmatprep.mubr.f32.mxu0 0.0
      %1750 = vmatmul.mubr.f32.gmra.mrb[0].mxu0 %v1597
      %v1751 = vpop.f32.mrb[0].mxu0
      %v1752 = vadd.f32 0.0, %v1751
      %v1753 = vpop.f32.mrb[0].mxu0
      %v1754 = vadd.f32 0.0, %v1753
      %1755 = vdwg.mxu0
      %1756 = vmatprep.subr.mxu0 0.0
      %1757 = vmatpush1.msra.mxu0 %v1592
      %1758 = vmatprep.subr.mxu0 0.0
      %1759 = vmatpush1.msra.mxu0 %v1612
      %1760 = vmatprep.subr.mxu0 0.0
      %1761 = vmatpush1.msra.mxu0 0.0
      %1762 = vmatprep.subr.mxu0 0.0
      %1763 = vmatpush1.msra.mxu0 0.0
      %1764 = vmatprep.subr.mxu0 0.0
      %1765 = vmatpush1.msra.mxu0 0.0
      %1766 = vmatprep.subr.mxu0 0.0
      %1767 = vmatpush1.msra.mxu0 0.0
      %1768 = vmatprep.subr.mxu0 0.0
      %1769 = vmatpush1.msra.mxu0 0.0
      %1770 = vmatprep.subr.mxu0 0.0
      %1771 = vmatpush1.msra.mxu0 0.0
      %1772 = vmatprep.subr.mxu0 0.0
      %1773 = vmatpush1.msra.mxu0 0.0
      %1774 = vmatprep.subr.mxu0 0.0
      %1775 = vmatpush1.msra.mxu0 0.0
      %1776 = vmatprep.subr.mxu0 0.0
      %1777 = vmatpush1.msra.mxu0 0.0
      %1778 = vmatprep.subr.mxu0 0.0
      %1779 = vmatpush1.msra.mxu0 0.0
      %1780 = vmatprep.subr.mxu0 0.0
      %1781 = vmatpush1.msra.mxu0 0.0
      %1782 = vmatprep.subr.mxu0 0.0
      %1783 = vmatpush1.msra.mxu0 0.0
      %1784 = vmatprep.subr.mxu0 0.0
      %1785 = vmatpush1.msra.mxu0 0.0
      %1786 = vmatprep.subr.mxu0 0.0
      %1787 = vmatpush1.msra.mxu0 0.0
      %1788 = vmatprep.subr.mxu0 0.0
      %1789 = vmatpush1.msra.mxu0 0.0
      %1790 = vmatprep.subr.mxu0 0.0
      %1791 = vmatpush1.msra.mxu0 0.0
      %1792 = vmatprep.subr.mxu0 0.0
      %1793 = vmatpush1.msra.mxu0 0.0
      %1794 = vmatprep.subr.mxu0 0.0
      %1795 = vmatpush1.msra.mxu0 0.0
      %1796 = vmatprep.subr.mxu0 0.0
      %1797 = vmatpush1.msra.mxu0 0.0
      %1798 = vmatprep.subr.mxu0 0.0
      %1799 = vmatpush1.msra.mxu0 0.0
      %1800 = vmatprep.subr.mxu0 0.0
      %1801 = vmatpush1.msra.mxu0 0.0
      %1802 = vmatprep.subr.mxu0 0.0
      %1803 = vmatpush1.msra.mxu0 0.0
      %1804 = vmatprep.subr.mxu0 0.0
      %1805 = vmatpush1.msra.mxu0 0.0
      %1806 = vmatprep.subr.mxu0 0.0
      %1807 = vmatpush1.msra.mxu0 0.0
      %1808 = vmatprep.subr.mxu0 0.0
      %1809 = vmatpush1.msra.mxu0 0.0
      %1810 = vmatprep.subr.mxu0 0.0
      %1811 = vmatpush1.msra.mxu0 0.0
      %1812 = vmatprep.subr.mxu0 0.0
      %1813 = vmatpush1.msra.mxu0 0.0
      %1814 = vmatprep.subr.mxu0 0.0
      %1815 = vmatpush1.msra.mxu0 0.0
      %1816 = vmatprep.subr.mxu0 0.0
      %1817 = vmatpush1.msra.mxu0 0.0
      %1818 = vmatprep.subr.mxu0 0.0
      %1819 = vmatpush1.msra.mxu0 0.0
      %1820 = vmatprep.mubr.f32.mxu0 0.0
      %1821 = vmatmul.mubr.f32.gmra.mrb[0].mxu0 %v1597
      %v1822 = vpop.f32.mrb[0].mxu0
      %v1823 = vadd.f32 0.0, %v1822
      %v1824 = vpop.f32.mrb[0].mxu0
      %1825 = vdwg.mxu0
      %v1826 = vadd.f32 %v1558, %v1681
      %v1827 = vadd.f32 %v1559, %v1683
      %v1828 = vadd.f32 %v1560, %v1752
      %v1829 = vadd.f32 %v1561, %v1754
      %v1830 = vadd.f32 %v1562, %v1823
      %1831 = vrot.lane.b32.xlu0 %v250, 95
      %v1832 = vpop.permute.xlu0 %1831
      %1833 = vrot.lane.b32.xlu0 %v255, 95
      %v1834 = vpop.permute.xlu0 %1833
      %1835 = vrot.lane.b32.xlu0 %v251, 95
      %v1836 = vpop.permute.xlu0 %1835
      %1837 = vrot.lane.b32.xlu0 %v256, 95
      %v1838 = vpop.permute.xlu0 %1837
      %1839 = vrot.lane.b32.xlu0 %v252, 95
      %v1840 = vpop.permute.xlu0 %1839
      %1841 = vrot.lane.b32.xlu0 %v257, 95
      %v1842 = vpop.permute.xlu0 %1841
      %1843 = vrot.lane.b32.xlu0 %v253, 95
      %v1844 = vpop.permute.xlu0 %1843
      %1845 = vrot.lane.b32.xlu0 %v258, 95
      %v1846 = vpop.permute.xlu0 %1845
      %1847 = vrot.lane.b32.xlu0 %v254, 95
      %v1848 = vpop.permute.xlu0 %1847
      %1849 = vrot.lane.b32.xlu0 %v259, 95
      %v1850 = vpop.permute.xlu0 %1849
      %vm1851 = vcmp.lt.s32.totalorder %v282, 95
      %v1852 = vsel %vm1851, %v1844, %v1848
      %v1853 = vsel %vm1851, %v1846, %v1850
      %v1854 = vsel %vm1851, %v1840, %v1844
      %v1855 = vsel %vm1851, %v1842, %v1846
      %v1856 = vsel %vm1851, %v1836, %v1840
      %v1857 = vsel %vm1851, %v1838, %v1842
      %v1858 = vsel %vm1851, %v1832, %v1836
      %v1859 = vsel %vm1851, %v1834, %v1838
      %v1860 = vsel %vm1851, %v1848, %v1832
      %v1861 = vsel %vm1851, %v1850, %v1834
      %s1862 = scalar_lea.vmem %s1, 48
      %v1863 = vld [vmem:[%s1862] sm:$0xff]
      %v1865 = vsel %vm328, %v1863, 0
      %v1868 = vsel %vm332, %v1859, 0
      %v1871 = vsel %vm332, %v1857, 0
      %v1874 = vsel %vm332, %v1855, 0
      %v1877 = vsel %vm332, %v1853, 0
      %v1880 = vsel %vm332, %v1861, 0
      %1882 = vmatprep.subr.mxu0 %v1856
      %1883 = vmatpush1.msra.mxu0 %v1858
      %1884 = vmatprep.subr.mxu0 %v1871
      %1885 = vmatpush1.msra.mxu0 %v1868
      %1886 = vmatprep.subr.mxu0 0.0
      %1887 = vmatpush1.msra.mxu0 0.0
      %1888 = vmatprep.subr.mxu0 0.0
      %1889 = vmatpush1.msra.mxu0 0.0
      %1890 = vmatprep.subr.mxu0 0.0
      %1891 = vmatpush1.msra.mxu0 0.0
      %1892 = vmatprep.subr.mxu0 0.0
      %1893 = vmatpush1.msra.mxu0 0.0
      %1894 = vmatprep.subr.mxu0 0.0
      %1895 = vmatpush1.msra.mxu0 0.0
      %1896 = vmatprep.subr.mxu0 0.0
      %1897 = vmatpush1.msra.mxu0 0.0
      %1898 = vmatprep.subr.mxu0 0.0
      %1899 = vmatpush1.msra.mxu0 0.0
      %1900 = vmatprep.subr.mxu0 0.0
      %1901 = vmatpush1.msra.mxu0 0.0
      %1902 = vmatprep.subr.mxu0 0.0
      %1903 = vmatpush1.msra.mxu0 0.0
      %1904 = vmatprep.subr.mxu0 0.0
      %1905 = vmatpush1.msra.mxu0 0.0
      %1906 = vmatprep.subr.mxu0 0.0
      %1907 = vmatpush1.msra.mxu0 0.0
      %1908 = vmatprep.subr.mxu0 0.0
      %1909 = vmatpush1.msra.mxu0 0.0
      %1910 = vmatprep.subr.mxu0 0.0
      %1911 = vmatpush1.msra.mxu0 0.0
      %1912 = vmatprep.subr.mxu0 0.0
      %1913 = vmatpush1.msra.mxu0 0.0
      %1914 = vmatprep.subr.mxu0 0.0
      %1915 = vmatpush1.msra.mxu0 0.0
      %1916 = vmatprep.subr.mxu0 0.0
      %1917 = vmatpush1.msra.mxu0 0.0
      %1918 = vmatprep.subr.mxu0 0.0
      %1919 = vmatpush1.msra.mxu0 0.0
      %1920 = vmatprep.subr.mxu0 0.0
      %1921 = vmatpush1.msra.mxu0 0.0
      %1922 = vmatprep.subr.mxu0 0.0
      %1923 = vmatpush1.msra.mxu0 0.0
      %1924 = vmatprep.subr.mxu0 0.0
      %1925 = vmatpush1.msra.mxu0 0.0
      %1926 = vmatprep.subr.mxu0 0.0
      %1927 = vmatpush1.msra.mxu0 0.0
      %1928 = vmatprep.subr.mxu0 0.0
      %1929 = vmatpush1.msra.mxu0 0.0
      %1930 = vmatprep.subr.mxu0 0.0
      %1931 = vmatpush1.msra.mxu0 0.0
      %1932 = vmatprep.subr.mxu0 0.0
      %1933 = vmatpush1.msra.mxu0 0.0
      %1934 = vmatprep.subr.mxu0 0.0
      %1935 = vmatpush1.msra.mxu0 0.0
      %1936 = vmatprep.subr.mxu0 0.0
      %1937 = vmatpush1.msra.mxu0 0.0
      %1938 = vmatprep.subr.mxu0 0.0
      %1939 = vmatpush1.msra.mxu0 0.0
      %1940 = vmatprep.subr.mxu0 0.0
      %1941 = vmatpush1.msra.mxu0 0.0
      %1942 = vmatprep.subr.mxu0 0.0
      %1943 = vmatpush1.msra.mxu0 0.0
      %1944 = vmatprep.subr.mxu0 0.0
      %1945 = vmatpush1.msra.mxu0 0.0
      %1946 = vmatprep.mubr.f32.mxu0 0.0
      %1947 = vmatmul.mubr.f32.gmra.mrb[0].mxu0 %v1865
      %v1948 = vpop.f32.mrb[0].mxu0
      %v1949 = vadd.f32 0.0, %v1948
      %v1950 = vpop.f32.mrb[0].mxu0
      %v1951 = vadd.f32 0.0, %v1950
      %1952 = vdwg.mxu0
      %1953 = vmatprep.subr.mxu0 %v1852
      %1954 = vmatpush1.msra.mxu0 %v1854
      %1955 = vmatprep.subr.mxu0 %v1877
      %1956 = vmatpush1.msra.mxu0 %v1874
      %1957 = vmatprep.subr.mxu0 0.0
      %1958 = vmatpush1.msra.mxu0 0.0
      %1959 = vmatprep.subr.mxu0 0.0
      %1960 = vmatpush1.msra.mxu0 0.0
      %1961 = vmatprep.subr.mxu0 0.0
      %1962 = vmatpush1.msra.mxu0 0.0
      %1963 = vmatprep.subr.mxu0 0.0
      %1964 = vmatpush1.msra.mxu0 0.0
      %1965 = vmatprep.subr.mxu0 0.0
      %1966 = vmatpush1.msra.mxu0 0.0
      %1967 = vmatprep.subr.mxu0 0.0
      %1968 = vmatpush1.msra.mxu0 0.0
      %1969 = vmatprep.subr.mxu0 0.0
      %1970 = vmatpush1.msra.mxu0 0.0
      %1971 = vmatprep.subr.mxu0 0.0
      %1972 = vmatpush1.msra.mxu0 0.0
      %1973 = vmatprep.subr.mxu0 0.0
      %1974 = vmatpush1.msra.mxu0 0.0
      %1975 = vmatprep.subr.mxu0 0.0
      %1976 = vmatpush1.msra.mxu0 0.0
      %1977 = vmatprep.subr.mxu0 0.0
      %1978 = vmatpush1.msra.mxu0 0.0
      %1979 = vmatprep.subr.mxu0 0.0
      %1980 = vmatpush1.msra.mxu0 0.0
      %1981 = vmatprep.subr.mxu0 0.0
      %1982 = vmatpush1.msra.mxu0 0.0
      %1983 = vmatprep.subr.mxu0 0.0
      %1984 = vmatpush1.msra.mxu0 0.0
      %1985 = vmatprep.subr.mxu0 0.0
      %1986 = vmatpush1.msra.mxu0 0.0
      %1987 = vmatprep.subr.mxu0 0.0
      %1988 = vmatpush1.msra.mxu0 0.0
      %1989 = vmatprep.subr.mxu0 0.0
      %1990 = vmatpush1.msra.mxu0 0.0
      %1991 = vmatprep.subr.mxu0 0.0
      %1992 = vmatpush1.msra.mxu0 0.0
      %1993 = vmatprep.subr.mxu0 0.0
      %1994 = vmatpush1.msra.mxu0 0.0
      %1995 = vmatprep.subr.mxu0 0.0
      %1996 = vmatpush1.msra.mxu0 0.0
      %1997 = vmatprep.subr.mxu0 0.0
      %1998 = vmatpush1.msra.mxu0 0.0
      %1999 = vmatprep.subr.mxu0 0.0
      %2000 = vmatpush1.msra.mxu0 0.0
      %2001 = vmatprep.subr.mxu0 0.0
      %2002 = vmatpush1.msra.mxu0 0.0
      %2003 = vmatprep.subr.mxu0 0.0
      %2004 = vmatpush1.msra.mxu0 0.0
      %2005 = vmatprep.subr.mxu0 0.0
      %2006 = vmatpush1.msra.mxu0 0.0
      %2007 = vmatprep.subr.mxu0 0.0
      %2008 = vmatpush1.msra.mxu0 0.0
      %2009 = vmatprep.subr.mxu0 0.0
      %2010 = vmatpush1.msra.mxu0 0.0
      %2011 = vmatprep.subr.mxu0 0.0
      %2012 = vmatpush1.msra.mxu0 0.0
      %2013 = vmatprep.subr.mxu0 0.0
      %2014 = vmatpush1.msra.mxu0 0.0
      %2015 = vmatprep.subr.mxu0 0.0
      %2016 = vmatpush1.msra.mxu0 0.0
      %2017 = vmatprep.mubr.f32.mxu0 0.0
      %2018 = vmatmul.mubr.f32.gmra.mrb[0].mxu0 %v1865
      %v2019 = vpop.f32.mrb[0].mxu0
      %v2020 = vadd.f32 0.0, %v2019
      %v2021 = vpop.f32.mrb[0].mxu0
      %v2022 = vadd.f32 0.0, %v2021
      %2023 = vdwg.mxu0
      %2024 = vmatprep.subr.mxu0 0.0
      %2025 = vmatpush1.msra.mxu0 %v1860
      %2026 = vmatprep.subr.mxu0 0.0
      %2027 = vmatpush1.msra.mxu0 %v1880
      %2028 = vmatprep.subr.mxu0 0.0
      %2029 = vmatpush1.msra.mxu0 0.0
      %2030 = vmatprep.subr.mxu0 0.0
      %2031 = vmatpush1.msra.mxu0 0.0
      %2032 = vmatprep.subr.mxu0 0.0
      %2033 = vmatpush1.msra.mxu0 0.0
      %2034 = vmatprep.subr.mxu0 0.0
      %2035 = vmatpush1.msra.mxu0 0.0
      %2036 = vmatprep.subr.mxu0 0.0
      %2037 = vmatpush1.msra.mxu0 0.0
      %2038 = vmatprep.subr.mxu0 0.0
      %2039 = vmatpush1.msra.mxu0 0.0
      %2040 = vmatprep.subr.mxu0 0.0
      %2041 = vmatpush1.msra.mxu0 0.0
      %2042 = vmatprep.subr.mxu0 0.0
      %2043 = vmatpush1.msra.mxu0 0.0
      %2044 = vmatprep.subr.mxu0 0.0
      %2045 = vmatpush1.msra.mxu0 0.0
      %2046 = vmatprep.subr.mxu0 0.0
      %2047 = vmatpush1.msra.mxu0 0.0
      %2048 = vmatprep.subr.mxu0 0.0
      %2049 = vmatpush1.msra.mxu0 0.0
      %2050 = vmatprep.subr.mxu0 0.0
      %2051 = vmatpush1.msra.mxu0 0.0
      %2052 = vmatprep.subr.mxu0 0.0
      %2053 = vmatpush1.msra.mxu0 0.0
      %2054 = vmatprep.subr.mxu0 0.0
      %2055 = vmatpush1.msra.mxu0 0.0
      %2056 = vmatprep.subr.mxu0 0.0
      %2057 = vmatpush1.msra.mxu0 0.0
      %2058 = vmatprep.subr.mxu0 0.0
      %2059 = vmatpush1.msra.mxu0 0.0
      %2060 = vmatprep.subr.mxu0 0.0
      %2061 = vmatpush1.msra.mxu0 0.0
      %2062 = vmatprep.subr.mxu0 0.0
      %2063 = vmatpush1.msra.mxu0 0.0
      %2064 = vmatprep.subr.mxu0 0.0
      %2065 = vmatpush1.msra.mxu0 0.0
      %2066 = vmatprep.subr.mxu0 0.0
      %2067 = vmatpush1.msra.mxu0 0.0
      %2068 = vmatprep.subr.mxu0 0.0
      %2069 = vmatpush1.msra.mxu0 0.0
      %2070 = vmatprep.subr.mxu0 0.0
      %2071 = vmatpush1.msra.mxu0 0.0
      %2072 = vmatprep.subr.mxu0 0.0
      %2073 = vmatpush1.msra.mxu0 0.0
      %2074 = vmatprep.subr.mxu0 0.0
      %2075 = vmatpush1.msra.mxu0 0.0
      %2076 = vmatprep.subr.mxu0 0.0
      %2077 = vmatpush1.msra.mxu0 0.0
      %2078 = vmatprep.subr.mxu0 0.0
      %2079 = vmatpush1.msra.mxu0 0.0
      %2080 = vmatprep.subr.mxu0 0.0
      %2081 = vmatpush1.msra.mxu0 0.0
      %2082 = vmatprep.subr.mxu0 0.0
      %2083 = vmatpush1.msra.mxu0 0.0
      %2084 = vmatprep.subr.mxu0 0.0
      %2085 = vmatpush1.msra.mxu0 0.0
      %2086 = vmatprep.subr.mxu0 0.0
      %2087 = vmatpush1.msra.mxu0 0.0
      %2088 = vmatprep.mubr.f32.mxu0 0.0
      %2089 = vmatmul.mubr.f32.gmra.mrb[0].mxu0 %v1865
      %v2090 = vpop.f32.mrb[0].mxu0
      %v2091 = vadd.f32 0.0, %v2090
      %v2092 = vpop.f32.mrb[0].mxu0
      %2093 = vdwg.mxu0
      %v2094 = vadd.f32 %v1826, %v1949
      %v2095 = vadd.f32 %v1827, %v1951
      %v2096 = vadd.f32 %v1828, %v2020
      %v2097 = vadd.f32 %v1829, %v2022
      %v2098 = vadd.f32 %v1830, %v2091
      %2099 = vrot.lane.b32.xlu0 %v250, 94
      %v2100 = vpop.permute.xlu0 %2099
      %2101 = vrot.lane.b32.xlu0 %v255, 94
      %v2102 = vpop.permute.xlu0 %2101
      %2103 = vrot.lane.b32.xlu0 %v251, 94
      %v2104 = vpop.permute.xlu0 %2103
      %2105 = vrot.lane.b32.xlu0 %v256, 94
      %v2106 = vpop.permute.xlu0 %2105
      %2107 = vrot.lane.b32.xlu0 %v252, 94
      %v2108 = vpop.permute.xlu0 %2107
      %2109 = vrot.lane.b32.xlu0 %v257, 94
      %v2110 = vpop.permute.xlu0 %2109
      %2111 = vrot.lane.b32.xlu0 %v253, 94
      %v2112 = vpop.permute.xlu0 %2111
      %2113 = vrot.lane.b32.xlu0 %v258, 94
      %v2114 = vpop.permute.xlu0 %2113
      %2115 = vrot.lane.b32.xlu0 %v254, 94
      %v2116 = vpop.permute.xlu0 %2115
      %2117 = vrot.lane.b32.xlu0 %v259, 94
      %v2118 = vpop.permute.xlu0 %2117
      %vm2119 = vcmp.lt.s32.totalorder %v282, 94
      %v2120 = vsel %vm2119, %v2112, %v2116
      %v2121 = vsel %vm2119, %v2114, %v2118
      %v2122 = vsel %vm2119, %v2108, %v2112
      %v2123 = vsel %vm2119, %v2110, %v2114
      %v2124 = vsel %vm2119, %v2104, %v2108
      %v2125 = vsel %vm2119, %v2106, %v2110
      %v2126 = vsel %vm2119, %v2100, %v2104
      %v2127 = vsel %vm2119, %v2102, %v2106
      %v2128 = vsel %vm2119, %v2116, %v2100
      %v2129 = vsel %vm2119, %v2118, %v2102
      %s2130 = scalar_lea.vmem %s1, 56
      %v2131 = vld [vmem:[%s2130] sm:$0xff]
      %v2133 = vsel %vm328, %v2131, 0
      %v2136 = vsel %vm332, %v2127, 0
      %v2139 = vsel %vm332, %v2125, 0
      %v2142 = vsel %vm332, %v2123, 0
      %v2145 = vsel %vm332, %v2121, 0
      %v2148 = vsel %vm332, %v2129, 0
      %2150 = vmatprep.subr.mxu0 %v2124
      %2151 = vmatpush1.msra.mxu0 %v2126
      %2152 = vmatprep.subr.mxu0 %v2139
      %2153 = vmatpush1.msra.mxu0 %v2136
      %2154 = vmatprep.subr.mxu0 0.0
      %2155 = vmatpush1.msra.mxu0 0.0
      %2156 = vmatprep.subr.mxu0 0.0
      %2157 = vmatpush1.msra.mxu0 0.0
      %2158 = vmatprep.subr.mxu0 0.0
      %2159 = vmatpush1.msra.mxu0 0.0
      %2160 = vmatprep.subr.mxu0 0.0
      %2161 = vmatpush1.msra.mxu0 0.0
      %2162 = vmatprep.subr.mxu0 0.0
      %2163 = vmatpush1.msra.mxu0 0.0
      %2164 = vmatprep.subr.mxu0 0.0
      %2165 = vmatpush1.msra.mxu0 0.0
      %2166 = vmatprep.subr.mxu0 0.0
      %2167 = vmatpush1.msra.mxu0 0.0
      %2168 = vmatprep.subr.mxu0 0.0
      %2169 = vmatpush1.msra.mxu0 0.0
      %2170 = vmatprep.subr.mxu0 0.0
      %2171 = vmatpush1.msra.mxu0 0.0
      %2172 = vmatprep.subr.mxu0 0.0
      %2173 = vmatpush1.msra.mxu0 0.0
      %2174 = vmatprep.subr.mxu0 0.0
      %2175 = vmatpush1.msra.mxu0 0.0
      %2176 = vmatprep.subr.mxu0 0.0
      %2177 = vmatpush1.msra.mxu0 0.0
      %2178 = vmatprep.subr.mxu0 0.0
      %2179 = vmatpush1.msra.mxu0 0.0
      %2180 = vmatprep.subr.mxu0 0.0
      %2181 = vmatpush1.msra.mxu0 0.0
      %2182 = vmatprep.subr.mxu0 0.0
      %2183 = vmatpush1.msra.mxu0 0.0
      %2184 = vmatprep.subr.mxu0 0.0
      %2185 = vmatpush1.msra.mxu0 0.0
      %2186 = vmatprep.subr.mxu0 0.0
      %2187 = vmatpush1.msra.mxu0 0.0
      %2188 = vmatprep.subr.mxu0 0.0
      %2189 = vmatpush1.msra.mxu0 0.0
      %2190 = vmatprep.subr.mxu0 0.0
      %2191 = vmatpush1.msra.mxu0 0.0
      %2192 = vmatprep.subr.mxu0 0.0
      %2193 = vmatpush1.msra.mxu0 0.0
      %2194 = vmatprep.subr.mxu0 0.0
      %2195 = vmatpush1.msra.mxu0 0.0
      %2196 = vmatprep.subr.mxu0 0.0
      %2197 = vmatpush1.msra.mxu0 0.0
      %2198 = vmatprep.subr.mxu0 0.0
      %2199 = vmatpush1.msra.mxu0 0.0
      %2200 = vmatprep.subr.mxu0 0.0
      %2201 = vmatpush1.msra.mxu0 0.0
      %2202 = vmatprep.subr.mxu0 0.0
      %2203 = vmatpush1.msra.mxu0 0.0
      %2204 = vmatprep.subr.mxu0 0.0
      %2205 = vmatpush1.msra.mxu0 0.0
      %2206 = vmatprep.subr.mxu0 0.0
      %2207 = vmatpush1.msra.mxu0 0.0
      %2208 = vmatprep.subr.mxu0 0.0
      %2209 = vmatpush1.msra.mxu0 0.0
      %2210 = vmatprep.subr.mxu0 0.0
      %2211 = vmatpush1.msra.mxu0 0.0
      %2212 = vmatprep.subr.mxu0 0.0
      %2213 = vmatpush1.msra.mxu0 0.0
      %2214 = vmatprep.mubr.f32.mxu0 0.0
      %2215 = vmatmul.mubr.f32.gmra.mrb[0].mxu0 %v2133
      %v2216 = vpop.f32.mrb[0].mxu0
      %v2217 = vadd.f32 0.0, %v2216
      %v2218 = vpop.f32.mrb[0].mxu0
      %v2219 = vadd.f32 0.0, %v2218
      %2220 = vdwg.mxu0
      %2221 = vmatprep.subr.mxu0 %v2120
      %2222 = vmatpush1.msra.mxu0 %v2122
      %2223 = vmatprep.subr.mxu0 %v2145
      %2224 = vmatpush1.msra.mxu0 %v2142
      %2225 = vmatprep.subr.mxu0 0.0
      %2226 = vmatpush1.msra.mxu0 0.0
      %2227 = vmatprep.subr.mxu0 0.0
      %2228 = vmatpush1.msra.mxu0 0.0
      %2229 = vmatprep.subr.mxu0 0.0
      %2230 = vmatpush1.msra.mxu0 0.0
      %2231 = vmatprep.subr.mxu0 0.0
      %2232 = vmatpush1.msra.mxu0 0.0
      %2233 = vmatprep.subr.mxu0 0.0
      %2234 = vmatpush1.msra.mxu0 0.0
      %2235 = vmatprep.subr.mxu0 0.0
      %2236 = vmatpush1.msra.mxu0 0.0
      %2237 = vmatprep.subr.mxu0 0.0
      %2238 = vmatpush1.msra.mxu0 0.0
      %2239 = vmatprep.subr.mxu0 0.0
      %2240 = vmatpush1.msra.mxu0 0.0
      %2241 = vmatprep.subr.mxu0 0.0
      %2242 = vmatpush1.msra.mxu0 0.0
      %2243 = vmatprep.subr.mxu0 0.0
      %2244 = vmatpush1.msra.mxu0 0.0
      %2245 = vmatprep.subr.mxu0 0.0
      %2246 = vmatpush1.msra.mxu0 0.0
      %2247 = vmatprep.subr.mxu0 0.0
      %2248 = vmatpush1.msra.mxu0 0.0
      %2249 = vmatprep.subr.mxu0 0.0
      %2250 = vmatpush1.msra.mxu0 0.0
      %2251 = vmatprep.subr.mxu0 0.0
      %2252 = vmatpush1.msra.mxu0 0.0
      %2253 = vmatprep.subr.mxu0 0.0
      %2254 = vmatpush1.msra.mxu0 0.0
      %2255 = vmatprep.subr.mxu0 0.0
      %2256 = vmatpush1.msra.mxu0 0.0
      %2257 = vmatprep.subr.mxu0 0.0
      %2258 = vmatpush1.msra.mxu0 0.0
      %2259 = vmatprep.subr.mxu0 0.0
      %2260 = vmatpush1.msra.mxu0 0.0
      %2261 = vmatprep.subr.mxu0 0.0
      %2262 = vmatpush1.msra.mxu0 0.0
      %2263 = vmatprep.subr.mxu0 0.0
      %2264 = vmatpush1.msra.mxu0 0.0
      %2265 = vmatprep.subr.mxu0 0.0
      %2266 = vmatpush1.msra.mxu0 0.0
      %2267 = vmatprep.subr.mxu0 0.0
      %2268 = vmatpush1.msra.mxu0 0.0
      %2269 = vmatprep.subr.mxu0 0.0
      %2270 = vmatpush1.msra.mxu0 0.0
      %2271 = vmatprep.subr.mxu0 0.0
      %2272 = vmatpush1.msra.mxu0 0.0
      %2273 = vmatprep.subr.mxu0 0.0
      %2274 = vmatpush1.msra.mxu0 0.0
      %2275 = vmatprep.subr.mxu0 0.0
      %2276 = vmatpush1.msra.mxu0 0.0
      %2277 = vmatprep.subr.mxu0 0.0
      %2278 = vmatpush1.msra.mxu0 0.0
      %2279 = vmatprep.subr.mxu0 0.0
      %2280 = vmatpush1.msra.mxu0 0.0
      %2281 = vmatprep.subr.mxu0 0.0
      %2282 = vmatpush1.msra.mxu0 0.0
      %2283 = vmatprep.subr.mxu0 0.0
      %2284 = vmatpush1.msra.mxu0 0.0
      %2285 = vmatprep.mubr.f32.mxu0 0.0
      %2286 = vmatmul.mubr.f32.gmra.mrb[0].mxu0 %v2133
      %v2287 = vpop.f32.mrb[0].mxu0
      %v2288 = vadd.f32 0.0, %v2287
      %v2289 = vpop.f32.mrb[0].mxu0
      %v2290 = vadd.f32 0.0, %v2289
      %2291 = vdwg.mxu0
      %2292 = vmatprep.subr.mxu0 0.0
      %2293 = vmatpush1.msra.mxu0 %v2128
      %2294 = vmatprep.subr.mxu0 0.0
      %2295 = vmatpush1.msra.mxu0 %v2148
      %2296 = vmatprep.subr.mxu0 0.0
      %2297 = vmatpush1.msra.mxu0 0.0
      %2298 = vmatprep.subr.mxu0 0.0
      %2299 = vmatpush1.msra.mxu0 0.0
      %2300 = vmatprep.subr.mxu0 0.0
      %2301 = vmatpush1.msra.mxu0 0.0
      %2302 = vmatprep.subr.mxu0 0.0
      %2303 = vmatpush1.msra.mxu0 0.0
      %2304 = vmatprep.subr.mxu0 0.0
      %2305 = vmatpush1.msra.mxu0 0.0
      %2306 = vmatprep.subr.mxu0 0.0
      %2307 = vmatpush1.msra.mxu0 0.0
      %2308 = vmatprep.subr.mxu0 0.0
      %2309 = vmatpush1.msra.mxu0 0.0
      %2310 = vmatprep.subr.mxu0 0.0
      %2311 = vmatpush1.msra.mxu0 0.0
      %2312 = vmatprep.subr.mxu0 0.0
      %2313 = vmatpush1.msra.mxu0 0.0
      %2314 = vmatprep.subr.mxu0 0.0
      %2315 = vmatpush1.msra.mxu0 0.0
      %2316 = vmatprep.subr.mxu0 0.0
      %2317 = vmatpush1.msra.mxu0 0.0
      %2318 = vmatprep.subr.mxu0 0.0
      %2319 = vmatpush1.msra.mxu0 0.0
      %2320 = vmatprep.subr.mxu0 0.0
      %2321 = vmatpush1.msra.mxu0 0.0
      %2322 = vmatprep.subr.mxu0 0.0
      %2323 = vmatpush1.msra.mxu0 0.0
      %2324 = vmatprep.subr.mxu0 0.0
      %2325 = vmatpush1.msra.mxu0 0.0
      %2326 = vmatprep.subr.mxu0 0.0
      %2327 = vmatpush1.msra.mxu0 0.0
      %2328 = vmatprep.subr.mxu0 0.0
      %2329 = vmatpush1.msra.mxu0 0.0
      %2330 = vmatprep.subr.mxu0 0.0
      %2331 = vmatpush1.msra.mxu0 0.0
      %2332 = vmatprep.subr.mxu0 0.0
      %2333 = vmatpush1.msra.mxu0 0.0
      %2334 = vmatprep.subr.mxu0 0.0
      %2335 = vmatpush1.msra.mxu0 0.0
      %2336 = vmatprep.subr.mxu0 0.0
      %2337 = vmatpush1.msra.mxu0 0.0
      %2338 = vmatprep.subr.mxu0 0.0
      %2339 = vmatpush1.msra.mxu0 0.0
      %2340 = vmatprep.subr.mxu0 0.0
      %2341 = vmatpush1.msra.mxu0 0.0
      %2342 = vmatprep.subr.mxu0 0.0
      %2343 = vmatpush1.msra.mxu0 0.0
      %2344 = vmatprep.subr.mxu0 0.0
      %2345 = vmatpush1.msra.mxu0 0.0
      %2346 = vmatprep.subr.mxu0 0.0
      %2347 = vmatpush1.msra.mxu0 0.0
      %2348 = vmatprep.subr.mxu0 0.0
      %2349 = vmatpush1.msra.mxu0 0.0
      %2350 = vmatprep.subr.mxu0 0.0
      %2351 = vmatpush1.msra.mxu0 0.0
      %2352 = vmatprep.subr.mxu0 0.0
      %2353 = vmatpush1.msra.mxu0 0.0
      %2354 = vmatprep.subr.mxu0 0.0
      %2355 = vmatpush1.msra.mxu0 0.0
      %2356 = vmatprep.mubr.f32.mxu0 0.0
      %2357 = vmatmul.mubr.f32.gmra.mrb[0].mxu0 %v2133
      %v2358 = vpop.f32.mrb[0].mxu0
      %v2359 = vadd.f32 0.0, %v2358
      %v2360 = vpop.f32.mrb[0].mxu0
      %2361 = vdwg.mxu0
      %v2362 = vadd.f32 %v2094, %v2217
      %v2363 = vadd.f32 %v2095, %v2219
      %v2364 = vadd.f32 %v2096, %v2288
      %v2365 = vadd.f32 %v2097, %v2290
      %v2366 = vadd.f32 %v2098, %v2359
      %2367 = vrot.lane.b32.xlu0 %v250, 93
      %v2368 = vpop.permute.xlu0 %2367
      %2369 = vrot.lane.b32.xlu0 %v255, 93
      %v2370 = vpop.permute.xlu0 %2369
      %2371 = vrot.lane.b32.xlu0 %v251, 93
      %v2372 = vpop.permute.xlu0 %2371
      %2373 = vrot.lane.b32.xlu0 %v256, 93
      %v2374 = vpop.permute.xlu0 %2373
      %2375 = vrot.lane.b32.xlu0 %v252, 93
      %v2376 = vpop.permute.xlu0 %2375
      %2377 = vrot.lane.b32.xlu0 %v257, 93
      %v2378 = vpop.permute.xlu0 %2377
      %2379 = vrot.lane.b32.xlu0 %v253, 93
      %v2380 = vpop.permute.xlu0 %2379
      %2381 = vrot.lane.b32.xlu0 %v258, 93
      %v2382 = vpop.permute.xlu0 %2381
      %2383 = vrot.lane.b32.xlu0 %v254, 93
      %v2384 = vpop.permute.xlu0 %2383
      %2385 = vrot.lane.b32.xlu0 %v259, 93
      %v2386 = vpop.permute.xlu0 %2385
      %vm2387 = vcmp.lt.s32.totalorder %v282, 93
      %v2388 = vsel %vm2387, %v2380, %v2384
      %v2389 = vsel %vm2387, %v2382, %v2386
      %v2390 = vsel %vm2387, %v2376, %v2380
      %v2391 = vsel %vm2387, %v2378, %v2382
      %v2392 = vsel %vm2387, %v2372, %v2376
      %v2393 = vsel %vm2387, %v2374, %v2378
      %v2394 = vsel %vm2387, %v2368, %v2372
      %v2395 = vsel %vm2387, %v2370, %v2374
      %v2396 = vsel %vm2387, %v2384, %v2368
      %v2397 = vsel %vm2387, %v2386, %v2370
      %s2398 = scalar_lea.vmem %s1, 64
      %v2399 = vld [vmem:[%s2398] sm:$0xff]
      %v2401 = vsel %vm328, %v2399, 0
      %v2404 = vsel %vm332, %v2395, 0
      %v2407 = vsel %vm332, %v2393, 0
      %v2410 = vsel %vm332, %v2391, 0
      %v2413 = vsel %vm332, %v2389, 0
      %v2416 = vsel %vm332, %v2397, 0
      %2418 = vmatprep.subr.mxu0 %v2392
      %2419 = vmatpush1.msra.mxu0 %v2394
      %2420 = vmatprep.subr.mxu0 %v2407
      %2421 = vmatpush1.msra.mxu0 %v2404
      %2422 = vmatprep.subr.mxu0 0.0
      %2423 = vmatpush1.msra.mxu0 0.0
      %2424 = vmatprep.subr.mxu0 0.0
      %2425 = vmatpush1.msra.mxu0 0.0
      %2426 = vmatprep.subr.mxu0 0.0
      %2427 = vmatpush1.msra.mxu0 0.0
      %2428 = vmatprep.subr.mxu0 0.0
      %2429 = vmatpush1.msra.mxu0 0.0
      %2430 = vmatprep.subr.mxu0 0.0
      %2431 = vmatpush1.msra.mxu0 0.0
      %2432 = vmatprep.subr.mxu0 0.0
      %2433 = vmatpush1.msra.mxu0 0.0
      %2434 = vmatprep.subr.mxu0 0.0
      %2435 = vmatpush1.msra.mxu0 0.0
      %2436 = vmatprep.subr.mxu0 0.0
      %2437 = vmatpush1.msra.mxu0 0.0
      %2438 = vmatprep.subr.mxu0 0.0
      %2439 = vmatpush1.msra.mxu0 0.0
      %2440 = vmatprep.subr.mxu0 0.0
      %2441 = vmatpush1.msra.mxu0 0.0
      %2442 = vmatprep.subr.mxu0 0.0
      %2443 = vmatpush1.msra.mxu0 0.0
      %2444 = vmatprep.subr.mxu0 0.0
      %2445 = vmatpush1.msra.mxu0 0.0
      %2446 = vmatprep.subr.mxu0 0.0
      %2447 = vmatpush1.msra.mxu0 0.0
      %2448 = vmatprep.subr.mxu0 0.0
      %2449 = vmatpush1.msra.mxu0 0.0
      %2450 = vmatprep.subr.mxu0 0.0
      %2451 = vmatpush1.msra.mxu0 0.0
      %2452 = vmatprep.subr.mxu0 0.0
      %2453 = vmatpush1.msra.mxu0 0.0
      %2454 = vmatprep.subr.mxu0 0.0
      %2455 = vmatpush1.msra.mxu0 0.0
      %2456 = vmatprep.subr.mxu0 0.0
      %2457 = vmatpush1.msra.mxu0 0.0
      %2458 = vmatprep.subr.mxu0 0.0
      %2459 = vmatpush1.msra.mxu0 0.0
      %2460 = vmatprep.subr.mxu0 0.0
      %2461 = vmatpush1.msra.mxu0 0.0
      %2462 = vmatprep.subr.mxu0 0.0
      %2463 = vmatpush1.msra.mxu0 0.0
      %2464 = vmatprep.subr.mxu0 0.0
      %2465 = vmatpush1.msra.mxu0 0.0
      %2466 = vmatprep.subr.mxu0 0.0
      %2467 = vmatpush1.msra.mxu0 0.0
      %2468 = vmatprep.subr.mxu0 0.0
      %2469 = vmatpush1.msra.mxu0 0.0
      %2470 = vmatprep.subr.mxu0 0.0
      %2471 = vmatpush1.msra.mxu0 0.0
      %2472 = vmatprep.subr.mxu0 0.0
      %2473 = vmatpush1.msra.mxu0 0.0
      %2474 = vmatprep.subr.mxu0 0.0
      %2475 = vmatpush1.msra.mxu0 0.0
      %2476 = vmatprep.subr.mxu0 0.0
      %2477 = vmatpush1.msra.mxu0 0.0
      %2478 = vmatprep.subr.mxu0 0.0
      %2479 = vmatpush1.msra.mxu0 0.0
      %2480 = vmatprep.subr.mxu0 0.0
      %2481 = vmatpush1.msra.mxu0 0.0
      %2482 = vmatprep.mubr.f32.mxu0 0.0
      %2483 = vmatmul.mubr.f32.gmra.mrb[0].mxu0 %v2401
      %v2484 = vpop.f32.mrb[0].mxu0
      %v2485 = vadd.f32 0.0, %v2484
      %v2486 = vpop.f32.mrb[0].mxu0
      %v2487 = vadd.f32 0.0, %v2486
      %2488 = vdwg.mxu0
      %2489 = vmatprep.subr.mxu0 %v2388
      %2490 = vmatpush1.msra.mxu0 %v2390
      %2491 = vmatprep.subr.mxu0 %v2413
      %2492 = vmatpush1.msra.mxu0 %v2410
      %2493 = vmatprep.subr.mxu0 0.0
      %2494 = vmatpush1.msra.mxu0 0.0
      %2495 = vmatprep.subr.mxu0 0.0
      %2496 = vmatpush1.msra.mxu0 0.0
      %2497 = vmatprep.subr.mxu0 0.0
      %2498 = vmatpush1.msra.mxu0 0.0
      %2499 = vmatprep.subr.mxu0 0.0
      %2500 = vmatpush1.msra.mxu0 0.0
      %2501 = vmatprep.subr.mxu0 0.0
      %2502 = vmatpush1.msra.mxu0 0.0
      %2503 = vmatprep.subr.mxu0 0.0
      %2504 = vmatpush1.msra.mxu0 0.0
      %2505 = vmatprep.subr.mxu0 0.0
      %2506 = vmatpush1.msra.mxu0 0.0
      %2507 = vmatprep.subr.mxu0 0.0
      %2508 = vmatpush1.msra.mxu0 0.0
      %2509 = vmatprep.subr.mxu0 0.0
      %2510 = vmatpush1.msra.mxu0 0.0
      %2511 = vmatprep.subr.mxu0 0.0
      %2512 = vmatpush1.msra.mxu0 0.0
      %2513 = vmatprep.subr.mxu0 0.0
      %2514 = vmatpush1.msra.mxu0 0.0
      %2515 = vmatprep.subr.mxu0 0.0
      %2516 = vmatpush1.msra.mxu0 0.0
      %2517 = vmatprep.subr.mxu0 0.0
      %2518 = vmatpush1.msra.mxu0 0.0
      %2519 = vmatprep.subr.mxu0 0.0
      %2520 = vmatpush1.msra.mxu0 0.0
      %2521 = vmatprep.subr.mxu0 0.0
      %2522 = vmatpush1.msra.mxu0 0.0
      %2523 = vmatprep.subr.mxu0 0.0
      %2524 = vmatpush1.msra.mxu0 0.0
      %2525 = vmatprep.subr.mxu0 0.0
      %2526 = vmatpush1.msra.mxu0 0.0
      %2527 = vmatprep.subr.mxu0 0.0
      %2528 = vmatpush1.msra.mxu0 0.0
      %2529 = vmatprep.subr.mxu0 0.0
      %2530 = vmatpush1.msra.mxu0 0.0
      %2531 = vmatprep.subr.mxu0 0.0
      %2532 = vmatpush1.msra.mxu0 0.0
      %2533 = vmatprep.subr.mxu0 0.0
      %2534 = vmatpush1.msra.mxu0 0.0
      %2535 = vmatprep.subr.mxu0 0.0
      %2536 = vmatpush1.msra.mxu0 0.0
      %2537 = vmatprep.subr.mxu0 0.0
      %2538 = vmatpush1.msra.mxu0 0.0
      %2539 = vmatprep.subr.mxu0 0.0
      %2540 = vmatpush1.msra.mxu0 0.0
      %2541 = vmatprep.subr.mxu0 0.0
      %2542 = vmatpush1.msra.mxu0 0.0
      %2543 = vmatprep.subr.mxu0 0.0
      %2544 = vmatpush1.msra.mxu0 0.0
      %2545 = vmatprep.subr.mxu0 0.0
      %2546 = vmatpush1.msra.mxu0 0.0
      %2547 = vmatprep.subr.mxu0 0.0
      %2548 = vmatpush1.msra.mxu0 0.0
      %2549 = vmatprep.subr.mxu0 0.0
      %2550 = vmatpush1.msra.mxu0 0.0
      %2551 = vmatprep.subr.mxu0 0.0
      %2552 = vmatpush1.msra.mxu0 0.0
      %2553 = vmatprep.mubr.f32.mxu0 0.0
      %2554 = vmatmul.mubr.f32.gmra.mrb[0].mxu0 %v2401
      %v2555 = vpop.f32.mrb[0].mxu0
      %v2556 = vadd.f32 0.0, %v2555
      %v2557 = vpop.f32.mrb[0].mxu0
      %v2558 = vadd.f32 0.0, %v2557
      %2559 = vdwg.mxu0
      %2560 = vmatprep.subr.mxu0 0.0
      %2561 = vmatpush1.msra.mxu0 %v2396
      %2562 = vmatprep.subr.mxu0 0.0
      %2563 = vmatpush1.msra.mxu0 %v2416
      %2564 = vmatprep.subr.mxu0 0.0
      %2565 = vmatpush1.msra.mxu0 0.0
      %2566 = vmatprep.subr.mxu0 0.0
      %2567 = vmatpush1.msra.mxu0 0.0
      %2568 = vmatprep.subr.mxu0 0.0
      %2569 = vmatpush1.msra.mxu0 0.0
      %2570 = vmatprep.subr.mxu0 0.0
      %2571 = vmatpush1.msra.mxu0 0.0
      %2572 = vmatprep.subr.mxu0 0.0
      %2573 = vmatpush1.msra.mxu0 0.0
      %2574 = vmatprep.subr.mxu0 0.0
      %2575 = vmatpush1.msra.mxu0 0.0
      %2576 = vmatprep.subr.mxu0 0.0
      %2577 = vmatpush1.msra.mxu0 0.0
      %2578 = vmatprep.subr.mxu0 0.0
      %2579 = vmatpush1.msra.mxu0 0.0
      %2580 = vmatprep.subr.mxu0 0.0
      %2581 = vmatpush1.msra.mxu0 0.0
      %2582 = vmatprep.subr.mxu0 0.0
      %2583 = vmatpush1.msra.mxu0 0.0
      %2584 = vmatprep.subr.mxu0 0.0
      %2585 = vmatpush1.msra.mxu0 0.0
      %2586 = vmatprep.subr.mxu0 0.0
      %2587 = vmatpush1.msra.mxu0 0.0
      %2588 = vmatprep.subr.mxu0 0.0
      %2589 = vmatpush1.msra.mxu0 0.0
      %2590 = vmatprep.subr.mxu0 0.0
      %2591 = vmatpush1.msra.mxu0 0.0
      %2592 = vmatprep.subr.mxu0 0.0
      %2593 = vmatpush1.msra.mxu0 0.0
      %2594 = vmatprep.subr.mxu0 0.0
      %2595 = vmatpush1.msra.mxu0 0.0
      %2596 = vmatprep.subr.mxu0 0.0
      %2597 = vmatpush1.msra.mxu0 0.0
      %2598 = vmatprep.subr.mxu0 0.0
      %2599 = vmatpush1.msra.mxu0 0.0
      %2600 = vmatprep.subr.mxu0 0.0
      %2601 = vmatpush1.msra.mxu0 0.0
      %2602 = vmatprep.subr.mxu0 0.0
      %2603 = vmatpush1.msra.mxu0 0.0
      %2604 = vmatprep.subr.mxu0 0.0
      %2605 = vmatpush1.msra.mxu0 0.0
      %2606 = vmatprep.subr.mxu0 0.0
      %2607 = vmatpush1.msra.mxu0 0.0
      %2608 = vmatprep.subr.mxu0 0.0
      %2609 = vmatpush1.msra.mxu0 0.0
      %2610 = vmatprep.subr.mxu0 0.0
      %2611 = vmatpush1.msra.mxu0 0.0
      %2612 = vmatprep.subr.mxu0 0.0
      %2613 = vmatpush1.msra.mxu0 0.0
      %2614 = vmatprep.subr.mxu0 0.0
      %2615 = vmatpush1.msra.mxu0 0.0
      %2616 = vmatprep.subr.mxu0 0.0
      %2617 = vmatpush1.msra.mxu0 0.0
      %2618 = vmatprep.subr.mxu0 0.0
      %2619 = vmatpush1.msra.mxu0 0.0
      %2620 = vmatprep.subr.mxu0 0.0
      %2621 = vmatpush1.msra.mxu0 0.0
      %2622 = vmatprep.subr.mxu0 0.0
      %2623 = vmatpush1.msra.mxu0 0.0
      %2624 = vmatprep.mubr.f32.mxu0 0.0
      %2625 = vmatmul.mubr.f32.gmra.mrb[0].mxu0 %v2401
      %v2626 = vpop.f32.mrb[0].mxu0
      %v2627 = vadd.f32 0.0, %v2626
      %v2628 = vpop.f32.mrb[0].mxu0
      %2629 = vdwg.mxu0
      %v2630 = vadd.f32 %v2362, %v2485
      %v2631 = vadd.f32 %v2363, %v2487
      %v2632 = vadd.f32 %v2364, %v2556
      %v2633 = vadd.f32 %v2365, %v2558
      %v2634 = vadd.f32 %v2366, %v2627
      %v2635 = vld [vmem:[%s2] sm:$0xff]
      %2637 = vset.pattern.permute.xlu0 0
      %2638 = vperm.xlu0 %2637, %v2635
      %v2639 = vpop.permute.xlu0 %2638
      %v2641 = vadd.f32 %v2630, %v2639
      %v2642 = vadd.f32 %v2631, %v2639
      %v2643 = vadd.f32 %v2632, %v2639
      %v2644 = vadd.f32 %v2633, %v2639
      %v2645 = vadd.f32 %v2634, %v2639
      %v2646 = vmax.f32 %v2641, 0.0
      %v2647 = vmax.f32 %v2642, 0.0
      %v2648 = vmax.f32 %v2643, 0.0
      %v2649 = vmax.f32 %v2644, 0.0
      %v2650 = vmax.f32 %v2645, 0.0
      %v2652 = vlaneseq
      %v2653 = vshrl.u32 %v2652, 7
      %v2654 = vsub.s32 0, %v2653
      %v2655 = vrot.slane %v260, %v2654
      %v2656 = vlaneseq
      %v2657 = vshrl.u32 %v2656, 7
      %v2658 = vsub.s32 1, %v2657
      %v2659 = vrot.slane %v260, %v2658
      %v2660 = vlaneseq
      %v2661 = vshrl.u32 %v2660, 7
      %v2662 = vsub.s32 2, %v2661
      %v2663 = vrot.slane %v260, %v2662
      %v2664 = vlaneseq
      %v2665 = vshrl.u32 %v2664, 7
      %v2666 = vsub.s32 3, %v2665
      %v2667 = vrot.slane %v260, %v2666
      %v2668 = vlaneseq
      %v2669 = vshrl.u32 %v2668, 7
      %v2670 = vsub.s32 4, %v2669
      %v2671 = vrot.slane %v260, %v2670
      %v2677 = vmul.f32 %v2646, %v2655
      %v2678 = vmul.f32 %v2647, %v2659
      %v2679 = vmul.f32 %v2648, %v2663
      %v2680 = vmul.f32 %v2649, %v2667
      %v2681 = vmul.f32 %v2650, %v2671
      %2682 = vrot.lane.b32.xlu0 %v2677, 35
      %v2683 = vpop.permute.xlu0 %2682
      %2684 = vrot.lane.b32.xlu0 %v2678, 35
      %v2685 = vpop.permute.xlu0 %2684
      %2686 = vrot.lane.b32.xlu0 %v2679, 35
      %v2687 = vpop.permute.xlu0 %2686
      %2688 = vrot.lane.b32.xlu0 %v2680, 35
      %v2689 = vpop.permute.xlu0 %2688
      %2690 = vrot.lane.b32.xlu0 %v2681, 35
      %v2691 = vpop.permute.xlu0 %2690
      %v2692 = vsel %vm283, %v2689, %v2691
      %v2693 = vsel %vm283, %v2687, %v2689
      %v2694 = vsel %vm283, %v2685, %v2687
      %v2695 = vsel %vm283, %v2683, %v2685
      %v2696 = vsel %vm283, %v2691, %v2683
      %v2697 = vld [vmem:[%s3] sm:$0xf]
      %2698 = vrot.lane.b32.xlu0 %v2677, 34
      %v2699 = vpop.permute.xlu0 %2698
      %2700 = vrot.lane.b32.xlu0 %v2678, 34
      %v2701 = vpop.permute.xlu0 %2700
      %2702 = vrot.lane.b32.xlu0 %v2679, 34
      %v2703 = vpop.permute.xlu0 %2702
      %2704 = vrot.lane.b32.xlu0 %v2680, 34
      %v2705 = vpop.permute.xlu0 %2704
      %2706 = vrot.lane.b32.xlu0 %v2681, 34
      %v2707 = vpop.permute.xlu0 %2706
      %v2708 = vsel %vm315, %v2705, %v2707
      %v2709 = vsel %vm315, %v2703, %v2705
      %v2710 = vsel %vm315, %v2701, %v2703
      %v2711 = vsel %vm315, %v2699, %v2701
      %v2712 = vsel %vm315, %v2707, %v2699
      %s2713 = scalar_lea.vmem %s3, 4
      %v2714 = vld [vmem:[%s2713] sm:$0xf]
      %vm2715 = vcmask 64512
      %v2717 = vsel %vm2715, %v2714, 0
      %2719 = vmatprep.subr.mxu0 %v2711
      %2720 = vmatpush1.msra.mxu0 %v2712
      %2721 = vmatprep.subr.mxu0 0.0
      %2722 = vmatpush1.msra.mxu0 0.0
      %2723 = vmatprep.subr.mxu0 0.0
      %2724 = vmatpush1.msra.mxu0 0.0
      %2725 = vmatprep.subr.mxu0 0.0
      %2726 = vmatpush1.msra.mxu0 0.0
      %2727 = vmatprep.subr.mxu0 0.0
      %2728 = vmatpush1.msra.mxu0 0.0
      %2729 = vmatprep.subr.mxu0 0.0
      %2730 = vmatpush1.msra.mxu0 0.0
      %2731 = vmatprep.subr.mxu0 0.0
      %2732 = vmatpush1.msra.mxu0 0.0
      %2733 = vmatprep.subr.mxu0 0.0
      %2734 = vmatpush1.msra.mxu0 0.0
      %2735 = vmatprep.subr.mxu0 0.0
      %2736 = vmatpush1.msra.mxu0 0.0
      %2737 = vmatprep.subr.mxu0 0.0
      %2738 = vmatpush1.msra.mxu0 0.0
      %2739 = vmatprep.subr.mxu0 0.0
      %2740 = vmatpush1.msra.mxu0 0.0
      %2741 = vmatprep.subr.mxu0 0.0
      %2742 = vmatpush1.msra.mxu0 0.0
      %2743 = vmatprep.subr.mxu0 0.0
      %2744 = vmatpush1.msra.mxu0 0.0
      %2745 = vmatprep.subr.mxu0 0.0
      %2746 = vmatpush1.msra.mxu0 0.0
      %2747 = vmatprep.subr.mxu0 0.0
      %2748 = vmatpush1.msra.mxu0 0.0
      %2749 = vmatprep.subr.mxu0 0.0
      %2750 = vmatpush1.msra.mxu0 0.0
      %2751 = vmatprep.subr.mxu0 0.0
      %2752 = vmatpush1.msra.mxu0 0.0
      %2753 = vmatprep.subr.mxu0 0.0
      %2754 = vmatpush1.msra.mxu0 0.0
      %2755 = vmatprep.subr.mxu0 0.0
      %2756 = vmatpush1.msra.mxu0 0.0
      %2757 = vmatprep.subr.mxu0 0.0
      %2758 = vmatpush1.msra.mxu0 0.0
      %2759 = vmatprep.subr.mxu0 0.0
      %2760 = vmatpush1.msra.mxu0 0.0
      %2761 = vmatprep.subr.mxu0 0.0
      %2762 = vmatpush1.msra.mxu0 0.0
      %2763 = vmatprep.subr.mxu0 0.0
      %2764 = vmatpush1.msra.mxu0 0.0
      %2765 = vmatprep.subr.mxu0 0.0
      %2766 = vmatpush1.msra.mxu0 0.0
      %2767 = vmatprep.subr.mxu0 0.0
      %2768 = vmatpush1.msra.mxu0 0.0
      %2769 = vmatprep.subr.mxu0 0.0
      %2770 = vmatpush1.msra.mxu0 0.0
      %2771 = vmatprep.subr.mxu0 0.0
      %2772 = vmatpush1.msra.mxu0 0.0
      %2773 = vmatprep.subr.mxu0 0.0
      %2774 = vmatpush1.msra.mxu0 0.0
      %2775 = vmatprep.subr.mxu0 0.0
      %2776 = vmatpush1.msra.mxu0 0.0
      %2777 = vmatprep.subr.mxu0 0.0
      %2778 = vmatpush1.msra.mxu0 0.0
      %2779 = vmatprep.subr.mxu0 0.0
      %2780 = vmatpush1.msra.mxu0 0.0
      %2781 = vmatprep.subr.mxu0 0.0
      %2782 = vmatpush1.msra.mxu0 0.0
      %2783 = vmatprep.mubr.f32.mxu0 0.0
      %2784 = vmatmul.mubr.f32.gmra.mrb[0].mxu0 %v2717
      %v2785 = vpop.f32.mrb[0].mxu0
      %v2786 = vadd.f32 0.0, %v2785
      %v2787 = vpop.f32.mrb[0].mxu0
      %v2788 = vadd.f32 0.0, %v2787
      %2789 = vdwg.mxu0
      %2790 = vmatprep.subr.mxu0 %v2709
      %2791 = vmatpush1.msra.mxu0 %v2710
      %2792 = vmatprep.subr.mxu0 0.0
      %2793 = vmatpush1.msra.mxu0 0.0
      %2794 = vmatprep.subr.mxu0 0.0
      %2795 = vmatpush1.msra.mxu0 0.0
      %2796 = vmatprep.subr.mxu0 0.0
      %2797 = vmatpush1.msra.mxu0 0.0
      %2798 = vmatprep.subr.mxu0 0.0
      %2799 = vmatpush1.msra.mxu0 0.0
      %2800 = vmatprep.subr.mxu0 0.0
      %2801 = vmatpush1.msra.mxu0 0.0
      %2802 = vmatprep.subr.mxu0 0.0
      %2803 = vmatpush1.msra.mxu0 0.0
      %2804 = vmatprep.subr.mxu0 0.0
      %2805 = vmatpush1.msra.mxu0 0.0
      %2806 = vmatprep.subr.mxu0 0.0
      %2807 = vmatpush1.msra.mxu0 0.0
      %2808 = vmatprep.subr.mxu0 0.0
      %2809 = vmatpush1.msra.mxu0 0.0
      %2810 = vmatprep.subr.mxu0 0.0
      %2811 = vmatpush1.msra.mxu0 0.0
      %2812 = vmatprep.subr.mxu0 0.0
      %2813 = vmatpush1.msra.mxu0 0.0
      %2814 = vmatprep.subr.mxu0 0.0
      %2815 = vmatpush1.msra.mxu0 0.0
      %2816 = vmatprep.subr.mxu0 0.0
      %2817 = vmatpush1.msra.mxu0 0.0
      %2818 = vmatprep.subr.mxu0 0.0
      %2819 = vmatpush1.msra.mxu0 0.0
      %2820 = vmatprep.subr.mxu0 0.0
      %2821 = vmatpush1.msra.mxu0 0.0
      %2822 = vmatprep.subr.mxu0 0.0
      %2823 = vmatpush1.msra.mxu0 0.0
      %2824 = vmatprep.subr.mxu0 0.0
      %2825 = vmatpush1.msra.mxu0 0.0
      %2826 = vmatprep.subr.mxu0 0.0
      %2827 = vmatpush1.msra.mxu0 0.0
      %2828 = vmatprep.subr.mxu0 0.0
      %2829 = vmatpush1.msra.mxu0 0.0
      %2830 = vmatprep.subr.mxu0 0.0
      %2831 = vmatpush1.msra.mxu0 0.0
      %2832 = vmatprep.subr.mxu0 0.0
      %2833 = vmatpush1.msra.mxu0 0.0
      %2834 = vmatprep.subr.mxu0 0.0
      %2835 = vmatpush1.msra.mxu0 0.0
      %2836 = vmatprep.subr.mxu0 0.0
      %2837 = vmatpush1.msra.mxu0 0.0
      %2838 = vmatprep.subr.mxu0 0.0
      %2839 = vmatpush1.msra.mxu0 0.0
      %2840 = vmatprep.subr.mxu0 0.0
      %2841 = vmatpush1.msra.mxu0 0.0
      %2842 = vmatprep.subr.mxu0 0.0
      %2843 = vmatpush1.msra.mxu0 0.0
      %2844 = vmatprep.subr.mxu0 0.0
      %2845 = vmatpush1.msra.mxu0 0.0
      %2846 = vmatprep.subr.mxu0 0.0
      %2847 = vmatpush1.msra.mxu0 0.0
      %2848 = vmatprep.subr.mxu0 0.0
      %2849 = vmatpush1.msra.mxu0 0.0
      %2850 = vmatprep.subr.mxu0 0.0
      %2851 = vmatpush1.msra.mxu0 0.0
      %2852 = vmatprep.subr.mxu0 0.0
      %2853 = vmatpush1.msra.mxu0 0.0
      %2854 = vmatprep.mubr.f32.mxu0 0.0
      %2855 = vmatmul.mubr.f32.gmra.mrb[0].mxu0 %v2717
      %v2856 = vpop.f32.mrb[0].mxu0
      %v2857 = vadd.f32 0.0, %v2856
      %v2858 = vpop.f32.mrb[0].mxu0
      %v2859 = vadd.f32 0.0, %v2858
      %2860 = vdwg.mxu0
      %2861 = vmatprep.subr.mxu0 0.0
      %2862 = vmatpush1.msra.mxu0 %v2708
      %2863 = vmatprep.subr.mxu0 0.0
      %2864 = vmatpush1.msra.mxu0 0.0
      %2865 = vmatprep.subr.mxu0 0.0
      %2866 = vmatpush1.msra.mxu0 0.0
      %2867 = vmatprep.subr.mxu0 0.0
      %2868 = vmatpush1.msra.mxu0 0.0
      %2869 = vmatprep.subr.mxu0 0.0
      %2870 = vmatpush1.msra.mxu0 0.0
      %2871 = vmatprep.subr.mxu0 0.0
      %2872 = vmatpush1.msra.mxu0 0.0
      %2873 = vmatprep.subr.mxu0 0.0
      %2874 = vmatpush1.msra.mxu0 0.0
      %2875 = vmatprep.subr.mxu0 0.0
      %2876 = vmatpush1.msra.mxu0 0.0
      %2877 = vmatprep.subr.mxu0 0.0
      %2878 = vmatpush1.msra.mxu0 0.0
      %2879 = vmatprep.subr.mxu0 0.0
      %2880 = vmatpush1.msra.mxu0 0.0
      %2881 = vmatprep.subr.mxu0 0.0
      %2882 = vmatpush1.msra.mxu0 0.0
      %2883 = vmatprep.subr.mxu0 0.0
      %2884 = vmatpush1.msra.mxu0 0.0
      %2885 = vmatprep.subr.mxu0 0.0
      %2886 = vmatpush1.msra.mxu0 0.0
      %2887 = vmatprep.subr.mxu0 0.0
      %2888 = vmatpush1.msra.mxu0 0.0
      %2889 = vmatprep.subr.mxu0 0.0
      %2890 = vmatpush1.msra.mxu0 0.0
      %2891 = vmatprep.subr.mxu0 0.0
      %2892 = vmatpush1.msra.mxu0 0.0
      %2893 = vmatprep.subr.mxu0 0.0
      %2894 = vmatpush1.msra.mxu0 0.0
      %2895 = vmatprep.subr.mxu0 0.0
      %2896 = vmatpush1.msra.mxu0 0.0
      %2897 = vmatprep.subr.mxu0 0.0
      %2898 = vmatpush1.msra.mxu0 0.0
      %2899 = vmatprep.subr.mxu0 0.0
      %2900 = vmatpush1.msra.mxu0 0.0
      %2901 = vmatprep.subr.mxu0 0.0
      %2902 = vmatpush1.msra.mxu0 0.0
      %2903 = vmatprep.subr.mxu0 0.0
      %2904 = vmatpush1.msra.mxu0 0.0
      %2905 = vmatprep.subr.mxu0 0.0
      %2906 = vmatpush1.msra.mxu0 0.0
      %2907 = vmatprep.subr.mxu0 0.0
      %2908 = vmatpush1.msra.mxu0 0.0
      %2909 = vmatprep.subr.mxu0 0.0
      %2910 = vmatpush1.msra.mxu0 0.0
      %2911 = vmatprep.subr.mxu0 0.0
      %2912 = vmatpush1.msra.mxu0 0.0
      %2913 = vmatprep.subr.mxu0 0.0
      %2914 = vmatpush1.msra.mxu0 0.0
      %2915 = vmatprep.subr.mxu0 0.0
      %2916 = vmatpush1.msra.mxu0 0.0
      %2917 = vmatprep.subr.mxu0 0.0
      %2918 = vmatpush1.msra.mxu0 0.0
      %2919 = vmatprep.subr.mxu0 0.0
      %2920 = vmatpush1.msra.mxu0 0.0
      %2921 = vmatprep.subr.mxu0 0.0
      %2922 = vmatpush1.msra.mxu0 0.0
      %2923 = vmatprep.subr.mxu0 0.0
      %2924 = vmatpush1.msra.mxu0 0.0
      %2925 = vmatprep.mubr.f32.mxu0 0.0
      %2926 = vmatmul.mubr.f32.gmra.mrb[0].mxu0 %v2717
      %v2927 = vpop.f32.mrb[0].mxu0
      %v2928 = vadd.f32 0.0, %v2927
      %v2929 = vpop.f32.mrb[0].mxu0
      %2930 = vdwg.mxu0
      %v2932 = vsel %vm2715, %v2697, 0
      %2934 = vmatprep.subr.mxu0 %v2695
      %2935 = vmatpush1.msra.mxu0 %v2696
      %2936 = vmatprep.subr.mxu0 0.0
      %2937 = vmatpush1.msra.mxu0 0.0
      %2938 = vmatprep.subr.mxu0 0.0
      %2939 = vmatpush1.msra.mxu0 0.0
      %2940 = vmatprep.subr.mxu0 0.0
      %2941 = vmatpush1.msra.mxu0 0.0
      %2942 = vmatprep.subr.mxu0 0.0
      %2943 = vmatpush1.msra.mxu0 0.0
      %2944 = vmatprep.subr.mxu0 0.0
      %2945 = vmatpush1.msra.mxu0 0.0
      %2946 = vmatprep.subr.mxu0 0.0
      %2947 = vmatpush1.msra.mxu0 0.0
      %2948 = vmatprep.subr.mxu0 0.0
      %2949 = vmatpush1.msra.mxu0 0.0
      %2950 = vmatprep.subr.mxu0 0.0
      %2951 = vmatpush1.msra.mxu0 0.0
      %2952 = vmatprep.subr.mxu0 0.0
      %2953 = vmatpush1.msra.mxu0 0.0
      %2954 = vmatprep.subr.mxu0 0.0
      %2955 = vmatpush1.msra.mxu0 0.0
      %2956 = vmatprep.subr.mxu0 0.0
      %2957 = vmatpush1.msra.mxu0 0.0
      %2958 = vmatprep.subr.mxu0 0.0
      %2959 = vmatpush1.msra.mxu0 0.0
      %2960 = vmatprep.subr.mxu0 0.0
      %2961 = vmatpush1.msra.mxu0 0.0
      %2962 = vmatprep.subr.mxu0 0.0
      %2963 = vmatpush1.msra.mxu0 0.0
      %2964 = vmatprep.subr.mxu0 0.0
      %2965 = vmatpush1.msra.mxu0 0.0
      %2966 = vmatprep.subr.mxu0 0.0
      %2967 = vmatpush1.msra.mxu0 0.0
      %2968 = vmatprep.subr.mxu0 0.0
      %2969 = vmatpush1.msra.mxu0 0.0
      %2970 = vmatprep.subr.mxu0 0.0
      %2971 = vmatpush1.msra.mxu0 0.0
      %2972 = vmatprep.subr.mxu0 0.0
      %2973 = vmatpush1.msra.mxu0 0.0
      %2974 = vmatprep.subr.mxu0 0.0
      %2975 = vmatpush1.msra.mxu0 0.0
      %2976 = vmatprep.subr.mxu0 0.0
      %2977 = vmatpush1.msra.mxu0 0.0
      %2978 = vmatprep.subr.mxu0 0.0
      %2979 = vmatpush1.msra.mxu0 0.0
      %2980 = vmatprep.subr.mxu0 0.0
      %2981 = vmatpush1.msra.mxu0 0.0
      %2982 = vmatprep.subr.mxu0 0.0
      %2983 = vmatpush1.msra.mxu0 0.0
      %2984 = vmatprep.subr.mxu0 0.0
      %2985 = vmatpush1.msra.mxu0 0.0
      %2986 = vmatprep.subr.mxu0 0.0
      %2987 = vmatpush1.msra.mxu0 0.0
      %2988 = vmatprep.subr.mxu0 0.0
      %2989 = vmatpush1.msra.mxu0 0.0
      %2990 = vmatprep.subr.mxu0 0.0
      %2991 = vmatpush1.msra.mxu0 0.0
      %2992 = vmatprep.subr.mxu0 0.0
      %2993 = vmatpush1.msra.mxu0 0.0
      %2994 = vmatprep.subr.mxu0 0.0
      %2995 = vmatpush1.msra.mxu0 0.0
      %2996 = vmatprep.subr.mxu0 0.0
      %2997 = vmatpush1.msra.mxu0 0.0
      %2998 = vmatprep.mubr.f32.mxu0 0.0
      %2999 = vmatmul.mubr.f32.gmra.mrb[0].mxu0 %v2932
      %v3000 = vpop.f32.mrb[0].mxu0
      %v3001 = vadd.f32 %v2786, %v3000
      %v3002 = vpop.f32.mrb[0].mxu0
      %v3003 = vadd.f32 %v2788, %v3002
      %3004 = vdwg.mxu0
      %3005 = vmatprep.subr.mxu0 %v2693
      %3006 = vmatpush1.msra.mxu0 %v2694
      %3007 = vmatprep.subr.mxu0 0.0
      %3008 = vmatpush1.msra.mxu0 0.0
      %3009 = vmatprep.subr.mxu0 0.0
      %3010 = vmatpush1.msra.mxu0 0.0
      %3011 = vmatprep.subr.mxu0 0.0
      %3012 = vmatpush1.msra.mxu0 0.0
      %3013 = vmatprep.subr.mxu0 0.0
      %3014 = vmatpush1.msra.mxu0 0.0
      %3015 = vmatprep.subr.mxu0 0.0
      %3016 = vmatpush1.msra.mxu0 0.0
      %3017 = vmatprep.subr.mxu0 0.0
      %3018 = vmatpush1.msra.mxu0 0.0
      %3019 = vmatprep.subr.mxu0 0.0
      %3020 = vmatpush1.msra.mxu0 0.0
      %3021 = vmatprep.subr.mxu0 0.0
      %3022 = vmatpush1.msra.mxu0 0.0
      %3023 = vmatprep.subr.mxu0 0.0
      %3024 = vmatpush1.msra.mxu0 0.0
      %3025 = vmatprep.subr.mxu0 0.0
      %3026 = vmatpush1.msra.mxu0 0.0
      %3027 = vmatprep.subr.mxu0 0.0
      %3028 = vmatpush1.msra.mxu0 0.0
      %3029 = vmatprep.subr.mxu0 0.0
      %3030 = vmatpush1.msra.mxu0 0.0
      %3031 = vmatprep.subr.mxu0 0.0
      %3032 = vmatpush1.msra.mxu0 0.0
      %3033 = vmatprep.subr.mxu0 0.0
      %3034 = vmatpush1.msra.mxu0 0.0
      %3035 = vmatprep.subr.mxu0 0.0
      %3036 = vmatpush1.msra.mxu0 0.0
      %3037 = vmatprep.subr.mxu0 0.0
      %3038 = vmatpush1.msra.mxu0 0.0
      %3039 = vmatprep.subr.mxu0 0.0
      %3040 = vmatpush1.msra.mxu0 0.0
      %3041 = vmatprep.subr.mxu0 0.0
      %3042 = vmatpush1.msra.mxu0 0.0
      %3043 = vmatprep.subr.mxu0 0.0
      %3044 = vmatpush1.msra.mxu0 0.0
      %3045 = vmatprep.subr.mxu0 0.0
      %3046 = vmatpush1.msra.mxu0 0.0
      %3047 = vmatprep.subr.mxu0 0.0
      %3048 = vmatpush1.msra.mxu0 0.0
      %3049 = vmatprep.subr.mxu0 0.0
      %3050 = vmatpush1.msra.mxu0 0.0
      %3051 = vmatprep.subr.mxu0 0.0
      %3052 = vmatpush1.msra.mxu0 0.0
      %3053 = vmatprep.subr.mxu0 0.0
      %3054 = vmatpush1.msra.mxu0 0.0
      %3055 = vmatprep.subr.mxu0 0.0
      %3056 = vmatpush1.msra.mxu0 0.0
      %3057 = vmatprep.subr.mxu0 0.0
      %3058 = vmatpush1.msra.mxu0 0.0
      %3059 = vmatprep.subr.mxu0 0.0
      %3060 = vmatpush1.msra.mxu0 0.0
      %3061 = vmatprep.subr.mxu0 0.0
      %3062 = vmatpush1.msra.mxu0 0.0
      %3063 = vmatprep.subr.mxu0 0.0
      %3064 = vmatpush1.msra.mxu0 0.0
      %3065 = vmatprep.subr.mxu0 0.0
      %3066 = vmatpush1.msra.mxu0 0.0
      %3067 = vmatprep.subr.mxu0 0.0
      %3068 = vmatpush1.msra.mxu0 0.0
      %3069 = vmatprep.mubr.f32.mxu0 0.0
      %3070 = vmatmul.mubr.f32.gmra.mrb[0].mxu0 %v2932
      %v3071 = vpop.f32.mrb[0].mxu0
      %v3072 = vadd.f32 %v2857, %v3071
      %v3073 = vpop.f32.mrb[0].mxu0
      %v3074 = vadd.f32 %v2859, %v3073
      %3075 = vdwg.mxu0
      %3076 = vmatprep.subr.mxu0 0.0
      %3077 = vmatpush1.msra.mxu0 %v2692
      %3078 = vmatprep.subr.mxu0 0.0
      %3079 = vmatpush1.msra.mxu0 0.0
      %3080 = vmatprep.subr.mxu0 0.0
      %3081 = vmatpush1.msra.mxu0 0.0
      %3082 = vmatprep.subr.mxu0 0.0
      %3083 = vmatpush1.msra.mxu0 0.0
      %3084 = vmatprep.subr.mxu0 0.0
      %3085 = vmatpush1.msra.mxu0 0.0
      %3086 = vmatprep.subr.mxu0 0.0
      %3087 = vmatpush1.msra.mxu0 0.0
      %3088 = vmatprep.subr.mxu0 0.0
      %3089 = vmatpush1.msra.mxu0 0.0
      %3090 = vmatprep.subr.mxu0 0.0
      %3091 = vmatpush1.msra.mxu0 0.0
      %3092 = vmatprep.subr.mxu0 0.0
      %3093 = vmatpush1.msra.mxu0 0.0
      %3094 = vmatprep.subr.mxu0 0.0
      %3095 = vmatpush1.msra.mxu0 0.0
      %3096 = vmatprep.subr.mxu0 0.0
      %3097 = vmatpush1.msra.mxu0 0.0
      %3098 = vmatprep.subr.mxu0 0.0
      %3099 = vmatpush1.msra.mxu0 0.0
      %3100 = vmatprep.subr.mxu0 0.0
      %3101 = vmatpush1.msra.mxu0 0.0
      %3102 = vmatprep.subr.mxu0 0.0
      %3103 = vmatpush1.msra.mxu0 0.0
      %3104 = vmatprep.subr.mxu0 0.0
      %3105 = vmatpush1.msra.mxu0 0.0
      %3106 = vmatprep.subr.mxu0 0.0
      %3107 = vmatpush1.msra.mxu0 0.0
      %3108 = vmatprep.subr.mxu0 0.0
      %3109 = vmatpush1.msra.mxu0 0.0
      %3110 = vmatprep.subr.mxu0 0.0
      %3111 = vmatpush1.msra.mxu0 0.0
      %3112 = vmatprep.subr.mxu0 0.0
      %3113 = vmatpush1.msra.mxu0 0.0
      %3114 = vmatprep.subr.mxu0 0.0
      %3115 = vmatpush1.msra.mxu0 0.0
      %3116 = vmatprep.subr.mxu0 0.0
      %3117 = vmatpush1.msra.mxu0 0.0
      %3118 = vmatprep.subr.mxu0 0.0
      %3119 = vmatpush1.msra.mxu0 0.0
      %3120 = vmatprep.subr.mxu0 0.0
      %3121 = vmatpush1.msra.mxu0 0.0
      %3122 = vmatprep.subr.mxu0 0.0
      %3123 = vmatpush1.msra.mxu0 0.0
      %3124 = vmatprep.subr.mxu0 0.0
      %3125 = vmatpush1.msra.mxu0 0.0
      %3126 = vmatprep.subr.mxu0 0.0
      %3127 = vmatpush1.msra.mxu0 0.0
      %3128 = vmatprep.subr.mxu0 0.0
      %3129 = vmatpush1.msra.mxu0 0.0
      %3130 = vmatprep.subr.mxu0 0.0
      %3131 = vmatpush1.msra.mxu0 0.0
      %3132 = vmatprep.subr.mxu0 0.0
      %3133 = vmatpush1.msra.mxu0 0.0
      %3134 = vmatprep.subr.mxu0 0.0
      %3135 = vmatpush1.msra.mxu0 0.0
      %3136 = vmatprep.subr.mxu0 0.0
      %3137 = vmatpush1.msra.mxu0 0.0
      %3138 = vmatprep.subr.mxu0 0.0
      %3139 = vmatpush1.msra.mxu0 0.0
      %3140 = vmatprep.mubr.f32.mxu0 0.0
      %3141 = vmatmul.mubr.f32.gmra.mrb[0].mxu0 %v2932
      %v3142 = vpop.f32.mrb[0].mxu0
      %v3143 = vadd.f32 %v2928, %v3142
      %v3144 = vpop.f32.mrb[0].mxu0
      %3145 = vdwg.mxu0
      %3146 = vrot.lane.b32.xlu0 %v2677, 33
      %v3147 = vpop.permute.xlu0 %3146
      %3148 = vrot.lane.b32.xlu0 %v2678, 33
      %v3149 = vpop.permute.xlu0 %3148
      %3150 = vrot.lane.b32.xlu0 %v2679, 33
      %v3151 = vpop.permute.xlu0 %3150
      %3152 = vrot.lane.b32.xlu0 %v2680, 33
      %v3153 = vpop.permute.xlu0 %3152
      %3154 = vrot.lane.b32.xlu0 %v2681, 33
      %v3155 = vpop.permute.xlu0 %3154
      %v3156 = vsel %vm810, %v3153, %v3155
      %v3157 = vsel %vm810, %v3151, %v3153
      %v3158 = vsel %vm810, %v3149, %v3151
      %v3159 = vsel %vm810, %v3147, %v3149
      %v3160 = vsel %vm810, %v3155, %v3147
      %s3161 = scalar_lea.vmem %s3, 8
      %v3162 = vld [vmem:[%s3161] sm:$0xf]
      %v3164 = vsel %vm2715, %v3162, 0
      %3166 = vmatprep.subr.mxu0 %v3159
      %3167 = vmatpush1.msra.mxu0 %v3160
      %3168 = vmatprep.subr.mxu0 0.0
      %3169 = vmatpush1.msra.mxu0 0.0
      %3170 = vmatprep.subr.mxu0 0.0
      %3171 = vmatpush1.msra.mxu0 0.0
      %3172 = vmatprep.subr.mxu0 0.0
      %3173 = vmatpush1.msra.mxu0 0.0
      %3174 = vmatprep.subr.mxu0 0.0
      %3175 = vmatpush1.msra.mxu0 0.0
      %3176 = vmatprep.subr.mxu0 0.0
      %3177 = vmatpush1.msra.mxu0 0.0
      %3178 = vmatprep.subr.mxu0 0.0
      %3179 = vmatpush1.msra.mxu0 0.0
      %3180 = vmatprep.subr.mxu0 0.0
      %3181 = vmatpush1.msra.mxu0 0.0
      %3182 = vmatprep.subr.mxu0 0.0
      %3183 = vmatpush1.msra.mxu0 0.0
      %3184 = vmatprep.subr.mxu0 0.0
      %3185 = vmatpush1.msra.mxu0 0.0
      %3186 = vmatprep.subr.mxu0 0.0
      %3187 = vmatpush1.msra.mxu0 0.0
      %3188 = vmatprep.subr.mxu0 0.0
      %3189 = vmatpush1.msra.mxu0 0.0
      %3190 = vmatprep.subr.mxu0 0.0
      %3191 = vmatpush1.msra.mxu0 0.0
      %3192 = vmatprep.subr.mxu0 0.0
      %3193 = vmatpush1.msra.mxu0 0.0
      %3194 = vmatprep.subr.mxu0 0.0
      %3195 = vmatpush1.msra.mxu0 0.0
      %3196 = vmatprep.subr.mxu0 0.0
      %3197 = vmatpush1.msra.mxu0 0.0
      %3198 = vmatprep.subr.mxu0 0.0
      %3199 = vmatpush1.msra.mxu0 0.0
      %3200 = vmatprep.subr.mxu0 0.0
      %3201 = vmatpush1.msra.mxu0 0.0
      %3202 = vmatprep.subr.mxu0 0.0
      %3203 = vmatpush1.msra.mxu0 0.0
      %3204 = vmatprep.subr.mxu0 0.0
      %3205 = vmatpush1.msra.mxu0 0.0
      %3206 = vmatprep.subr.mxu0 0.0
      %3207 = vmatpush1.msra.mxu0 0.0
      %3208 = vmatprep.subr.mxu0 0.0
      %3209 = vmatpush1.msra.mxu0 0.0
      %3210 = vmatprep.subr.mxu0 0.0
      %3211 = vmatpush1.msra.mxu0 0.0
      %3212 = vmatprep.subr.mxu0 0.0
      %3213 = vmatpush1.msra.mxu0 0.0
      %3214 = vmatprep.subr.mxu0 0.0
      %3215 = vmatpush1.msra.mxu0 0.0
      %3216 = vmatprep.subr.mxu0 0.0
      %3217 = vmatpush1.msra.mxu0 0.0
      %3218 = vmatprep.subr.mxu0 0.0
      %3219 = vmatpush1.msra.mxu0 0.0
      %3220 = vmatprep.subr.mxu0 0.0
      %3221 = vmatpush1.msra.mxu0 0.0
      %3222 = vmatprep.subr.mxu0 0.0
      %3223 = vmatpush1.msra.mxu0 0.0
      %3224 = vmatprep.subr.mxu0 0.0
      %3225 = vmatpush1.msra.mxu0 0.0
      %3226 = vmatprep.subr.mxu0 0.0
      %3227 = vmatpush1.msra.mxu0 0.0
      %3228 = vmatprep.subr.mxu0 0.0
      %3229 = vmatpush1.msra.mxu0 0.0
      %3230 = vmatprep.mubr.f32.mxu0 0.0
      %3231 = vmatmul.mubr.f32.gmra.mrb[0].mxu0 %v3164
      %v3232 = vpop.f32.mrb[0].mxu0
      %v3233 = vadd.f32 0.0, %v3232
      %v3234 = vpop.f32.mrb[0].mxu0
      %v3235 = vadd.f32 0.0, %v3234
      %3236 = vdwg.mxu0
      %3237 = vmatprep.subr.mxu0 %v3157
      %3238 = vmatpush1.msra.mxu0 %v3158
      %3239 = vmatprep.subr.mxu0 0.0
      %3240 = vmatpush1.msra.mxu0 0.0
      %3241 = vmatprep.subr.mxu0 0.0
      %3242 = vmatpush1.msra.mxu0 0.0
      %3243 = vmatprep.subr.mxu0 0.0
      %3244 = vmatpush1.msra.mxu0 0.0
      %3245 = vmatprep.subr.mxu0 0.0
      %3246 = vmatpush1.msra.mxu0 0.0
      %3247 = vmatprep.subr.mxu0 0.0
      %3248 = vmatpush1.msra.mxu0 0.0
      %3249 = vmatprep.subr.mxu0 0.0
      %3250 = vmatpush1.msra.mxu0 0.0
      %3251 = vmatprep.subr.mxu0 0.0
      %3252 = vmatpush1.msra.mxu0 0.0
      %3253 = vmatprep.subr.mxu0 0.0
      %3254 = vmatpush1.msra.mxu0 0.0
      %3255 = vmatprep.subr.mxu0 0.0
      %3256 = vmatpush1.msra.mxu0 0.0
      %3257 = vmatprep.subr.mxu0 0.0
      %3258 = vmatpush1.msra.mxu0 0.0
      %3259 = vmatprep.subr.mxu0 0.0
      %3260 = vmatpush1.msra.mxu0 0.0
      %3261 = vmatprep.subr.mxu0 0.0
      %3262 = vmatpush1.msra.mxu0 0.0
      %3263 = vmatprep.subr.mxu0 0.0
      %3264 = vmatpush1.msra.mxu0 0.0
      %3265 = vmatprep.subr.mxu0 0.0
      %3266 = vmatpush1.msra.mxu0 0.0
      %3267 = vmatprep.subr.mxu0 0.0
      %3268 = vmatpush1.msra.mxu0 0.0
      %3269 = vmatprep.subr.mxu0 0.0
      %3270 = vmatpush1.msra.mxu0 0.0
      %3271 = vmatprep.subr.mxu0 0.0
      %3272 = vmatpush1.msra.mxu0 0.0
      %3273 = vmatprep.subr.mxu0 0.0
      %3274 = vmatpush1.msra.mxu0 0.0
      %3275 = vmatprep.subr.mxu0 0.0
      %3276 = vmatpush1.msra.mxu0 0.0
      %3277 = vmatprep.subr.mxu0 0.0
      %3278 = vmatpush1.msra.mxu0 0.0
      %3279 = vmatprep.subr.mxu0 0.0
      %3280 = vmatpush1.msra.mxu0 0.0
      %3281 = vmatprep.subr.mxu0 0.0
      %3282 = vmatpush1.msra.mxu0 0.0
      %3283 = vmatprep.subr.mxu0 0.0
      %3284 = vmatpush1.msra.mxu0 0.0
      %3285 = vmatprep.subr.mxu0 0.0
      %3286 = vmatpush1.msra.mxu0 0.0
      %3287 = vmatprep.subr.mxu0 0.0
      %3288 = vmatpush1.msra.mxu0 0.0
      %3289 = vmatprep.subr.mxu0 0.0
      %3290 = vmatpush1.msra.mxu0 0.0
      %3291 = vmatprep.subr.mxu0 0.0
      %3292 = vmatpush1.msra.mxu0 0.0
      %3293 = vmatprep.subr.mxu0 0.0
      %3294 = vmatpush1.msra.mxu0 0.0
      %3295 = vmatprep.subr.mxu0 0.0
      %3296 = vmatpush1.msra.mxu0 0.0
      %3297 = vmatprep.subr.mxu0 0.0
      %3298 = vmatpush1.msra.mxu0 0.0
      %3299 = vmatprep.subr.mxu0 0.0
      %3300 = vmatpush1.msra.mxu0 0.0
      %3301 = vmatprep.mubr.f32.mxu0 0.0
      %3302 = vmatmul.mubr.f32.gmra.mrb[0].mxu0 %v3164
      %v3303 = vpop.f32.mrb[0].mxu0
      %v3304 = vadd.f32 0.0, %v3303
      %v3305 = vpop.f32.mrb[0].mxu0
      %v3306 = vadd.f32 0.0, %v3305
      %3307 = vdwg.mxu0
      %3308 = vmatprep.subr.mxu0 0.0
      %3309 = vmatpush1.msra.mxu0 %v3156
      %3310 = vmatprep.subr.mxu0 0.0
      %3311 = vmatpush1.msra.mxu0 0.0
      %3312 = vmatprep.subr.mxu0 0.0
      %3313 = vmatpush1.msra.mxu0 0.0
      %3314 = vmatprep.subr.mxu0 0.0
      %3315 = vmatpush1.msra.mxu0 0.0
      %3316 = vmatprep.subr.mxu0 0.0
      %3317 = vmatpush1.msra.mxu0 0.0
      %3318 = vmatprep.subr.mxu0 0.0
      %3319 = vmatpush1.msra.mxu0 0.0
      %3320 = vmatprep.subr.mxu0 0.0
      %3321 = vmatpush1.msra.mxu0 0.0
      %3322 = vmatprep.subr.mxu0 0.0
      %3323 = vmatpush1.msra.mxu0 0.0
      %3324 = vmatprep.subr.mxu0 0.0
      %3325 = vmatpush1.msra.mxu0 0.0
      %3326 = vmatprep.subr.mxu0 0.0
      %3327 = vmatpush1.msra.mxu0 0.0
      %3328 = vmatprep.subr.mxu0 0.0
      %3329 = vmatpush1.msra.mxu0 0.0
      %3330 = vmatprep.subr.mxu0 0.0
      %3331 = vmatpush1.msra.mxu0 0.0
      %3332 = vmatprep.subr.mxu0 0.0
      %3333 = vmatpush1.msra.mxu0 0.0
      %3334 = vmatprep.subr.mxu0 0.0
      %3335 = vmatpush1.msra.mxu0 0.0
      %3336 = vmatprep.subr.mxu0 0.0
      %3337 = vmatpush1.msra.mxu0 0.0
      %3338 = vmatprep.subr.mxu0 0.0
      %3339 = vmatpush1.msra.mxu0 0.0
      %3340 = vmatprep.subr.mxu0 0.0
      %3341 = vmatpush1.msra.mxu0 0.0
      %3342 = vmatprep.subr.mxu0 0.0
      %3343 = vmatpush1.msra.mxu0 0.0
      %3344 = vmatprep.subr.mxu0 0.0
      %3345 = vmatpush1.msra.mxu0 0.0
      %3346 = vmatprep.subr.mxu0 0.0
      %3347 = vmatpush1.msra.mxu0 0.0
      %3348 = vmatprep.subr.mxu0 0.0
      %3349 = vmatpush1.msra.mxu0 0.0
      %3350 = vmatprep.subr.mxu0 0.0
      %3351 = vmatpush1.msra.mxu0 0.0
      %3352 = vmatprep.subr.mxu0 0.0
      %3353 = vmatpush1.msra.mxu0 0.0
      %3354 = vmatprep.subr.mxu0 0.0
      %3355 = vmatpush1.msra.mxu0 0.0
      %3356 = vmatprep.subr.mxu0 0.0
      %3357 = vmatpush1.msra.mxu0 0.0
      %3358 = vmatprep.subr.mxu0 0.0
      %3359 = vmatpush1.msra.mxu0 0.0
      %3360 = vmatprep.subr.mxu0 0.0
      %3361 = vmatpush1.msra.mxu0 0.0
      %3362 = vmatprep.subr.mxu0 0.0
      %3363 = vmatpush1.msra.mxu0 0.0
      %3364 = vmatprep.subr.mxu0 0.0
      %3365 = vmatpush1.msra.mxu0 0.0
      %3366 = vmatprep.subr.mxu0 0.0
      %3367 = vmatpush1.msra.mxu0 0.0
      %3368 = vmatprep.subr.mxu0 0.0
      %3369 = vmatpush1.msra.mxu0 0.0
      %3370 = vmatprep.subr.mxu0 0.0
      %3371 = vmatpush1.msra.mxu0 0.0
      %3372 = vmatprep.mubr.f32.mxu0 0.0
      %3373 = vmatmul.mubr.f32.gmra.mrb[0].mxu0 %v3164
      %v3374 = vpop.f32.mrb[0].mxu0
      %v3375 = vadd.f32 0.0, %v3374
      %v3376 = vpop.f32.mrb[0].mxu0
      %3377 = vdwg.mxu0
      %v3378 = vadd.f32 %v3001, %v3233
      %v3379 = vadd.f32 %v3003, %v3235
      %v3380 = vadd.f32 %v3072, %v3304
      %v3381 = vadd.f32 %v3074, %v3306
      %v3382 = vadd.f32 %v3143, %v3375
      %3383 = vrot.lane.b32.xlu0 %v2677, 1
      %v3384 = vpop.permute.xlu0 %3383
      %3385 = vrot.lane.b32.xlu0 %v2678, 1
      %v3386 = vpop.permute.xlu0 %3385
      %3387 = vrot.lane.b32.xlu0 %v2679, 1
      %v3388 = vpop.permute.xlu0 %3387
      %3389 = vrot.lane.b32.xlu0 %v2680, 1
      %v3390 = vpop.permute.xlu0 %3389
      %3391 = vrot.lane.b32.xlu0 %v2681, 1
      %v3392 = vpop.permute.xlu0 %3391
      %v3393 = vsel %vm1078, %v3390, %v3392
      %v3394 = vsel %vm1078, %v3388, %v3390
      %v3395 = vsel %vm1078, %v3386, %v3388
      %v3396 = vsel %vm1078, %v3384, %v3386
      %v3397 = vsel %vm1078, %v3392, %v3384
      %s3398 = scalar_lea.vmem %s3, 12
      %v3399 = vld [vmem:[%s3398] sm:$0xf]
      %v3401 = vsel %vm2715, %v3399, 0
      %3403 = vmatprep.subr.mxu0 %v3396
      %3404 = vmatpush1.msra.mxu0 %v3397
      %3405 = vmatprep.subr.mxu0 0.0
      %3406 = vmatpush1.msra.mxu0 0.0
      %3407 = vmatprep.subr.mxu0 0.0
      %3408 = vmatpush1.msra.mxu0 0.0
      %3409 = vmatprep.subr.mxu0 0.0
      %3410 = vmatpush1.msra.mxu0 0.0
      %3411 = vmatprep.subr.mxu0 0.0
      %3412 = vmatpush1.msra.mxu0 0.0
      %3413 = vmatprep.subr.mxu0 0.0
      %3414 = vmatpush1.msra.mxu0 0.0
      %3415 = vmatprep.subr.mxu0 0.0
      %3416 = vmatpush1.msra.mxu0 0.0
      %3417 = vmatprep.subr.mxu0 0.0
      %3418 = vmatpush1.msra.mxu0 0.0
      %3419 = vmatprep.subr.mxu0 0.0
      %3420 = vmatpush1.msra.mxu0 0.0
      %3421 = vmatprep.subr.mxu0 0.0
      %3422 = vmatpush1.msra.mxu0 0.0
      %3423 = vmatprep.subr.mxu0 0.0
      %3424 = vmatpush1.msra.mxu0 0.0
      %3425 = vmatprep.subr.mxu0 0.0
      %3426 = vmatpush1.msra.mxu0 0.0
      %3427 = vmatprep.subr.mxu0 0.0
      %3428 = vmatpush1.msra.mxu0 0.0
      %3429 = vmatprep.subr.mxu0 0.0
      %3430 = vmatpush1.msra.mxu0 0.0
      %3431 = vmatprep.subr.mxu0 0.0
      %3432 = vmatpush1.msra.mxu0 0.0
      %3433 = vmatprep.subr.mxu0 0.0
      %3434 = vmatpush1.msra.mxu0 0.0
      %3435 = vmatprep.subr.mxu0 0.0
      %3436 = vmatpush1.msra.mxu0 0.0
      %3437 = vmatprep.subr.mxu0 0.0
      %3438 = vmatpush1.msra.mxu0 0.0
      %3439 = vmatprep.subr.mxu0 0.0
      %3440 = vmatpush1.msra.mxu0 0.0
      %3441 = vmatprep.subr.mxu0 0.0
      %3442 = vmatpush1.msra.mxu0 0.0
      %3443 = vmatprep.subr.mxu0 0.0
      %3444 = vmatpush1.msra.mxu0 0.0
      %3445 = vmatprep.subr.mxu0 0.0
      %3446 = vmatpush1.msra.mxu0 0.0
      %3447 = vmatprep.subr.mxu0 0.0
      %3448 = vmatpush1.msra.mxu0 0.0
      %3449 = vmatprep.subr.mxu0 0.0
      %3450 = vmatpush1.msra.mxu0 0.0
      %3451 = vmatprep.subr.mxu0 0.0
      %3452 = vmatpush1.msra.mxu0 0.0
      %3453 = vmatprep.subr.mxu0 0.0
      %3454 = vmatpush1.msra.mxu0 0.0
      %3455 = vmatprep.subr.mxu0 0.0
      %3456 = vmatpush1.msra.mxu0 0.0
      %3457 = vmatprep.subr.mxu0 0.0
      %3458 = vmatpush1.msra.mxu0 0.0
      %3459 = vmatprep.subr.mxu0 0.0
      %3460 = vmatpush1.msra.mxu0 0.0
      %3461 = vmatprep.subr.mxu0 0.0
      %3462 = vmatpush1.msra.mxu0 0.0
      %3463 = vmatprep.subr.mxu0 0.0
      %3464 = vmatpush1.msra.mxu0 0.0
      %3465 = vmatprep.subr.mxu0 0.0
      %3466 = vmatpush1.msra.mxu0 0.0
      %3467 = vmatprep.mubr.f32.mxu0 0.0
      %3468 = vmatmul.mubr.f32.gmra.mrb[0].mxu0 %v3401
      %v3469 = vpop.f32.mrb[0].mxu0
      %v3470 = vadd.f32 0.0, %v3469
      %v3471 = vpop.f32.mrb[0].mxu0
      %v3472 = vadd.f32 0.0, %v3471
      %3473 = vdwg.mxu0
      %3474 = vmatprep.subr.mxu0 %v3394
      %3475 = vmatpush1.msra.mxu0 %v3395
      %3476 = vmatprep.subr.mxu0 0.0
      %3477 = vmatpush1.msra.mxu0 0.0
      %3478 = vmatprep.subr.mxu0 0.0
      %3479 = vmatpush1.msra.mxu0 0.0
      %3480 = vmatprep.subr.mxu0 0.0
      %3481 = vmatpush1.msra.mxu0 0.0
      %3482 = vmatprep.subr.mxu0 0.0
      %3483 = vmatpush1.msra.mxu0 0.0
      %3484 = vmatprep.subr.mxu0 0.0
      %3485 = vmatpush1.msra.mxu0 0.0
      %3486 = vmatprep.subr.mxu0 0.0
      %3487 = vmatpush1.msra.mxu0 0.0
      %3488 = vmatprep.subr.mxu0 0.0
      %3489 = vmatpush1.msra.mxu0 0.0
      %3490 = vmatprep.subr.mxu0 0.0
      %3491 = vmatpush1.msra.mxu0 0.0
      %3492 = vmatprep.subr.mxu0 0.0
      %3493 = vmatpush1.msra.mxu0 0.0
      %3494 = vmatprep.subr.mxu0 0.0
      %3495 = vmatpush1.msra.mxu0 0.0
      %3496 = vmatprep.subr.mxu0 0.0
      %3497 = vmatpush1.msra.mxu0 0.0
      %3498 = vmatprep.subr.mxu0 0.0
      %3499 = vmatpush1.msra.mxu0 0.0
      %3500 = vmatprep.subr.mxu0 0.0
      %3501 = vmatpush1.msra.mxu0 0.0
      %3502 = vmatprep.subr.mxu0 0.0
      %3503 = vmatpush1.msra.mxu0 0.0
      %3504 = vmatprep.subr.mxu0 0.0
      %3505 = vmatpush1.msra.mxu0 0.0
      %3506 = vmatprep.subr.mxu0 0.0
      %3507 = vmatpush1.msra.mxu0 0.0
      %3508 = vmatprep.subr.mxu0 0.0
      %3509 = vmatpush1.msra.mxu0 0.0
      %3510 = vmatprep.subr.mxu0 0.0
      %3511 = vmatpush1.msra.mxu0 0.0
      %3512 = vmatprep.subr.mxu0 0.0
      %3513 = vmatpush1.msra.mxu0 0.0
      %3514 = vmatprep.subr.mxu0 0.0
      %3515 = vmatpush1.msra.mxu0 0.0
      %3516 = vmatprep.subr.mxu0 0.0
      %3517 = vmatpush1.msra.mxu0 0.0
      %3518 = vmatprep.subr.mxu0 0.0
      %3519 = vmatpush1.msra.mxu0 0.0
      %3520 = vmatprep.subr.mxu0 0.0
      %3521 = vmatpush1.msra.mxu0 0.0
      %3522 = vmatprep.subr.mxu0 0.0
      %3523 = vmatpush1.msra.mxu0 0.0
      %3524 = vmatprep.subr.mxu0 0.0
      %3525 = vmatpush1.msra.mxu0 0.0
      %3526 = vmatprep.subr.mxu0 0.0
      %3527 = vmatpush1.msra.mxu0 0.0
      %3528 = vmatprep.subr.mxu0 0.0
      %3529 = vmatpush1.msra.mxu0 0.0
      %3530 = vmatprep.subr.mxu0 0.0
      %3531 = vmatpush1.msra.mxu0 0.0
      %3532 = vmatprep.subr.mxu0 0.0
      %3533 = vmatpush1.msra.mxu0 0.0
      %3534 = vmatprep.subr.mxu0 0.0
      %3535 = vmatpush1.msra.mxu0 0.0
      %3536 = vmatprep.subr.mxu0 0.0
      %3537 = vmatpush1.msra.mxu0 0.0
      %3538 = vmatprep.mubr.f32.mxu0 0.0
      %3539 = vmatmul.mubr.f32.gmra.mrb[0].mxu0 %v3401
      %v3540 = vpop.f32.mrb[0].mxu0
      %v3541 = vadd.f32 0.0, %v3540
      %v3542 = vpop.f32.mrb[0].mxu0
      %v3543 = vadd.f32 0.0, %v3542
      %3544 = vdwg.mxu0
      %3545 = vmatprep.subr.mxu0 0.0
      %3546 = vmatpush1.msra.mxu0 %v3393
      %3547 = vmatprep.subr.mxu0 0.0
      %3548 = vmatpush1.msra.mxu0 0.0
      %3549 = vmatprep.subr.mxu0 0.0
      %3550 = vmatpush1.msra.mxu0 0.0
      %3551 = vmatprep.subr.mxu0 0.0
      %3552 = vmatpush1.msra.mxu0 0.0
      %3553 = vmatprep.subr.mxu0 0.0
      %3554 = vmatpush1.msra.mxu0 0.0
      %3555 = vmatprep.subr.mxu0 0.0
      %3556 = vmatpush1.msra.mxu0 0.0
      %3557 = vmatprep.subr.mxu0 0.0
      %3558 = vmatpush1.msra.mxu0 0.0
      %3559 = vmatprep.subr.mxu0 0.0
      %3560 = vmatpush1.msra.mxu0 0.0
      %3561 = vmatprep.subr.mxu0 0.0
      %3562 = vmatpush1.msra.mxu0 0.0
      %3563 = vmatprep.subr.mxu0 0.0
      %3564 = vmatpush1.msra.mxu0 0.0
      %3565 = vmatprep.subr.mxu0 0.0
      %3566 = vmatpush1.msra.mxu0 0.0
      %3567 = vmatprep.subr.mxu0 0.0
      %3568 = vmatpush1.msra.mxu0 0.0
      %3569 = vmatprep.subr.mxu0 0.0
      %3570 = vmatpush1.msra.mxu0 0.0
      %3571 = vmatprep.subr.mxu0 0.0
      %3572 = vmatpush1.msra.mxu0 0.0
      %3573 = vmatprep.subr.mxu0 0.0
      %3574 = vmatpush1.msra.mxu0 0.0
      %3575 = vmatprep.subr.mxu0 0.0
      %3576 = vmatpush1.msra.mxu0 0.0
      %3577 = vmatprep.subr.mxu0 0.0
      %3578 = vmatpush1.msra.mxu0 0.0
      %3579 = vmatprep.subr.mxu0 0.0
      %3580 = vmatpush1.msra.mxu0 0.0
      %3581 = vmatprep.subr.mxu0 0.0
      %3582 = vmatpush1.msra.mxu0 0.0
      %3583 = vmatprep.subr.mxu0 0.0
      %3584 = vmatpush1.msra.mxu0 0.0
      %3585 = vmatprep.subr.mxu0 0.0
      %3586 = vmatpush1.msra.mxu0 0.0
      %3587 = vmatprep.subr.mxu0 0.0
      %3588 = vmatpush1.msra.mxu0 0.0
      %3589 = vmatprep.subr.mxu0 0.0
      %3590 = vmatpush1.msra.mxu0 0.0
      %3591 = vmatprep.subr.mxu0 0.0
      %3592 = vmatpush1.msra.mxu0 0.0
      %3593 = vmatprep.subr.mxu0 0.0
      %3594 = vmatpush1.msra.mxu0 0.0
      %3595 = vmatprep.subr.mxu0 0.0
      %3596 = vmatpush1.msra.mxu0 0.0
      %3597 = vmatprep.subr.mxu0 0.0
      %3598 = vmatpush1.msra.mxu0 0.0
      %3599 = vmatprep.subr.mxu0 0.0
      %3600 = vmatpush1.msra.mxu0 0.0
      %3601 = vmatprep.subr.mxu0 0.0
      %3602 = vmatpush1.msra.mxu0 0.0
      %3603 = vmatprep.subr.mxu0 0.0
      %3604 = vmatpush1.msra.mxu0 0.0
      %3605 = vmatprep.subr.mxu0 0.0
      %3606 = vmatpush1.msra.mxu0 0.0
      %3607 = vmatprep.subr.mxu0 0.0
      %3608 = vmatpush1.msra.mxu0 0.0
      %3609 = vmatprep.mubr.f32.mxu0 0.0
      %3610 = vmatmul.mubr.f32.gmra.mrb[0].mxu0 %v3401
      %v3611 = vpop.f32.mrb[0].mxu0
      %v3612 = vadd.f32 0.0, %v3611
      %v3613 = vpop.f32.mrb[0].mxu0
      %3614 = vdwg.mxu0
      %v3615 = vadd.f32 %v3378, %v3470
      %v3616 = vadd.f32 %v3379, %v3472
      %v3617 = vadd.f32 %v3380, %v3541
      %v3618 = vadd.f32 %v3381, %v3543
      %v3619 = vadd.f32 %v3382, %v3612
      %s3620 = scalar_lea.vmem %s3, 16
      %v3621 = vld [vmem:[%s3620] sm:$0xf]
      %v3623 = vsel %vm2715, %v3621, 0
      %3625 = vmatprep.subr.mxu0 %v2678
      %3626 = vmatpush1.msra.mxu0 %v2677
      %3627 = vmatprep.subr.mxu0 0.0
      %3628 = vmatpush1.msra.mxu0 0.0
      %3629 = vmatprep.subr.mxu0 0.0
      %3630 = vmatpush1.msra.mxu0 0.0
      %3631 = vmatprep.subr.mxu0 0.0
      %3632 = vmatpush1.msra.mxu0 0.0
      %3633 = vmatprep.subr.mxu0 0.0
      %3634 = vmatpush1.msra.mxu0 0.0
      %3635 = vmatprep.subr.mxu0 0.0
      %3636 = vmatpush1.msra.mxu0 0.0
      %3637 = vmatprep.subr.mxu0 0.0
      %3638 = vmatpush1.msra.mxu0 0.0
      %3639 = vmatprep.subr.mxu0 0.0
      %3640 = vmatpush1.msra.mxu0 0.0
      %3641 = vmatprep.subr.mxu0 0.0
      %3642 = vmatpush1.msra.mxu0 0.0
      %3643 = vmatprep.subr.mxu0 0.0
      %3644 = vmatpush1.msra.mxu0 0.0
      %3645 = vmatprep.subr.mxu0 0.0
      %3646 = vmatpush1.msra.mxu0 0.0
      %3647 = vmatprep.subr.mxu0 0.0
      %3648 = vmatpush1.msra.mxu0 0.0
      %3649 = vmatprep.subr.mxu0 0.0
      %3650 = vmatpush1.msra.mxu0 0.0
      %3651 = vmatprep.subr.mxu0 0.0
      %3652 = vmatpush1.msra.mxu0 0.0
      %3653 = vmatprep.subr.mxu0 0.0
      %3654 = vmatpush1.msra.mxu0 0.0
      %3655 = vmatprep.subr.mxu0 0.0
      %3656 = vmatpush1.msra.mxu0 0.0
      %3657 = vmatprep.subr.mxu0 0.0
      %3658 = vmatpush1.msra.mxu0 0.0
      %3659 = vmatprep.subr.mxu0 0.0
      %3660 = vmatpush1.msra.mxu0 0.0
      %3661 = vmatprep.subr.mxu0 0.0
      %3662 = vmatpush1.msra.mxu0 0.0
      %3663 = vmatprep.subr.mxu0 0.0
      %3664 = vmatpush1.msra.mxu0 0.0
      %3665 = vmatprep.subr.mxu0 0.0
      %3666 = vmatpush1.msra.mxu0 0.0
      %3667 = vmatprep.subr.mxu0 0.0
      %3668 = vmatpush1.msra.mxu0 0.0
      %3669 = vmatprep.subr.mxu0 0.0
      %3670 = vmatpush1.msra.mxu0 0.0
      %3671 = vmatprep.subr.mxu0 0.0
      %3672 = vmatpush1.msra.mxu0 0.0
      %3673 = vmatprep.subr.mxu0 0.0
      %3674 = vmatpush1.msra.mxu0 0.0
      %3675 = vmatprep.subr.mxu0 0.0
      %3676 = vmatpush1.msra.mxu0 0.0
      %3677 = vmatprep.subr.mxu0 0.0
      %3678 = vmatpush1.msra.mxu0 0.0
      %3679 = vmatprep.subr.mxu0 0.0
      %3680 = vmatpush1.msra.mxu0 0.0
      %3681 = vmatprep.subr.mxu0 0.0
      %3682 = vmatpush1.msra.mxu0 0.0
      %3683 = vmatprep.subr.mxu0 0.0
      %3684 = vmatpush1.msra.mxu0 0.0
      %3685 = vmatprep.subr.mxu0 0.0
      %3686 = vmatpush1.msra.mxu0 0.0
      %3687 = vmatprep.subr.mxu0 0.0
      %3688 = vmatpush1.msra.mxu0 0.0
      %3689 = vmatprep.mubr.f32.mxu0 0.0
      %3690 = vmatmul.mubr.f32.gmra.mrb[0].mxu0 %v3623
      %v3691 = vpop.f32.mrb[0].mxu0
      %v3692 = vadd.f32 0.0, %v3691
      %v3693 = vpop.f32.mrb[0].mxu0
      %v3694 = vadd.f32 0.0, %v3693
      %3695 = vdwg.mxu0
      %3696 = vmatprep.subr.mxu0 %v2680
      %3697 = vmatpush1.msra.mxu0 %v2679
      %3698 = vmatprep.subr.mxu0 0.0
      %3699 = vmatpush1.msra.mxu0 0.0
      %3700 = vmatprep.subr.mxu0 0.0
      %3701 = vmatpush1.msra.mxu0 0.0
      %3702 = vmatprep.subr.mxu0 0.0
      %3703 = vmatpush1.msra.mxu0 0.0
      %3704 = vmatprep.subr.mxu0 0.0
      %3705 = vmatpush1.msra.mxu0 0.0
      %3706 = vmatprep.subr.mxu0 0.0
      %3707 = vmatpush1.msra.mxu0 0.0
      %3708 = vmatprep.subr.mxu0 0.0
      %3709 = vmatpush1.msra.mxu0 0.0
      %3710 = vmatprep.subr.mxu0 0.0
      %3711 = vmatpush1.msra.mxu0 0.0
      %3712 = vmatprep.subr.mxu0 0.0
      %3713 = vmatpush1.msra.mxu0 0.0
      %3714 = vmatprep.subr.mxu0 0.0
      %3715 = vmatpush1.msra.mxu0 0.0
      %3716 = vmatprep.subr.mxu0 0.0
      %3717 = vmatpush1.msra.mxu0 0.0
      %3718 = vmatprep.subr.mxu0 0.0
      %3719 = vmatpush1.msra.mxu0 0.0
      %3720 = vmatprep.subr.mxu0 0.0
      %3721 = vmatpush1.msra.mxu0 0.0
      %3722 = vmatprep.subr.mxu0 0.0
      %3723 = vmatpush1.msra.mxu0 0.0
      %3724 = vmatprep.subr.mxu0 0.0
      %3725 = vmatpush1.msra.mxu0 0.0
      %3726 = vmatprep.subr.mxu0 0.0
      %3727 = vmatpush1.msra.mxu0 0.0
      %3728 = vmatprep.subr.mxu0 0.0
      %3729 = vmatpush1.msra.mxu0 0.0
      %3730 = vmatprep.subr.mxu0 0.0
      %3731 = vmatpush1.msra.mxu0 0.0
      %3732 = vmatprep.subr.mxu0 0.0
      %3733 = vmatpush1.msra.mxu0 0.0
      %3734 = vmatprep.subr.mxu0 0.0
      %3735 = vmatpush1.msra.mxu0 0.0
      %3736 = vmatprep.subr.mxu0 0.0
      %3737 = vmatpush1.msra.mxu0 0.0
      %3738 = vmatprep.subr.mxu0 0.0
      %3739 = vmatpush1.msra.mxu0 0.0
      %3740 = vmatprep.subr.mxu0 0.0
      %3741 = vmatpush1.msra.mxu0 0.0
      %3742 = vmatprep.subr.mxu0 0.0
      %3743 = vmatpush1.msra.mxu0 0.0
      %3744 = vmatprep.subr.mxu0 0.0
      %3745 = vmatpush1.msra.mxu0 0.0
      %3746 = vmatprep.subr.mxu0 0.0
      %3747 = vmatpush1.msra.mxu0 0.0
      %3748 = vmatprep.subr.mxu0 0.0
      %3749 = vmatpush1.msra.mxu0 0.0
      %3750 = vmatprep.subr.mxu0 0.0
      %3751 = vmatpush1.msra.mxu0 0.0
      %3752 = vmatprep.subr.mxu0 0.0
      %3753 = vmatpush1.msra.mxu0 0.0
      %3754 = vmatprep.subr.mxu0 0.0
      %3755 = vmatpush1.msra.mxu0 0.0
      %3756 = vmatprep.subr.mxu0 0.0
      %3757 = vmatpush1.msra.mxu0 0.0
      %3758 = vmatprep.subr.mxu0 0.0
      %3759 = vmatpush1.msra.mxu0 0.0
      %3760 = vmatprep.mubr.f32.mxu0 0.0
      %3761 = vmatmul.mubr.f32.gmra.mrb[0].mxu0 %v3623
      %v3762 = vpop.f32.mrb[0].mxu0
      %v3763 = vadd.f32 0.0, %v3762
      %v3764 = vpop.f32.mrb[0].mxu0
      %v3765 = vadd.f32 0.0, %v3764
      %3766 = vdwg.mxu0
      %3767 = vmatprep.subr.mxu0 0.0
      %3768 = vmatpush1.msra.mxu0 %v2681
      %3769 = vmatprep.subr.mxu0 0.0
      %3770 = vmatpush1.msra.mxu0 0.0
      %3771 = vmatprep.subr.mxu0 0.0
      %3772 = vmatpush1.msra.mxu0 0.0
      %3773 = vmatprep.subr.mxu0 0.0
      %3774 = vmatpush1.msra.mxu0 0.0
      %3775 = vmatprep.subr.mxu0 0.0
      %3776 = vmatpush1.msra.mxu0 0.0
      %3777 = vmatprep.subr.mxu0 0.0
      %3778 = vmatpush1.msra.mxu0 0.0
      %3779 = vmatprep.subr.mxu0 0.0
      %3780 = vmatpush1.msra.mxu0 0.0
      %3781 = vmatprep.subr.mxu0 0.0
      %3782 = vmatpush1.msra.mxu0 0.0
      %3783 = vmatprep.subr.mxu0 0.0
      %3784 = vmatpush1.msra.mxu0 0.0
      %3785 = vmatprep.subr.mxu0 0.0
      %3786 = vmatpush1.msra.mxu0 0.0
      %3787 = vmatprep.subr.mxu0 0.0
      %3788 = vmatpush1.msra.mxu0 0.0
      %3789 = vmatprep.subr.mxu0 0.0
      %3790 = vmatpush1.msra.mxu0 0.0
      %3791 = vmatprep.subr.mxu0 0.0
      %3792 = vmatpush1.msra.mxu0 0.0
      %3793 = vmatprep.subr.mxu0 0.0
      %3794 = vmatpush1.msra.mxu0 0.0
      %3795 = vmatprep.subr.mxu0 0.0
      %3796 = vmatpush1.msra.mxu0 0.0
      %3797 = vmatprep.subr.mxu0 0.0
      %3798 = vmatpush1.msra.mxu0 0.0
      %3799 = vmatprep.subr.mxu0 0.0
      %3800 = vmatpush1.msra.mxu0 0.0
      %3801 = vmatprep.subr.mxu0 0.0
      %3802 = vmatpush1.msra.mxu0 0.0
      %3803 = vmatprep.subr.mxu0 0.0
      %3804 = vmatpush1.msra.mxu0 0.0
      %3805 = vmatprep.subr.mxu0 0.0
      %3806 = vmatpush1.msra.mxu0 0.0
      %3807 = vmatprep.subr.mxu0 0.0
      %3808 = vmatpush1.msra.mxu0 0.0
      %3809 = vmatprep.subr.mxu0 0.0
      %3810 = vmatpush1.msra.mxu0 0.0
      %3811 = vmatprep.subr.mxu0 0.0
      %3812 = vmatpush1.msra.mxu0 0.0
      %3813 = vmatprep.subr.mxu0 0.0
      %3814 = vmatpush1.msra.mxu0 0.0
      %3815 = vmatprep.subr.mxu0 0.0
      %3816 = vmatpush1.msra.mxu0 0.0
      %3817 = vmatprep.subr.mxu0 0.0
      %3818 = vmatpush1.msra.mxu0 0.0
      %3819 = vmatprep.subr.mxu0 0.0
      %3820 = vmatpush1.msra.mxu0 0.0
      %3821 = vmatprep.subr.mxu0 0.0
      %3822 = vmatpush1.msra.mxu0 0.0
      %3823 = vmatprep.subr.mxu0 0.0
      %3824 = vmatpush1.msra.mxu0 0.0
      %3825 = vmatprep.subr.mxu0 0.0
      %3826 = vmatpush1.msra.mxu0 0.0
      %3827 = vmatprep.subr.mxu0 0.0
      %3828 = vmatpush1.msra.mxu0 0.0
      %3829 = vmatprep.subr.mxu0 0.0
      %3830 = vmatpush1.msra.mxu0 0.0
      %3831 = vmatprep.mubr.f32.mxu0 0.0
      %3832 = vmatmul.mubr.f32.gmra.mrb[0].mxu0 %v3623
      %v3833 = vpop.f32.mrb[0].mxu0
      %v3834 = vadd.f32 0.0, %v3833
      %v3835 = vpop.f32.mrb[0].mxu0
      %3836 = vdwg.mxu0
      %v3837 = vadd.f32 %v3615, %v3692
      %v3838 = vadd.f32 %v3616, %v3694
      %v3839 = vadd.f32 %v3617, %v3763
      %v3840 = vadd.f32 %v3618, %v3765
      %v3841 = vadd.f32 %v3619, %v3834
      %3842 = vrot.lane.b32.xlu0 %v2677, 127
      %v3843 = vpop.permute.xlu0 %3842
      %3844 = vrot.lane.b32.xlu0 %v2678, 127
      %v3845 = vpop.permute.xlu0 %3844
      %3846 = vrot.lane.b32.xlu0 %v2679, 127
      %v3847 = vpop.permute.xlu0 %3846
      %3848 = vrot.lane.b32.xlu0 %v2680, 127
      %v3849 = vpop.permute.xlu0 %3848
      %3850 = vrot.lane.b32.xlu0 %v2681, 127
      %v3851 = vpop.permute.xlu0 %3850
      %v3852 = vsel %vm1583, %v3849, %v3851
      %v3853 = vsel %vm1583, %v3847, %v3849
      %v3854 = vsel %vm1583, %v3845, %v3847
      %v3855 = vsel %vm1583, %v3843, %v3845
      %v3856 = vsel %vm1583, %v3851, %v3843
      %s3857 = scalar_lea.vmem %s3, 20
      %v3858 = vld [vmem:[%s3857] sm:$0xf]
      %v3860 = vsel %vm2715, %v3858, 0
      %3862 = vmatprep.subr.mxu0 %v3854
      %3863 = vmatpush1.msra.mxu0 %v3855
      %3864 = vmatprep.subr.mxu0 0.0
      %3865 = vmatpush1.msra.mxu0 0.0
      %3866 = vmatprep.subr.mxu0 0.0
      %3867 = vmatpush1.msra.mxu0 0.0
      %3868 = vmatprep.subr.mxu0 0.0
      %3869 = vmatpush1.msra.mxu0 0.0
      %3870 = vmatprep.subr.mxu0 0.0
      %3871 = vmatpush1.msra.mxu0 0.0
      %3872 = vmatprep.subr.mxu0 0.0
      %3873 = vmatpush1.msra.mxu0 0.0
      %3874 = vmatprep.subr.mxu0 0.0
      %3875 = vmatpush1.msra.mxu0 0.0
      %3876 = vmatprep.subr.mxu0 0.0
      %3877 = vmatpush1.msra.mxu0 0.0
      %3878 = vmatprep.subr.mxu0 0.0
      %3879 = vmatpush1.msra.mxu0 0.0
      %3880 = vmatprep.subr.mxu0 0.0
      %3881 = vmatpush1.msra.mxu0 0.0
      %3882 = vmatprep.subr.mxu0 0.0
      %3883 = vmatpush1.msra.mxu0 0.0
      %3884 = vmatprep.subr.mxu0 0.0
      %3885 = vmatpush1.msra.mxu0 0.0
      %3886 = vmatprep.subr.mxu0 0.0
      %3887 = vmatpush1.msra.mxu0 0.0
      %3888 = vmatprep.subr.mxu0 0.0
      %3889 = vmatpush1.msra.mxu0 0.0
      %3890 = vmatprep.subr.mxu0 0.0
      %3891 = vmatpush1.msra.mxu0 0.0
      %3892 = vmatprep.subr.mxu0 0.0
      %3893 = vmatpush1.msra.mxu0 0.0
      %3894 = vmatprep.subr.mxu0 0.0
      %3895 = vmatpush1.msra.mxu0 0.0
      %3896 = vmatprep.subr.mxu0 0.0
      %3897 = vmatpush1.msra.mxu0 0.0
      %3898 = vmatprep.subr.mxu0 0.0
      %3899 = vmatpush1.msra.mxu0 0.0
      %3900 = vmatprep.subr.mxu0 0.0
      %3901 = vmatpush1.msra.mxu0 0.0
      %3902 = vmatprep.subr.mxu0 0.0
      %3903 = vmatpush1.msra.mxu0 0.0
      %3904 = vmatprep.subr.mxu0 0.0
      %3905 = vmatpush1.msra.mxu0 0.0
      %3906 = vmatprep.subr.mxu0 0.0
      %3907 = vmatpush1.msra.mxu0 0.0
      %3908 = vmatprep.subr.mxu0 0.0
      %3909 = vmatpush1.msra.mxu0 0.0
      %3910 = vmatprep.subr.mxu0 0.0
      %3911 = vmatpush1.msra.mxu0 0.0
      %3912 = vmatprep.subr.mxu0 0.0
      %3913 = vmatpush1.msra.mxu0 0.0
      %3914 = vmatprep.subr.mxu0 0.0
      %3915 = vmatpush1.msra.mxu0 0.0
      %3916 = vmatprep.subr.mxu0 0.0
      %3917 = vmatpush1.msra.mxu0 0.0
      %3918 = vmatprep.subr.mxu0 0.0
      %3919 = vmatpush1.msra.mxu0 0.0
      %3920 = vmatprep.subr.mxu0 0.0
      %3921 = vmatpush1.msra.mxu0 0.0
      %3922 = vmatprep.subr.mxu0 0.0
      %3923 = vmatpush1.msra.mxu0 0.0
      %3924 = vmatprep.subr.mxu0 0.0
      %3925 = vmatpush1.msra.mxu0 0.0
      %3926 = vmatprep.mubr.f32.mxu0 0.0
      %3927 = vmatmul.mubr.f32.gmra.mrb[0].mxu0 %v3860
      %v3928 = vpop.f32.mrb[0].mxu0
      %v3929 = vadd.f32 0.0, %v3928
      %v3930 = vpop.f32.mrb[0].mxu0
      %v3931 = vadd.f32 0.0, %v3930
      %3932 = vdwg.mxu0
      %3933 = vmatprep.subr.mxu0 %v3852
      %3934 = vmatpush1.msra.mxu0 %v3853
      %3935 = vmatprep.subr.mxu0 0.0
      %3936 = vmatpush1.msra.mxu0 0.0
      %3937 = vmatprep.subr.mxu0 0.0
      %3938 = vmatpush1.msra.mxu0 0.0
      %3939 = vmatprep.subr.mxu0 0.0
      %3940 = vmatpush1.msra.mxu0 0.0
      %3941 = vmatprep.subr.mxu0 0.0
      %3942 = vmatpush1.msra.mxu0 0.0
      %3943 = vmatprep.subr.mxu0 0.0
      %3944 = vmatpush1.msra.mxu0 0.0
      %3945 = vmatprep.subr.mxu0 0.0
      %3946 = vmatpush1.msra.mxu0 0.0
      %3947 = vmatprep.subr.mxu0 0.0
      %3948 = vmatpush1.msra.mxu0 0.0
      %3949 = vmatprep.subr.mxu0 0.0
      %3950 = vmatpush1.msra.mxu0 0.0
      %3951 = vmatprep.subr.mxu0 0.0
      %3952 = vmatpush1.msra.mxu0 0.0
      %3953 = vmatprep.subr.mxu0 0.0
      %3954 = vmatpush1.msra.mxu0 0.0
      %3955 = vmatprep.subr.mxu0 0.0
      %3956 = vmatpush1.msra.mxu0 0.0
      %3957 = vmatprep.subr.mxu0 0.0
      %3958 = vmatpush1.msra.mxu0 0.0
      %3959 = vmatprep.subr.mxu0 0.0
      %3960 = vmatpush1.msra.mxu0 0.0
      %3961 = vmatprep.subr.mxu0 0.0
      %3962 = vmatpush1.msra.mxu0 0.0
      %3963 = vmatprep.subr.mxu0 0.0
      %3964 = vmatpush1.msra.mxu0 0.0
      %3965 = vmatprep.subr.mxu0 0.0
      %3966 = vmatpush1.msra.mxu0 0.0
      %3967 = vmatprep.subr.mxu0 0.0
      %3968 = vmatpush1.msra.mxu0 0.0
      %3969 = vmatprep.subr.mxu0 0.0
      %3970 = vmatpush1.msra.mxu0 0.0
      %3971 = vmatprep.subr.mxu0 0.0
      %3972 = vmatpush1.msra.mxu0 0.0
      %3973 = vmatprep.subr.mxu0 0.0
      %3974 = vmatpush1.msra.mxu0 0.0
      %3975 = vmatprep.subr.mxu0 0.0
      %3976 = vmatpush1.msra.mxu0 0.0
      %3977 = vmatprep.subr.mxu0 0.0
      %3978 = vmatpush1.msra.mxu0 0.0
      %3979 = vmatprep.subr.mxu0 0.0
      %3980 = vmatpush1.msra.mxu0 0.0
      %3981 = vmatprep.subr.mxu0 0.0
      %3982 = vmatpush1.msra.mxu0 0.0
      %3983 = vmatprep.subr.mxu0 0.0
      %3984 = vmatpush1.msra.mxu0 0.0
      %3985 = vmatprep.subr.mxu0 0.0
      %3986 = vmatpush1.msra.mxu0 0.0
      %3987 = vmatprep.subr.mxu0 0.0
      %3988 = vmatpush1.msra.mxu0 0.0
      %3989 = vmatprep.subr.mxu0 0.0
      %3990 = vmatpush1.msra.mxu0 0.0
      %3991 = vmatprep.subr.mxu0 0.0
      %3992 = vmatpush1.msra.mxu0 0.0
      %3993 = vmatprep.subr.mxu0 0.0
      %3994 = vmatpush1.msra.mxu0 0.0
      %3995 = vmatprep.subr.mxu0 0.0
      %3996 = vmatpush1.msra.mxu0 0.0
      %3997 = vmatprep.mubr.f32.mxu0 0.0
      %3998 = vmatmul.mubr.f32.gmra.mrb[0].mxu0 %v3860
      %v3999 = vpop.f32.mrb[0].mxu0
      %v4000 = vadd.f32 0.0, %v3999
      %v4001 = vpop.f32.mrb[0].mxu0
      %v4002 = vadd.f32 0.0, %v4001
      %4003 = vdwg.mxu0
      %4004 = vmatprep.subr.mxu0 0.0
      %4005 = vmatpush1.msra.mxu0 %v3856
      %4006 = vmatprep.subr.mxu0 0.0
      %4007 = vmatpush1.msra.mxu0 0.0
      %4008 = vmatprep.subr.mxu0 0.0
      %4009 = vmatpush1.msra.mxu0 0.0
      %4010 = vmatprep.subr.mxu0 0.0
      %4011 = vmatpush1.msra.mxu0 0.0
      %4012 = vmatprep.subr.mxu0 0.0
      %4013 = vmatpush1.msra.mxu0 0.0
      %4014 = vmatprep.subr.mxu0 0.0
      %4015 = vmatpush1.msra.mxu0 0.0
      %4016 = vmatprep.subr.mxu0 0.0
      %4017 = vmatpush1.msra.mxu0 0.0
      %4018 = vmatprep.subr.mxu0 0.0
      %4019 = vmatpush1.msra.mxu0 0.0
      %4020 = vmatprep.subr.mxu0 0.0
      %4021 = vmatpush1.msra.mxu0 0.0
      %4022 = vmatprep.subr.mxu0 0.0
      %4023 = vmatpush1.msra.mxu0 0.0
      %4024 = vmatprep.subr.mxu0 0.0
      %4025 = vmatpush1.msra.mxu0 0.0
      %4026 = vmatprep.subr.mxu0 0.0
      %4027 = vmatpush1.msra.mxu0 0.0
      %4028 = vmatprep.subr.mxu0 0.0
      %4029 = vmatpush1.msra.mxu0 0.0
      %4030 = vmatprep.subr.mxu0 0.0
      %4031 = vmatpush1.msra.mxu0 0.0
      %4032 = vmatprep.subr.mxu0 0.0
      %4033 = vmatpush1.msra.mxu0 0.0
      %4034 = vmatprep.subr.mxu0 0.0
      %4035 = vmatpush1.msra.mxu0 0.0
      %4036 = vmatprep.subr.mxu0 0.0
      %4037 = vmatpush1.msra.mxu0 0.0
      %4038 = vmatprep.subr.mxu0 0.0
      %4039 = vmatpush1.msra.mxu0 0.0
      %4040 = vmatprep.subr.mxu0 0.0
      %4041 = vmatpush1.msra.mxu0 0.0
      %4042 = vmatprep.subr.mxu0 0.0
      %4043 = vmatpush1.msra.mxu0 0.0
      %4044 = vmatprep.subr.mxu0 0.0
      %4045 = vmatpush1.msra.mxu0 0.0
      %4046 = vmatprep.subr.mxu0 0.0
      %4047 = vmatpush1.msra.mxu0 0.0
      %4048 = vmatprep.subr.mxu0 0.0
      %4049 = vmatpush1.msra.mxu0 0.0
      %4050 = vmatprep.subr.mxu0 0.0
      %4051 = vmatpush1.msra.mxu0 0.0
      %4052 = vmatprep.subr.mxu0 0.0
      %4053 = vmatpush1.msra.mxu0 0.0
      %4054 = vmatprep.subr.mxu0 0.0
      %4055 = vmatpush1.msra.mxu0 0.0
      %4056 = vmatprep.subr.mxu0 0.0
      %4057 = vmatpush1.msra.mxu0 0.0
      %4058 = vmatprep.subr.mxu0 0.0
      %4059 = vmatpush1.msra.mxu0 0.0
      %4060 = vmatprep.subr.mxu0 0.0
      %4061 = vmatpush1.msra.mxu0 0.0
      %4062 = vmatprep.subr.mxu0 0.0
      %4063 = vmatpush1.msra.mxu0 0.0
      %4064 = vmatprep.subr.mxu0 0.0
      %4065 = vmatpush1.msra.mxu0 0.0
      %4066 = vmatprep.subr.mxu0 0.0
      %4067 = vmatpush1.msra.mxu0 0.0
      %4068 = vmatprep.mubr.f32.mxu0 0.0
      %4069 = vmatmul.mubr.f32.gmra.mrb[0].mxu0 %v3860
      %v4070 = vpop.f32.mrb[0].mxu0
      %v4071 = vadd.f32 0.0, %v4070
      %v4072 = vpop.f32.mrb[0].mxu0
      %4073 = vdwg.mxu0
      %v4074 = vadd.f32 %v3837, %v3929
      %v4075 = vadd.f32 %v3838, %v3931
      %v4076 = vadd.f32 %v3839, %v4000
      %v4077 = vadd.f32 %v3840, %v4002
      %v4078 = vadd.f32 %v3841, %v4071
      %4079 = vrot.lane.b32.xlu0 %v2677, 95
      %v4080 = vpop.permute.xlu0 %4079
      %4081 = vrot.lane.b32.xlu0 %v2678, 95
      %v4082 = vpop.permute.xlu0 %4081
      %4083 = vrot.lane.b32.xlu0 %v2679, 95
      %v4084 = vpop.permute.xlu0 %4083
      %4085 = vrot.lane.b32.xlu0 %v2680, 95
      %v4086 = vpop.permute.xlu0 %4085
      %4087 = vrot.lane.b32.xlu0 %v2681, 95
      %v4088 = vpop.permute.xlu0 %4087
      %v4089 = vsel %vm1851, %v4086, %v4088
      %v4090 = vsel %vm1851, %v4084, %v4086
      %v4091 = vsel %vm1851, %v4082, %v4084
      %v4092 = vsel %vm1851, %v4080, %v4082
      %v4093 = vsel %vm1851, %v4088, %v4080
      %s4094 = scalar_lea.vmem %s3, 24
      %v4095 = vld [vmem:[%s4094] sm:$0xf]
      %v4097 = vsel %vm2715, %v4095, 0
      %4099 = vmatprep.subr.mxu0 %v4091
      %4100 = vmatpush1.msra.mxu0 %v4092
      %4101 = vmatprep.subr.mxu0 0.0
      %4102 = vmatpush1.msra.mxu0 0.0
      %4103 = vmatprep.subr.mxu0 0.0
      %4104 = vmatpush1.msra.mxu0 0.0
      %4105 = vmatprep.subr.mxu0 0.0
      %4106 = vmatpush1.msra.mxu0 0.0
      %4107 = vmatprep.subr.mxu0 0.0
      %4108 = vmatpush1.msra.mxu0 0.0
      %4109 = vmatprep.subr.mxu0 0.0
      %4110 = vmatpush1.msra.mxu0 0.0
      %4111 = vmatprep.subr.mxu0 0.0
      %4112 = vmatpush1.msra.mxu0 0.0
      %4113 = vmatprep.subr.mxu0 0.0
      %4114 = vmatpush1.msra.mxu0 0.0
      %4115 = vmatprep.subr.mxu0 0.0
      %4116 = vmatpush1.msra.mxu0 0.0
      %4117 = vmatprep.subr.mxu0 0.0
      %4118 = vmatpush1.msra.mxu0 0.0
      %4119 = vmatprep.subr.mxu0 0.0
      %4120 = vmatpush1.msra.mxu0 0.0
      %4121 = vmatprep.subr.mxu0 0.0
      %4122 = vmatpush1.msra.mxu0 0.0
      %4123 = vmatprep.subr.mxu0 0.0
      %4124 = vmatpush1.msra.mxu0 0.0
      %4125 = vmatprep.subr.mxu0 0.0
      %4126 = vmatpush1.msra.mxu0 0.0
      %4127 = vmatprep.subr.mxu0 0.0
      %4128 = vmatpush1.msra.mxu0 0.0
      %4129 = vmatprep.subr.mxu0 0.0
      %4130 = vmatpush1.msra.mxu0 0.0
      %4131 = vmatprep.subr.mxu0 0.0
      %4132 = vmatpush1.msra.mxu0 0.0
      %4133 = vmatprep.subr.mxu0 0.0
      %4134 = vmatpush1.msra.mxu0 0.0
      %4135 = vmatprep.subr.mxu0 0.0
      %4136 = vmatpush1.msra.mxu0 0.0
      %4137 = vmatprep.subr.mxu0 0.0
      %4138 = vmatpush1.msra.mxu0 0.0
      %4139 = vmatprep.subr.mxu0 0.0
      %4140 = vmatpush1.msra.mxu0 0.0
      %4141 = vmatprep.subr.mxu0 0.0
      %4142 = vmatpush1.msra.mxu0 0.0
      %4143 = vmatprep.subr.mxu0 0.0
      %4144 = vmatpush1.msra.mxu0 0.0
      %4145 = vmatprep.subr.mxu0 0.0
      %4146 = vmatpush1.msra.mxu0 0.0
      %4147 = vmatprep.subr.mxu0 0.0
      %4148 = vmatpush1.msra.mxu0 0.0
      %4149 = vmatprep.subr.mxu0 0.0
      %4150 = vmatpush1.msra.mxu0 0.0
      %4151 = vmatprep.subr.mxu0 0.0
      %4152 = vmatpush1.msra.mxu0 0.0
      %4153 = vmatprep.subr.mxu0 0.0
      %4154 = vmatpush1.msra.mxu0 0.0
      %4155 = vmatprep.subr.mxu0 0.0
      %4156 = vmatpush1.msra.mxu0 0.0
      %4157 = vmatprep.subr.mxu0 0.0
      %4158 = vmatpush1.msra.mxu0 0.0
      %4159 = vmatprep.subr.mxu0 0.0
      %4160 = vmatpush1.msra.mxu0 0.0
      %4161 = vmatprep.subr.mxu0 0.0
      %4162 = vmatpush1.msra.mxu0 0.0
      %4163 = vmatprep.mubr.f32.mxu0 0.0
      %4164 = vmatmul.mubr.f32.gmra.mrb[0].mxu0 %v4097
      %v4165 = vpop.f32.mrb[0].mxu0
      %v4166 = vadd.f32 0.0, %v4165
      %v4167 = vpop.f32.mrb[0].mxu0
      %v4168 = vadd.f32 0.0, %v4167
      %4169 = vdwg.mxu0
      %4170 = vmatprep.subr.mxu0 %v4089
      %4171 = vmatpush1.msra.mxu0 %v4090
      %4172 = vmatprep.subr.mxu0 0.0
      %4173 = vmatpush1.msra.mxu0 0.0
      %4174 = vmatprep.subr.mxu0 0.0
      %4175 = vmatpush1.msra.mxu0 0.0
      %4176 = vmatprep.subr.mxu0 0.0
      %4177 = vmatpush1.msra.mxu0 0.0
      %4178 = vmatprep.subr.mxu0 0.0
      %4179 = vmatpush1.msra.mxu0 0.0
      %4180 = vmatprep.subr.mxu0 0.0
      %4181 = vmatpush1.msra.mxu0 0.0
      %4182 = vmatprep.subr.mxu0 0.0
      %4183 = vmatpush1.msra.mxu0 0.0
      %4184 = vmatprep.subr.mxu0 0.0
      %4185 = vmatpush1.msra.mxu0 0.0
      %4186 = vmatprep.subr.mxu0 0.0
      %4187 = vmatpush1.msra.mxu0 0.0
      %4188 = vmatprep.subr.mxu0 0.0
      %4189 = vmatpush1.msra.mxu0 0.0
      %4190 = vmatprep.subr.mxu0 0.0
      %4191 = vmatpush1.msra.mxu0 0.0
      %4192 = vmatprep.subr.mxu0 0.0
      %4193 = vmatpush1.msra.mxu0 0.0
      %4194 = vmatprep.subr.mxu0 0.0
      %4195 = vmatpush1.msra.mxu0 0.0
      %4196 = vmatprep.subr.mxu0 0.0
      %4197 = vmatpush1.msra.mxu0 0.0
      %4198 = vmatprep.subr.mxu0 0.0
      %4199 = vmatpush1.msra.mxu0 0.0
      %4200 = vmatprep.subr.mxu0 0.0
      %4201 = vmatpush1.msra.mxu0 0.0
      %4202 = vmatprep.subr.mxu0 0.0
      %4203 = vmatpush1.msra.mxu0 0.0
      %4204 = vmatprep.subr.mxu0 0.0
      %4205 = vmatpush1.msra.mxu0 0.0
      %4206 = vmatprep.subr.mxu0 0.0
      %4207 = vmatpush1.msra.mxu0 0.0
      %4208 = vmatprep.subr.mxu0 0.0
      %4209 = vmatpush1.msra.mxu0 0.0
      %4210 = vmatprep.subr.mxu0 0.0
      %4211 = vmatpush1.msra.mxu0 0.0
      %4212 = vmatprep.subr.mxu0 0.0
      %4213 = vmatpush1.msra.mxu0 0.0
      %4214 = vmatprep.subr.mxu0 0.0
      %4215 = vmatpush1.msra.mxu0 0.0
      %4216 = vmatprep.subr.mxu0 0.0
      %4217 = vmatpush1.msra.mxu0 0.0
      %4218 = vmatprep.subr.mxu0 0.0
      %4219 = vmatpush1.msra.mxu0 0.0
      %4220 = vmatprep.subr.mxu0 0.0
      %4221 = vmatpush1.msra.mxu0 0.0
      %4222 = vmatprep.subr.mxu0 0.0
      %4223 = vmatpush1.msra.mxu0 0.0
      %4224 = vmatprep.subr.mxu0 0.0
      %4225 = vmatpush1.msra.mxu0 0.0
      %4226 = vmatprep.subr.mxu0 0.0
      %4227 = vmatpush1.msra.mxu0 0.0
      %4228 = vmatprep.subr.mxu0 0.0
      %4229 = vmatpush1.msra.mxu0 0.0
      %4230 = vmatprep.subr.mxu0 0.0
      %4231 = vmatpush1.msra.mxu0 0.0
      %4232 = vmatprep.subr.mxu0 0.0
      %4233 = vmatpush1.msra.mxu0 0.0
      %4234 = vmatprep.mubr.f32.mxu0 0.0
      %4235 = vmatmul.mubr.f32.gmra.mrb[0].mxu0 %v4097
      %v4236 = vpop.f32.mrb[0].mxu0
      %v4237 = vadd.f32 0.0, %v4236
      %v4238 = vpop.f32.mrb[0].mxu0
      %v4239 = vadd.f32 0.0, %v4238
      %4240 = vdwg.mxu0
      %4241 = vmatprep.subr.mxu0 0.0
      %4242 = vmatpush1.msra.mxu0 %v4093
      %4243 = vmatprep.subr.mxu0 0.0
      %4244 = vmatpush1.msra.mxu0 0.0
      %4245 = vmatprep.subr.mxu0 0.0
      %4246 = vmatpush1.msra.mxu0 0.0
      %4247 = vmatprep.subr.mxu0 0.0
      %4248 = vmatpush1.msra.mxu0 0.0
      %4249 = vmatprep.subr.mxu0 0.0
      %4250 = vmatpush1.msra.mxu0 0.0
      %4251 = vmatprep.subr.mxu0 0.0
      %4252 = vmatpush1.msra.mxu0 0.0
      %4253 = vmatprep.subr.mxu0 0.0
      %4254 = vmatpush1.msra.mxu0 0.0
      %4255 = vmatprep.subr.mxu0 0.0
      %4256 = vmatpush1.msra.mxu0 0.0
      %4257 = vmatprep.subr.mxu0 0.0
      %4258 = vmatpush1.msra.mxu0 0.0
      %4259 = vmatprep.subr.mxu0 0.0
      %4260 = vmatpush1.msra.mxu0 0.0
      %4261 = vmatprep.subr.mxu0 0.0
      %4262 = vmatpush1.msra.mxu0 0.0
      %4263 = vmatprep.subr.mxu0 0.0
      %4264 = vmatpush1.msra.mxu0 0.0
      %4265 = vmatprep.subr.mxu0 0.0
      %4266 = vmatpush1.msra.mxu0 0.0
      %4267 = vmatprep.subr.mxu0 0.0
      %4268 = vmatpush1.msra.mxu0 0.0
      %4269 = vmatprep.subr.mxu0 0.0
      %4270 = vmatpush1.msra.mxu0 0.0
      %4271 = vmatprep.subr.mxu0 0.0
      %4272 = vmatpush1.msra.mxu0 0.0
      %4273 = vmatprep.subr.mxu0 0.0
      %4274 = vmatpush1.msra.mxu0 0.0
      %4275 = vmatprep.subr.mxu0 0.0
      %4276 = vmatpush1.msra.mxu0 0.0
      %4277 = vmatprep.subr.mxu0 0.0
      %4278 = vmatpush1.msra.mxu0 0.0
      %4279 = vmatprep.subr.mxu0 0.0
      %4280 = vmatpush1.msra.mxu0 0.0
      %4281 = vmatprep.subr.mxu0 0.0
      %4282 = vmatpush1.msra.mxu0 0.0
      %4283 = vmatprep.subr.mxu0 0.0
      %4284 = vmatpush1.msra.mxu0 0.0
      %4285 = vmatprep.subr.mxu0 0.0
      %4286 = vmatpush1.msra.mxu0 0.0
      %4287 = vmatprep.subr.mxu0 0.0
      %4288 = vmatpush1.msra.mxu0 0.0
      %4289 = vmatprep.subr.mxu0 0.0
      %4290 = vmatpush1.msra.mxu0 0.0
      %4291 = vmatprep.subr.mxu0 0.0
      %4292 = vmatpush1.msra.mxu0 0.0
      %4293 = vmatprep.subr.mxu0 0.0
      %4294 = vmatpush1.msra.mxu0 0.0
      %4295 = vmatprep.subr.mxu0 0.0
      %4296 = vmatpush1.msra.mxu0 0.0
      %4297 = vmatprep.subr.mxu0 0.0
      %4298 = vmatpush1.msra.mxu0 0.0
      %4299 = vmatprep.subr.mxu0 0.0
      %4300 = vmatpush1.msra.mxu0 0.0
      %4301 = vmatprep.subr.mxu0 0.0
      %4302 = vmatpush1.msra.mxu0 0.0
      %4303 = vmatprep.subr.mxu0 0.0
      %4304 = vmatpush1.msra.mxu0 0.0
      %4305 = vmatprep.mubr.f32.mxu0 0.0
      %4306 = vmatmul.mubr.f32.gmra.mrb[0].mxu0 %v4097
      %v4307 = vpop.f32.mrb[0].mxu0
      %v4308 = vadd.f32 0.0, %v4307
      %v4309 = vpop.f32.mrb[0].mxu0
      %4310 = vdwg.mxu0
      %v4311 = vadd.f32 %v4074, %v4166
      %v4312 = vadd.f32 %v4075, %v4168
      %v4313 = vadd.f32 %v4076, %v4237
      %v4314 = vadd.f32 %v4077, %v4239
      %v4315 = vadd.f32 %v4078, %v4308
      %4316 = vrot.lane.b32.xlu0 %v2677, 94
      %v4317 = vpop.permute.xlu0 %4316
      %4318 = vrot.lane.b32.xlu0 %v2678, 94
      %v4319 = vpop.permute.xlu0 %4318
      %4320 = vrot.lane.b32.xlu0 %v2679, 94
      %v4321 = vpop.permute.xlu0 %4320
      %4322 = vrot.lane.b32.xlu0 %v2680, 94
      %v4323 = vpop.permute.xlu0 %4322
      %4324 = vrot.lane.b32.xlu0 %v2681, 94
      %v4325 = vpop.permute.xlu0 %4324
      %v4326 = vsel %vm2119, %v4323, %v4325
      %v4327 = vsel %vm2119, %v4321, %v4323
      %v4328 = vsel %vm2119, %v4319, %v4321
      %v4329 = vsel %vm2119, %v4317, %v4319
      %v4330 = vsel %vm2119, %v4325, %v4317
      %s4331 = scalar_lea.vmem %s3, 28
      %v4332 = vld [vmem:[%s4331] sm:$0xf]
      %v4334 = vsel %vm2715, %v4332, 0
      %4336 = vmatprep.subr.mxu0 %v4328
      %4337 = vmatpush1.msra.mxu0 %v4329
      %4338 = vmatprep.subr.mxu0 0.0
      %4339 = vmatpush1.msra.mxu0 0.0
      %4340 = vmatprep.subr.mxu0 0.0
      %4341 = vmatpush1.msra.mxu0 0.0
      %4342 = vmatprep.subr.mxu0 0.0
      %4343 = vmatpush1.msra.mxu0 0.0
      %4344 = vmatprep.subr.mxu0 0.0
      %4345 = vmatpush1.msra.mxu0 0.0
      %4346 = vmatprep.subr.mxu0 0.0
      %4347 = vmatpush1.msra.mxu0 0.0
      %4348 = vmatprep.subr.mxu0 0.0
      %4349 = vmatpush1.msra.mxu0 0.0
      %4350 = vmatprep.subr.mxu0 0.0
      %4351 = vmatpush1.msra.mxu0 0.0
      %4352 = vmatprep.subr.mxu0 0.0
      %4353 = vmatpush1.msra.mxu0 0.0
      %4354 = vmatprep.subr.mxu0 0.0
      %4355 = vmatpush1.msra.mxu0 0.0
      %4356 = vmatprep.subr.mxu0 0.0
      %4357 = vmatpush1.msra.mxu0 0.0
      %4358 = vmatprep.subr.mxu0 0.0
      %4359 = vmatpush1.msra.mxu0 0.0
      %4360 = vmatprep.subr.mxu0 0.0
      %4361 = vmatpush1.msra.mxu0 0.0
      %4362 = vmatprep.subr.mxu0 0.0
      %4363 = vmatpush1.msra.mxu0 0.0
      %4364 = vmatprep.subr.mxu0 0.0
      %4365 = vmatpush1.msra.mxu0 0.0
      %4366 = vmatprep.subr.mxu0 0.0
      %4367 = vmatpush1.msra.mxu0 0.0
      %4368 = vmatprep.subr.mxu0 0.0
      %4369 = vmatpush1.msra.mxu0 0.0
      %4370 = vmatprep.subr.mxu0 0.0
      %4371 = vmatpush1.msra.mxu0 0.0
      %4372 = vmatprep.subr.mxu0 0.0
      %4373 = vmatpush1.msra.mxu0 0.0
      %4374 = vmatprep.subr.mxu0 0.0
      %4375 = vmatpush1.msra.mxu0 0.0
      %4376 = vmatprep.subr.mxu0 0.0
      %4377 = vmatpush1.msra.mxu0 0.0
      %4378 = vmatprep.subr.mxu0 0.0
      %4379 = vmatpush1.msra.mxu0 0.0
      %4380 = vmatprep.subr.mxu0 0.0
      %4381 = vmatpush1.msra.mxu0 0.0
      %4382 = vmatprep.subr.mxu0 0.0
      %4383 = vmatpush1.msra.mxu0 0.0
      %4384 = vmatprep.subr.mxu0 0.0
      %4385 = vmatpush1.msra.mxu0 0.0
      %4386 = vmatprep.subr.mxu0 0.0
      %4387 = vmatpush1.msra.mxu0 0.0
      %4388 = vmatprep.subr.mxu0 0.0
      %4389 = vmatpush1.msra.mxu0 0.0
      %4390 = vmatprep.subr.mxu0 0.0
      %4391 = vmatpush1.msra.mxu0 0.0
      %4392 = vmatprep.subr.mxu0 0.0
      %4393 = vmatpush1.msra.mxu0 0.0
      %4394 = vmatprep.subr.mxu0 0.0
      %4395 = vmatpush1.msra.mxu0 0.0
      %4396 = vmatprep.subr.mxu0 0.0
      %4397 = vmatpush1.msra.mxu0 0.0
      %4398 = vmatprep.subr.mxu0 0.0
      %4399 = vmatpush1.msra.mxu0 0.0
      %4400 = vmatprep.mubr.f32.mxu0 0.0
      %4401 = vmatmul.mubr.f32.gmra.mrb[0].mxu0 %v4334
      %v4402 = vpop.f32.mrb[0].mxu0
      %v4403 = vadd.f32 0.0, %v4402
      %v4404 = vpop.f32.mrb[0].mxu0
      %v4405 = vadd.f32 0.0, %v4404
      %4406 = vdwg.mxu0
      %4407 = vmatprep.subr.mxu0 %v4326
      %4408 = vmatpush1.msra.mxu0 %v4327
      %4409 = vmatprep.subr.mxu0 0.0
      %4410 = vmatpush1.msra.mxu0 0.0
      %4411 = vmatprep.subr.mxu0 0.0
      %4412 = vmatpush1.msra.mxu0 0.0
      %4413 = vmatprep.subr.mxu0 0.0
      %4414 = vmatpush1.msra.mxu0 0.0
      %4415 = vmatprep.subr.mxu0 0.0
      %4416 = vmatpush1.msra.mxu0 0.0
      %4417 = vmatprep.subr.mxu0 0.0
      %4418 = vmatpush1.msra.mxu0 0.0
      %4419 = vmatprep.subr.mxu0 0.0
      %4420 = vmatpush1.msra.mxu0 0.0
      %4421 = vmatprep.subr.mxu0 0.0
      %4422 = vmatpush1.msra.mxu0 0.0
      %4423 = vmatprep.subr.mxu0 0.0
      %4424 = vmatpush1.msra.mxu0 0.0
      %4425 = vmatprep.subr.mxu0 0.0
      %4426 = vmatpush1.msra.mxu0 0.0
      %4427 = vmatprep.subr.mxu0 0.0
      %4428 = vmatpush1.msra.mxu0 0.0
      %4429 = vmatprep.subr.mxu0 0.0
      %4430 = vmatpush1.msra.mxu0 0.0
      %4431 = vmatprep.subr.mxu0 0.0
      %4432 = vmatpush1.msra.mxu0 0.0
      %4433 = vmatprep.subr.mxu0 0.0
      %4434 = vmatpush1.msra.mxu0 0.0
      %4435 = vmatprep.subr.mxu0 0.0
      %4436 = vmatpush1.msra.mxu0 0.0
      %4437 = vmatprep.subr.mxu0 0.0
      %4438 = vmatpush1.msra.mxu0 0.0
      %4439 = vmatprep.subr.mxu0 0.0
      %4440 = vmatpush1.msra.mxu0 0.0
      %4441 = vmatprep.subr.mxu0 0.0
      %4442 = vmatpush1.msra.mxu0 0.0
      %4443 = vmatprep.subr.mxu0 0.0
      %4444 = vmatpush1.msra.mxu0 0.0
      %4445 = vmatprep.subr.mxu0 0.0
      %4446 = vmatpush1.msra.mxu0 0.0
      %4447 = vmatprep.subr.mxu0 0.0
      %4448 = vmatpush1.msra.mxu0 0.0
      %4449 = vmatprep.subr.mxu0 0.0
      %4450 = vmatpush1.msra.mxu0 0.0
      %4451 = vmatprep.subr.mxu0 0.0
      %4452 = vmatpush1.msra.mxu0 0.0
      %4453 = vmatprep.subr.mxu0 0.0
      %4454 = vmatpush1.msra.mxu0 0.0
      %4455 = vmatprep.subr.mxu0 0.0
      %4456 = vmatpush1.msra.mxu0 0.0
      %4457 = vmatprep.subr.mxu0 0.0
      %4458 = vmatpush1.msra.mxu0 0.0
      %4459 = vmatprep.subr.mxu0 0.0
      %4460 = vmatpush1.msra.mxu0 0.0
      %4461 = vmatprep.subr.mxu0 0.0
      %4462 = vmatpush1.msra.mxu0 0.0
      %4463 = vmatprep.subr.mxu0 0.0
      %4464 = vmatpush1.msra.mxu0 0.0
      %4465 = vmatprep.subr.mxu0 0.0
      %4466 = vmatpush1.msra.mxu0 0.0
      %4467 = vmatprep.subr.mxu0 0.0
      %4468 = vmatpush1.msra.mxu0 0.0
      %4469 = vmatprep.subr.mxu0 0.0
      %4470 = vmatpush1.msra.mxu0 0.0
      %4471 = vmatprep.mubr.f32.mxu0 0.0
      %4472 = vmatmul.mubr.f32.gmra.mrb[0].mxu0 %v4334
      %v4473 = vpop.f32.mrb[0].mxu0
      %v4474 = vadd.f32 0.0, %v4473
      %v4475 = vpop.f32.mrb[0].mxu0
      %v4476 = vadd.f32 0.0, %v4475
      %4477 = vdwg.mxu0
      %4478 = vmatprep.subr.mxu0 0.0
      %4479 = vmatpush1.msra.mxu0 %v4330
      %4480 = vmatprep.subr.mxu0 0.0
      %4481 = vmatpush1.msra.mxu0 0.0
      %4482 = vmatprep.subr.mxu0 0.0
      %4483 = vmatpush1.msra.mxu0 0.0
      %4484 = vmatprep.subr.mxu0 0.0
      %4485 = vmatpush1.msra.mxu0 0.0
      %4486 = vmatprep.subr.mxu0 0.0
      %4487 = vmatpush1.msra.mxu0 0.0
      %4488 = vmatprep.subr.mxu0 0.0
      %4489 = vmatpush1.msra.mxu0 0.0
      %4490 = vmatprep.subr.mxu0 0.0
      %4491 = vmatpush1.msra.mxu0 0.0
      %4492 = vmatprep.subr.mxu0 0.0
      %4493 = vmatpush1.msra.mxu0 0.0
      %4494 = vmatprep.subr.mxu0 0.0
      %4495 = vmatpush1.msra.mxu0 0.0
      %4496 = vmatprep.subr.mxu0 0.0
      %4497 = vmatpush1.msra.mxu0 0.0
      %4498 = vmatprep.subr.mxu0 0.0
      %4499 = vmatpush1.msra.mxu0 0.0
      %4500 = vmatprep.subr.mxu0 0.0
      %4501 = vmatpush1.msra.mxu0 0.0
      %4502 = vmatprep.subr.mxu0 0.0
      %4503 = vmatpush1.msra.mxu0 0.0
      %4504 = vmatprep.subr.mxu0 0.0
      %4505 = vmatpush1.msra.mxu0 0.0
      %4506 = vmatprep.subr.mxu0 0.0
      %4507 = vmatpush1.msra.mxu0 0.0
      %4508 = vmatprep.subr.mxu0 0.0
      %4509 = vmatpush1.msra.mxu0 0.0
      %4510 = vmatprep.subr.mxu0 0.0
      %4511 = vmatpush1.msra.mxu0 0.0
      %4512 = vmatprep.subr.mxu0 0.0
      %4513 = vmatpush1.msra.mxu0 0.0
      %4514 = vmatprep.subr.mxu0 0.0
      %4515 = vmatpush1.msra.mxu0 0.0
      %4516 = vmatprep.subr.mxu0 0.0
      %4517 = vmatpush1.msra.mxu0 0.0
      %4518 = vmatprep.subr.mxu0 0.0
      %4519 = vmatpush1.msra.mxu0 0.0
      %4520 = vmatprep.subr.mxu0 0.0
      %4521 = vmatpush1.msra.mxu0 0.0
      %4522 = vmatprep.subr.mxu0 0.0
      %4523 = vmatpush1.msra.mxu0 0.0
      %4524 = vmatprep.subr.mxu0 0.0
      %4525 = vmatpush1.msra.mxu0 0.0
      %4526 = vmatprep.subr.mxu0 0.0
      %4527 = vmatpush1.msra.mxu0 0.0
      %4528 = vmatprep.subr.mxu0 0.0
      %4529 = vmatpush1.msra.mxu0 0.0
      %4530 = vmatprep.subr.mxu0 0.0
      %4531 = vmatpush1.msra.mxu0 0.0
      %4532 = vmatprep.subr.mxu0 0.0
      %4533 = vmatpush1.msra.mxu0 0.0
      %4534 = vmatprep.subr.mxu0 0.0
      %4535 = vmatpush1.msra.mxu0 0.0
      %4536 = vmatprep.subr.mxu0 0.0
      %4537 = vmatpush1.msra.mxu0 0.0
      %4538 = vmatprep.subr.mxu0 0.0
      %4539 = vmatpush1.msra.mxu0 0.0
      %4540 = vmatprep.subr.mxu0 0.0
      %4541 = vmatpush1.msra.mxu0 0.0
      %4542 = vmatprep.mubr.f32.mxu0 0.0
      %4543 = vmatmul.mubr.f32.gmra.mrb[0].mxu0 %v4334
      %v4544 = vpop.f32.mrb[0].mxu0
      %v4545 = vadd.f32 0.0, %v4544
      %v4546 = vpop.f32.mrb[0].mxu0
      %4547 = vdwg.mxu0
      %v4548 = vadd.f32 %v4311, %v4403
      %v4549 = vadd.f32 %v4312, %v4405
      %v4550 = vadd.f32 %v4313, %v4474
      %v4551 = vadd.f32 %v4314, %v4476
      %v4552 = vadd.f32 %v4315, %v4545
      %4553 = vrot.lane.b32.xlu0 %v2677, 93
      %v4554 = vpop.permute.xlu0 %4553
      %4555 = vrot.lane.b32.xlu0 %v2678, 93
      %v4556 = vpop.permute.xlu0 %4555
      %4557 = vrot.lane.b32.xlu0 %v2679, 93
      %v4558 = vpop.permute.xlu0 %4557
      %4559 = vrot.lane.b32.xlu0 %v2680, 93
      %v4560 = vpop.permute.xlu0 %4559
      %4561 = vrot.lane.b32.xlu0 %v2681, 93
      %v4562 = vpop.permute.xlu0 %4561
      %v4563 = vsel %vm2387, %v4560, %v4562
      %v4564 = vsel %vm2387, %v4558, %v4560
      %v4565 = vsel %vm2387, %v4556, %v4558
      %v4566 = vsel %vm2387, %v4554, %v4556
      %v4567 = vsel %vm2387, %v4562, %v4554
      %s4568 = scalar_lea.vmem %s3, 32
      %v4569 = vld [vmem:[%s4568] sm:$0xf]
      %v4571 = vsel %vm2715, %v4569, 0
      %4573 = vmatprep.subr.mxu0 %v4565
      %4574 = vmatpush1.msra.mxu0 %v4566
      %4575 = vmatprep.subr.mxu0 0.0
      %4576 = vmatpush1.msra.mxu0 0.0
      %4577 = vmatprep.subr.mxu0 0.0
      %4578 = vmatpush1.msra.mxu0 0.0
      %4579 = vmatprep.subr.mxu0 0.0
      %4580 = vmatpush1.msra.mxu0 0.0
      %4581 = vmatprep.subr.mxu0 0.0
      %4582 = vmatpush1.msra.mxu0 0.0
      %4583 = vmatprep.subr.mxu0 0.0
      %4584 = vmatpush1.msra.mxu0 0.0
      %4585 = vmatprep.subr.mxu0 0.0
      %4586 = vmatpush1.msra.mxu0 0.0
      %4587 = vmatprep.subr.mxu0 0.0
      %4588 = vmatpush1.msra.mxu0 0.0
      %4589 = vmatprep.subr.mxu0 0.0
      %4590 = vmatpush1.msra.mxu0 0.0
      %4591 = vmatprep.subr.mxu0 0.0
      %4592 = vmatpush1.msra.mxu0 0.0
      %4593 = vmatprep.subr.mxu0 0.0
      %4594 = vmatpush1.msra.mxu0 0.0
      %4595 = vmatprep.subr.mxu0 0.0
      %4596 = vmatpush1.msra.mxu0 0.0
      %4597 = vmatprep.subr.mxu0 0.0
      %4598 = vmatpush1.msra.mxu0 0.0
      %4599 = vmatprep.subr.mxu0 0.0
      %4600 = vmatpush1.msra.mxu0 0.0
      %4601 = vmatprep.subr.mxu0 0.0
      %4602 = vmatpush1.msra.mxu0 0.0
      %4603 = vmatprep.subr.mxu0 0.0
      %4604 = vmatpush1.msra.mxu0 0.0
      %4605 = vmatprep.subr.mxu0 0.0
      %4606 = vmatpush1.msra.mxu0 0.0
      %4607 = vmatprep.subr.mxu0 0.0
      %4608 = vmatpush1.msra.mxu0 0.0
      %4609 = vmatprep.subr.mxu0 0.0
      %4610 = vmatpush1.msra.mxu0 0.0
      %4611 = vmatprep.subr.mxu0 0.0
      %4612 = vmatpush1.msra.mxu0 0.0
      %4613 = vmatprep.subr.mxu0 0.0
      %4614 = vmatpush1.msra.mxu0 0.0
      %4615 = vmatprep.subr.mxu0 0.0
      %4616 = vmatpush1.msra.mxu0 0.0
      %4617 = vmatprep.subr.mxu0 0.0
      %4618 = vmatpush1.msra.mxu0 0.0
      %4619 = vmatprep.subr.mxu0 0.0
      %4620 = vmatpush1.msra.mxu0 0.0
      %4621 = vmatprep.subr.mxu0 0.0
      %4622 = vmatpush1.msra.mxu0 0.0
      %4623 = vmatprep.subr.mxu0 0.0
      %4624 = vmatpush1.msra.mxu0 0.0
      %4625 = vmatprep.subr.mxu0 0.0
      %4626 = vmatpush1.msra.mxu0 0.0
      %4627 = vmatprep.subr.mxu0 0.0
      %4628 = vmatpush1.msra.mxu0 0.0
      %4629 = vmatprep.subr.mxu0 0.0
      %4630 = vmatpush1.msra.mxu0 0.0
      %4631 = vmatprep.subr.mxu0 0.0
      %4632 = vmatpush1.msra.mxu0 0.0
      %4633 = vmatprep.subr.mxu0 0.0
      %4634 = vmatpush1.msra.mxu0 0.0
      %4635 = vmatprep.subr.mxu0 0.0
      %4636 = vmatpush1.msra.mxu0 0.0
      %4637 = vmatprep.mubr.f32.mxu0 0.0
      %4638 = vmatmul.mubr.f32.gmra.mrb[0].mxu0 %v4571
      %v4639 = vpop.f32.mrb[0].mxu0
      %v4640 = vadd.f32 0.0, %v4639
      %v4641 = vpop.f32.mrb[0].mxu0
      %v4642 = vadd.f32 0.0, %v4641
      %4643 = vdwg.mxu0
      %4644 = vmatprep.subr.mxu0 %v4563
      %4645 = vmatpush1.msra.mxu0 %v4564
      %4646 = vmatprep.subr.mxu0 0.0
      %4647 = vmatpush1.msra.mxu0 0.0
      %4648 = vmatprep.subr.mxu0 0.0
      %4649 = vmatpush1.msra.mxu0 0.0
      %4650 = vmatprep.subr.mxu0 0.0
      %4651 = vmatpush1.msra.mxu0 0.0
      %4652 = vmatprep.subr.mxu0 0.0
      %4653 = vmatpush1.msra.mxu0 0.0
      %4654 = vmatprep.subr.mxu0 0.0
      %4655 = vmatpush1.msra.mxu0 0.0
      %4656 = vmatprep.subr.mxu0 0.0
      %4657 = vmatpush1.msra.mxu0 0.0
      %4658 = vmatprep.subr.mxu0 0.0
      %4659 = vmatpush1.msra.mxu0 0.0
      %4660 = vmatprep.subr.mxu0 0.0
      %4661 = vmatpush1.msra.mxu0 0.0
      %4662 = vmatprep.subr.mxu0 0.0
      %4663 = vmatpush1.msra.mxu0 0.0
      %4664 = vmatprep.subr.mxu0 0.0
      %4665 = vmatpush1.msra.mxu0 0.0
      %4666 = vmatprep.subr.mxu0 0.0
      %4667 = vmatpush1.msra.mxu0 0.0
      %4668 = vmatprep.subr.mxu0 0.0
      %4669 = vmatpush1.msra.mxu0 0.0
      %4670 = vmatprep.subr.mxu0 0.0
      %4671 = vmatpush1.msra.mxu0 0.0
      %4672 = vmatprep.subr.mxu0 0.0
      %4673 = vmatpush1.msra.mxu0 0.0
      %4674 = vmatprep.subr.mxu0 0.0
      %4675 = vmatpush1.msra.mxu0 0.0
      %4676 = vmatprep.subr.mxu0 0.0
      %4677 = vmatpush1.msra.mxu0 0.0
      %4678 = vmatprep.subr.mxu0 0.0
      %4679 = vmatpush1.msra.mxu0 0.0
      %4680 = vmatprep.subr.mxu0 0.0
      %4681 = vmatpush1.msra.mxu0 0.0
      %4682 = vmatprep.subr.mxu0 0.0
      %4683 = vmatpush1.msra.mxu0 0.0
      %4684 = vmatprep.subr.mxu0 0.0
      %4685 = vmatpush1.msra.mxu0 0.0
      %4686 = vmatprep.subr.mxu0 0.0
      %4687 = vmatpush1.msra.mxu0 0.0
      %4688 = vmatprep.subr.mxu0 0.0
      %4689 = vmatpush1.msra.mxu0 0.0
      %4690 = vmatprep.subr.mxu0 0.0
      %4691 = vmatpush1.msra.mxu0 0.0
      %4692 = vmatprep.subr.mxu0 0.0
      %4693 = vmatpush1.msra.mxu0 0.0
      %4694 = vmatprep.subr.mxu0 0.0
      %4695 = vmatpush1.msra.mxu0 0.0
      %4696 = vmatprep.subr.mxu0 0.0
      %4697 = vmatpush1.msra.mxu0 0.0
      %4698 = vmatprep.subr.mxu0 0.0
      %4699 = vmatpush1.msra.mxu0 0.0
      %4700 = vmatprep.subr.mxu0 0.0
      %4701 = vmatpush1.msra.mxu0 0.0
      %4702 = vmatprep.subr.mxu0 0.0
      %4703 = vmatpush1.msra.mxu0 0.0
      %4704 = vmatprep.subr.mxu0 0.0
      %4705 = vmatpush1.msra.mxu0 0.0
      %4706 = vmatprep.subr.mxu0 0.0
      %4707 = vmatpush1.msra.mxu0 0.0
      %4708 = vmatprep.mubr.f32.mxu0 0.0
      %4709 = vmatmul.mubr.f32.gmra.mrb[0].mxu0 %v4571
      %v4710 = vpop.f32.mrb[0].mxu0
      %v4711 = vadd.f32 0.0, %v4710
      %v4712 = vpop.f32.mrb[0].mxu0
      %v4713 = vadd.f32 0.0, %v4712
      %4714 = vdwg.mxu0
      %4715 = vmatprep.subr.mxu0 0.0
      %4716 = vmatpush1.msra.mxu0 %v4567
      %4717 = vmatprep.subr.mxu0 0.0
      %4718 = vmatpush1.msra.mxu0 0.0
      %4719 = vmatprep.subr.mxu0 0.0
      %4720 = vmatpush1.msra.mxu0 0.0
      %4721 = vmatprep.subr.mxu0 0.0
      %4722 = vmatpush1.msra.mxu0 0.0
      %4723 = vmatprep.subr.mxu0 0.0
      %4724 = vmatpush1.msra.mxu0 0.0
      %4725 = vmatprep.subr.mxu0 0.0
      %4726 = vmatpush1.msra.mxu0 0.0
      %4727 = vmatprep.subr.mxu0 0.0
      %4728 = vmatpush1.msra.mxu0 0.0
      %4729 = vmatprep.subr.mxu0 0.0
      %4730 = vmatpush1.msra.mxu0 0.0
      %4731 = vmatprep.subr.mxu0 0.0
      %4732 = vmatpush1.msra.mxu0 0.0
      %4733 = vmatprep.subr.mxu0 0.0
      %4734 = vmatpush1.msra.mxu0 0.0
      %4735 = vmatprep.subr.mxu0 0.0
      %4736 = vmatpush1.msra.mxu0 0.0
      %4737 = vmatprep.subr.mxu0 0.0
      %4738 = vmatpush1.msra.mxu0 0.0
      %4739 = vmatprep.subr.mxu0 0.0
      %4740 = vmatpush1.msra.mxu0 0.0
      %4741 = vmatprep.subr.mxu0 0.0
      %4742 = vmatpush1.msra.mxu0 0.0
      %4743 = vmatprep.subr.mxu0 0.0
      %4744 = vmatpush1.msra.mxu0 0.0
      %4745 = vmatprep.subr.mxu0 0.0
      %4746 = vmatpush1.msra.mxu0 0.0
      %4747 = vmatprep.subr.mxu0 0.0
      %4748 = vmatpush1.msra.mxu0 0.0
      %4749 = vmatprep.subr.mxu0 0.0
      %4750 = vmatpush1.msra.mxu0 0.0
      %4751 = vmatprep.subr.mxu0 0.0
      %4752 = vmatpush1.msra.mxu0 0.0
      %4753 = vmatprep.subr.mxu0 0.0
      %4754 = vmatpush1.msra.mxu0 0.0
      %4755 = vmatprep.subr.mxu0 0.0
      %4756 = vmatpush1.msra.mxu0 0.0
      %4757 = vmatprep.subr.mxu0 0.0
      %4758 = vmatpush1.msra.mxu0 0.0
      %4759 = vmatprep.subr.mxu0 0.0
      %4760 = vmatpush1.msra.mxu0 0.0
      %4761 = vmatprep.subr.mxu0 0.0
      %4762 = vmatpush1.msra.mxu0 0.0
      %4763 = vmatprep.subr.mxu0 0.0
      %4764 = vmatpush1.msra.mxu0 0.0
      %4765 = vmatprep.subr.mxu0 0.0
      %4766 = vmatpush1.msra.mxu0 0.0
      %4767 = vmatprep.subr.mxu0 0.0
      %4768 = vmatpush1.msra.mxu0 0.0
      %4769 = vmatprep.subr.mxu0 0.0
      %4770 = vmatpush1.msra.mxu0 0.0
      %4771 = vmatprep.subr.mxu0 0.0
      %4772 = vmatpush1.msra.mxu0 0.0
      %4773 = vmatprep.subr.mxu0 0.0
      %4774 = vmatpush1.msra.mxu0 0.0
      %4775 = vmatprep.subr.mxu0 0.0
      %4776 = vmatpush1.msra.mxu0 0.0
      %4777 = vmatprep.subr.mxu0 0.0
      %4778 = vmatpush1.msra.mxu0 0.0
      %4779 = vmatprep.mubr.f32.mxu0 0.0
      %4780 = vmatmul.mubr.f32.gmra.mrb[0].mxu0 %v4571
      %v4781 = vpop.f32.mrb[0].mxu0
      %v4782 = vadd.f32 0.0, %v4781
      %v4783 = vpop.f32.mrb[0].mxu0
      %4784 = vdwg.mxu0
      %v4785 = vadd.f32 %v4548, %v4640
      %v4786 = vadd.f32 %v4549, %v4642
      %v4787 = vadd.f32 %v4550, %v4711
      %v4788 = vadd.f32 %v4551, %v4713
      %v4789 = vadd.f32 %v4552, %v4782
      %v4790 = vld [vmem:[%s4] sm:$0xf]
      %4792 = vset.pattern.permute.xlu0 0
      %4793 = vperm.xlu0 %4792, %v4790
      %v4794 = vpop.permute.xlu0 %4793
      %v4796 = vadd.f32 %v4785, %v4794
      %v4797 = vadd.f32 %v4786, %v4794
      %v4798 = vadd.f32 %v4787, %v4794
      %v4799 = vadd.f32 %v4788, %v4794
      %v4800 = vadd.f32 %v4789, %v4794
      %v4801 = vmax.f32 %v4796, 0.0
      %v4802 = vmax.f32 %v4797, 0.0
      %v4803 = vmax.f32 %v4798, 0.0
      %v4804 = vmax.f32 %v4799, 0.0
      %v4805 = vmax.f32 %v4800, 0.0
      %v4806 = vmul.f32 %v4801, %v2655
      %v4807 = vmul.f32 %v4802, %v2659
      %v4808 = vmul.f32 %v4803, %v2663
      %v4809 = vmul.f32 %v4804, %v2667
      %v4810 = vmul.f32 %v4805, %v2671
      %v4811 = vsel %vm332, %v4806, 0.0
      %v4812 = vsel %vm332, %v4807, 0.0
      %v4813 = vadd.f32 %v4811, %v4812
      %v4814 = vsel %vm332, %v4808, 0.0
      %v4815 = vadd.f32 %v4813, %v4814
      %v4816 = vsel %vm332, %v4809, 0.0
      %v4817 = vadd.f32 %v4815, %v4816
      %v4818 = vsel %vm332, %v4810, 0.0
      %v4819 = vadd.f32 %v4817, %v4818
      %4820 = vadd.xlane.f32.xlu0 %v4819
      %v4821 = vpop.xlane.xlu0 %4820
      %v4822 = vmul.f32 %v4821, 0.001953125
      %vm4823 = vcmask 3072
      %4824 = vst.msk [vmem:[%s249] sm:$0xf] %vm4823, %v4822
      %p4825 = scmp.lt.s32.totalorder %s17, 1
      %s4826 = scalar_select %p4825, %s17, 1
      %s4827 = smul.addr %s4826, 4
      %s4828 = scalar_lea.vmem %s6, %s4827
      // Predicated region
      $region45: #{tpu_custom_call.1} parent=43 // pred_check
        %p4829 = pneg %p166
      $region46: #{tpu_custom_call.1} parent=43 // pred_check_branch
        %4831 = sbr.rel (%p4829) target = $region48
      $region47: #{tpu_custom_call.1} parent=43 // pred_region
        _
      $region48: #{tpu_custom_call.1} parent=43 // pred_fallthru
        _
    $region44: #{tpu_custom_call.1} parent=5 // pred_fallthru
      _
    %p4832 = scmp.le.s32.totalorder 2, %s12
    // Predicated region
    $region49: #{tpu_custom_call.1} parent=5 // pred_check
      %p4833 = pneg %p4832
    $region50: #{tpu_custom_call.1} parent=5 // pred_check_branch
      %4835 = sbr.rel (%p4833) target = $region52
    $region51: #{tpu_custom_call.1} parent=5 // pred_region
      %s4836 = ssub.s32 %s12, 2
      // Predicated region
      $region53: #{tpu_custom_call.1} parent=51 // pred_check
        %p4837 = pneg %p172
      $region54: #{tpu_custom_call.1} parent=51 // pred_check_branch
        %4839 = sbr.rel (%p4837) target = $region56
      $region55: #{tpu_custom_call.1} parent=51 // pred_region
        %p4840 = scmp.lt.s32.totalorder %s18, 1
        %s4841 = scalar_select %p4840, %s18, 1
        %s4842 = smul.addr %s4841, 4
        %s4843 = scalar_lea.vmem %s6, %s4842
      $region56: #{tpu_custom_call.1} parent=51 // pred_fallthru
        _
    $region52: #{tpu_custom_call.1} parent=5 // pred_fallthru
      _
  $region6: #{tpu_custom_call.1} parent=0 // loop_footer
    %s16 = sadd.s32 1, %s12
  $region7: #{tpu_custom_call.1} parent=0 // loop_footer_branch
    %11 = sbr.rel target = $region3
  $region8: #{tpu_custom_call.1} parent=0 // loop_exit
    _

</llo_original>
